<compile_context>
chip_gen: v7x
topology: tpu7x:2x2x1
jax: 0.10.0
libtpu: 0.0.40
codegen_flags: <defaults>
</compile_context>

<pallas_src>
import numpy as np
import jax
import jax.numpy as jnp
from jax.experimental import pallas as pl
from jax.experimental.pallas import tpu as pltpu

# ----------------------------- configuration -------------------------------
N_FEAT = 8            # num_features
HIDDEN = 32           # args.hidden
NUM_CLASSES = 4       # num_classes
HEADS = 4
DH = HIDDEN // HEADS
LAYERS = 2            # args.layers
G = 2                 # graphs in the batch
N_PER = 8             # nodes per graph
N = G * N_PER         # total nodes
E_ORIG = 2 * G * N_PER          # directed ring edges (2 rings, bidirectional)
EAUG = E_ORIG + N               # + one self loop per node
LN_EPS = 1e-5
BN_EPS = 1e-5
NEG_SLOPE = 0.2       # GATConv leaky_relu default
OUT_LANES = 128       # lane-dense output slab width

# --------------------- structure slab layout [176, 64] ----------------------
SR_TS = 0            # rows 0..47,  lanes 0..31 : packed selector [T | S]
SR_S = 48            # rows 48..95, lanes 0..15 : S (source one-hot)
SR_TT = 96           # rows 96..111, lanes 0..47: T^T
SR_ST = 112          # rows 112..127, lanes 0..47: S^T
SR_X = 128           # rows 128..143, lanes 0..31: node features (padded)
SR_BP = 144          # rows 144..145, lanes 0..15: graph pooling selector
SR_KPSEL = 152       # rows 152..153, lanes 0..15: keypoint selector
SR_KPM = 160         # rows 160..175, lane 0     : keypoint node mask (column)
STRUCT_ROWS, STRUCT_COLS = 176, 64

# --------------------- parameter slab layout [384, 64] ----------------------
WR_FEAT = 0                          # [32,32]  conv_feat weight (gfn linear)
WR_GATP = 32                         # 2 x [32,40] packed GAT weights
WR_EN = WR_GATP + LAYERS * HIDDEN    # 96  : [32,3] edge-src / edge-tgt / node diffs
WR_GCN = WR_EN + HIDDEN              # 128 : [64,64] block-diag (Wc, Wo)
WR_FC1 = WR_GCN + 2 * HIDDEN         # 192 : [96,64] fused fc1 (context | objects)
WR_FC2 = WR_FC1 + 3 * HIDDEN         # 288 : [64,64] fused fc2 (block-diag)
WR_VEC = WR_FC2 + 2 * HIDDEN         # 352 : vector params, one per row
# vector row offsets (relative to WR_VEC)
RV_GFEAT, RV_BFEAT, RV_FMASK = 0, 1, 2
RV_BN_G0, RV_BN_B0, RV_BN_G1, RV_BN_B1 = 3, 4, 5, 6
RV_BGAT0, RV_BGAT1 = 7, 8
RV_BNCO_G, RV_BNCO_B, RV_BGCN = 9, 10, 11
RV_G1C, RV_B1C = 12, 13
RV_G1OH, RV_B1OH, RV_G1OF, RV_B1OF = 14, 15, 16, 17
RV_BB1, RV_G2, RV_B2, RV_BB2, RV_SCAL = 18, 19, 20, 21, 22
NV_ROWS = 24
WR_EXPAND = WR_VEC + NV_ROWS         # 376 : [4,32] head -> block expansion
WSLAB_ROWS, WSLAB_COLS = 384, 64


# ------------------------- small traced helpers ----------------------------
def _dot(a, b):
    return jnp.dot(a, b, preferred_element_type=jnp.float32)


def _relu(x):
    return jnp.maximum(x, 0.0)


def _sigmoid(z):
    return 1.0 / (1.0 + jnp.exp(-z))


def _ln(v):
    mu = jnp.mean(v, axis=-1, keepdims=True)
    d = v - mu
    var = jnp.mean(d * d, axis=-1, keepdims=True)
    return d * jax.lax.rsqrt(var + LN_EPS)


# -------------------------------- kernel -----------------------------------
def causal_gat_kernel(st_ref, w_ref, out_ref):
    # ----------------------- structure slices (static) ----------------------
    TS = st_ref[SR_TS:SR_TS + EAUG, 0:2 * N]          # [Eaug, 2N] = [T | S]
    S = st_ref[SR_S:SR_S + EAUG, 0:N]                 # [Eaug, N] source one-hot
    TT = st_ref[SR_TT:SR_TT + N, 0:EAUG]              # [N, Eaug] = T^T
    ST = st_ref[SR_ST:SR_ST + N, 0:EAUG]              # [N, Eaug] = S^T
    x0 = st_ref[SR_X:SR_X + N, 0:HIDDEN]              # [N, HIDDEN] padded feats
    Bp = st_ref[SR_BP:SR_BP + G, 0:N]                 # [G, N] pooling selector
    kp_sel = st_ref[SR_KPSEL:SR_KPSEL + G, 0:N]       # [G, N] keypoint selector
    kp_mask = st_ref[SR_KPM:SR_KPM + N, 0:1]          # [N, 1] keypoint node mask

    expand = w_ref[WR_EXPAND:WR_EXPAND + HEADS, 0:HIDDEN]   # [HEADS, HIDDEN]

    def V(row, width=HIDDEN):                          # [1, width] param row
        r = WR_VEC + row
        return w_ref[r:r + 1, 0:width]

    fmask = V(RV_FMASK)                                # ones in lanes 0..N_FEAT-1

    # keypoints_feats = x[keypoints] on the *raw* (feature-padded) input
    kp_feats = _dot(kp_sel, x0)                        # [G, HIDDEN]

    # bn_feat: LayerNorm over the first N_FEAT lanes, then conv_feat (gfn linear)
    mu = jnp.sum(x0, axis=-1, keepdims=True) * (1.0 / N_FEAT)
    dxf = (x0 - mu) * fmask
    var = jnp.sum(dxf * dxf, axis=-1, keepdims=True) * (1.0 / N_FEAT)
    xln = dxf * jax.lax.rsqrt(var + LN_EPS) * V(RV_GFEAT) + V(RV_BFEAT)
    x = _relu(_dot(xln, w_ref[WR_FEAT:WR_FEAT + HIDDEN, 0:HIDDEN]))   # [N, H]

    # ------------------------------ GAT stack -------------------------------
    for l in range(LAYERS):
        xb = x * V(RV_BN_G0 + 2 * l) + V(RV_BN_B0 + 2 * l)   # folded eval BN
        wp = w_ref[WR_GATP + l * HIDDEN:WR_GATP + (l + 1) * HIDDEN,
                   0:HIDDEN + 2 * HEADS]
        hb = _dot(xb, wp)                              # [N, 40] = [h | b_i | b_j]
        h = hb[:, 0:HIDDEN]
        stacked_beta = jnp.concatenate(
            [hb[:, HIDDEN:HIDDEN + HEADS],
             hb[:, HIDDEN + HEADS:HIDDEN + 2 * HEADS]], axis=0)   # [2N, HEADS]
        alpha = _dot(TS, stacked_beta)                 # T@beta_i + S@beta_j
        alpha = jnp.where(alpha > 0, alpha, NEG_SLOPE * alpha)
        m = jnp.max(alpha, keepdims=True)              # global stabilizer
        e = jnp.exp(alpha - m)                         # [Eaug, HEADS]
        h_j = _dot(S, h)                               # [Eaug, HIDDEN] source feats
        d_node = _dot(TT, e)                           # [N, HEADS] per-target sums
        agg = _dot(TT, h_j * _dot(e, expand))          # [N, HIDDEN] scatter-add
        inv = pl.reciprocal(_dot(d_node, expand) + 1e-16, approx=True)
        x = _relu(agg * inv + V(RV_BGAT0 + l))

    # ------------------------ edge / node attention --------------------------
    c = _dot(x, w_ref[WR_EN:WR_EN + HIDDEN, 0:3])      # [N,3]: src, tgt, node
    scal = V(RV_SCAL)
    zn = c[:, 2:3] + scal[:, 1:2]
    zd = _dot(TS, jnp.concatenate([c[:, 1:2], c[:, 0:1]], axis=0)) + scal[:, 0:1]
    is_self = jax.lax.broadcasted_iota(jnp.int32, (EAUG, 1), 0) >= E_ORIG
    w_o = _sigmoid(zd)                                 # edge_att[:, 1]
    w_c = 1.0 - w_o                                    # edge_att[:, 0]
    w_o = jnp.where(is_self, 1.0, w_o)                 # self loops: fill_value 1
    w_c = jnp.where(is_self, 1.0, w_c)

    na1 = _sigmoid(zn)
    na0 = 1.0 - na1
    na1 = jnp.where(kp_mask > 0, 1.0, na1)             # keypoints -> (0, 1)
    na0 = jnp.where(kp_mask > 0, 0.0, na0)

    # -------------- fused context|objects branch on 64 lanes -----------------
    xco = jnp.concatenate([na0 * x, na1 * x], axis=-1)            # [N, 2H]
    xco = xco * V(RV_BNCO_G, 2 * HIDDEN) + V(RV_BNCO_B, 2 * HIDDEN)

    # GCNConv(edge_norm=True) with per-edge weights + self loops, node-side norm
    h64 = _dot(xco, w_ref[WR_GCN:WR_GCN + 2 * HIDDEN, 0:2 * HIDDEN])
    w2 = jnp.concatenate([w_c, w_o], axis=-1)                     # [Eaug, 2]
    deg2 = _dot(ST, w2)                                           # [N, 2]
    dinv2 = jnp.where(deg2 > 0, jax.lax.rsqrt(deg2), 0.0)
    ones_h = jnp.ones((1, HIDDEN), jnp.float32)
    dinv64 = jnp.concatenate([dinv2[:, 0:1] * ones_h,
                              dinv2[:, 1:2] * ones_h], axis=-1)   # [N, 2H]
    w64 = jnp.concatenate([w_c * ones_h, w_o * ones_h], axis=-1)  # [Eaug, 2H]
    gathered = _dot(S, dinv64 * h64)                              # [Eaug, 2H]
    scat = _dot(TT, w64 * gathered)                               # [N, 2H]
    out64 = _relu(dinv64 * scat + V(RV_BGCN, 2 * HIDDEN))

    # global_add_pool, both branches at once
    pool64 = _dot(Bp, out64)                                      # [G, 2H]
    xo_p = pool64[:, HIDDEN:2 * HIDDEN]

    # --------------------------- fused readouts ------------------------------
    hc = _ln(pool64[:, 0:HIDDEN]) * V(RV_G1C) + V(RV_B1C)
    # objects LN over cat([xo_p, kp_feats]) of width HIDDEN + N_FEAT, no concat
    inv_d = 1.0 / (HIDDEN + N_FEAT)
    s1 = (jnp.sum(xo_p, axis=-1, keepdims=True) +
          jnp.sum(kp_feats, axis=-1, keepdims=True))
    mu_o = s1 * inv_d
    d_h = xo_p - mu_o
    d_f = (kp_feats - mu_o) * fmask
    var_o = (jnp.sum(d_h * d_h, axis=-1, keepdims=True) +
             jnp.sum(d_f * d_f, axis=-1, keepdims=True)) * inv_d
    r = jax.lax.rsqrt(var_o + LN_EPS)
    ho_h = d_h * r * V(RV_G1OH) + V(RV_B1OH)
    ho_f = d_f * r * V(RV_G1OF) + V(RV_B1OF)

    # fc1 for both readouts in one [G,96] x [96,64] contraction
    lhs96 = jnp.concatenate([hc, ho_h, ho_f], axis=-1)
    h1 = _relu(_dot(lhs96, w_ref[WR_FC1:WR_FC1 + 3 * HIDDEN, 0:2 * HIDDEN])
               + V(RV_BB1, 2 * HIDDEN))
    # per-half LayerNorm, fused 64-lane gain/bias
    ln64 = jnp.concatenate([_ln(h1[:, 0:HIDDEN]),
                            _ln(h1[:, HIDDEN:2 * HIDDEN])], axis=-1)
    ln64 = ln64 * V(RV_G2, 2 * HIDDEN) + V(RV_B2, 2 * HIDDEN)
    # fc2 for both readouts in one block-diagonal [G,64] x [64,64] matmul
    logits64 = (_dot(ln64, w_ref[WR_FC2:WR_FC2 + 2 * HIDDEN, 0:2 * HIDDEN])
                + V(RV_BB2, 2 * HIDDEN))

    # lane-dense output slab: [ctx logits | obj logits | xo_pool | zeros]
    out_ref[...] = jnp.concatenate(
        [logits64, xo_p, jnp.zeros((G, OUT_LANES - 3 * HIDDEN), jnp.float32)],
        axis=-1)


# ------------------------------ wrapper -------------------------------------
def run_causal_gat(struct, wslab):
    out = pl.pallas_call(
        causal_gat_kernel,
        grid=(1,),
        in_specs=[pl.BlockSpec((STRUCT_ROWS, STRUCT_COLS), lambda i: (0, 0)),
                  pl.BlockSpec((WSLAB_ROWS, WSLAB_COLS), lambda i: (0, 0))],
        out_specs=pl.BlockSpec((G, OUT_LANES), lambda i: (0, 0)),
        out_shape=jax.ShapeDtypeStruct((G, OUT_LANES), jnp.float32),
        compiler_params=pltpu.CompilerParams(
            dimension_semantics=("arbitrary",)),
    )(struct, wslab)
    xc_logis = out[:, 0:NUM_CLASSES]
    xo_logis = out[:, HIDDEN:HIDDEN + NUM_CLASSES]
    xo_pooled = out[:, 2 * HIDDEN:3 * HIDDEN]
    return xc_logis, xo_logis, xo_pooled


# ------------------------- synthetic problem setup ---------------------------
if __name__ == "__main__":
    # -------- graph: two 8-node bidirectional rings --------
    edges = []
    for g in range(G):
        base = g * N_PER
        for i in range(N_PER):
            j = (i + 1) % N_PER
            edges.append((base + i, base + j))
            edges.append((base + j, base + i))
    row = np.array([e[0] for e in edges], np.int32)
    col = np.array([e[1] for e in edges], np.int32)
    batch = np.repeat(np.arange(G), N_PER).astype(np.int32)
    keypoints = np.array([0, N_PER], np.int32)          # one keypoint per graph

    E = len(row)
    assert E == E_ORIG and E + N == EAUG
    S_mat = np.zeros((EAUG, N), np.float32)
    T_mat = np.zeros((EAUG, N), np.float32)
    S_mat[np.arange(E), row] = 1.0
    T_mat[np.arange(E), col] = 1.0
    S_mat[E + np.arange(N), np.arange(N)] = 1.0          # appended self loops
    T_mat[E + np.arange(N), np.arange(N)] = 1.0

    Bp = np.zeros((G, N), np.float32); Bp[batch, np.arange(N)] = 1.0
    kp_sel = np.zeros((G, N), np.float32); kp_sel[np.arange(G), keypoints] = 1.0
    kp_mask = np.zeros((N, 1), np.float32); kp_mask[keypoints, 0] = 1.0

    # -------- deterministic parameter init --------
    keys = iter(jax.random.split(jax.random.PRNGKey(0), 64))

    def rnd(shape, scale=0.2):
        return np.asarray(jax.random.normal(next(keys), shape, jnp.float32) * scale)

    x = rnd((N, N_FEAT), 1.0)
    x_pad = np.zeros((N, HIDDEN), np.float32)
    x_pad[:, :N_FEAT] = x

    g_feat = np.ones((N_FEAT,), np.float32)
    b_feat = np.zeros((N_FEAT,), np.float32)
    W_feat = rnd((N_FEAT, HIDDEN))

    bn_g = np.ones((LAYERS, HIDDEN), np.float32)
    bn_b = np.full((LAYERS, HIDDEN), 1e-4, np.float32)   # BN init in the module
    W_gat = rnd((LAYERS, HIDDEN, HIDDEN))
    att_param = rnd((LAYERS, HEADS, 2 * DH))             # PyG att [1, heads, 2*dh]
    b_gat = rnd((LAYERS, HIDDEN), 0.05)

    W_edge = rnd((2 * HIDDEN, 2))
    b_edge = rnd((2,), 0.05)
    W_node = rnd((HIDDEN, 2))
    b_node = rnd((2,), 0.05)

    bnc_g = np.ones((HIDDEN,), np.float32); bnc_b = np.full((HIDDEN,), 1e-4, np.float32)
    bno_g = np.ones((HIDDEN,), np.float32); bno_b = np.full((HIDDEN,), 1e-4, np.float32)

    Wc = rnd((HIDDEN, HIDDEN)); bc = rnd((HIDDEN,), 0.05)
    Wo = rnd((HIDDEN, HIDDEN)); bo = rnd((HIDDEN,), 0.05)

    g1c = np.ones((HIDDEN,), np.float32); b1c = np.zeros((HIDDEN,), np.float32)
    W1c = rnd((HIDDEN, HIDDEN)); bb1c = rnd((HIDDEN,), 0.05)
    g2c = np.ones((HIDDEN,), np.float32); b2c = np.zeros((HIDDEN,), np.float32)
    W2c = rnd((HIDDEN, NUM_CLASSES)); bb2c = rnd((NUM_CLASSES,), 0.05)

    g1o = np.ones((HIDDEN + N_FEAT,), np.float32)
    b1o = np.zeros((HIDDEN + N_FEAT,), np.float32)
    W1o = rnd((HIDDEN + N_FEAT, HIDDEN)); bb1o = rnd((HIDDEN,), 0.05)
    g2o = np.ones((HIDDEN,), np.float32); b2o = np.zeros((HIDDEN,), np.float32)
    W2o = rnd((HIDDEN, NUM_CLASSES)); bb2o = rnd((NUM_CLASSES,), 0.05)

    # -------------------- pack structure slab (1 DMA) -------------------------
    struct = np.zeros((STRUCT_ROWS, STRUCT_COLS), np.float32)
    struct[SR_TS:SR_TS + EAUG, 0:N] = T_mat
    struct[SR_TS:SR_TS + EAUG, N:2 * N] = S_mat
    struct[SR_S:SR_S + EAUG, 0:N] = S_mat
    struct[SR_TT:SR_TT + N, 0:EAUG] = T_mat.T
    struct[SR_ST:SR_ST + N, 0:EAUG] = S_mat.T
    struct[SR_X:SR_X + N, 0:HIDDEN] = x_pad
    struct[SR_BP:SR_BP + G, 0:N] = Bp
    struct[SR_KPSEL:SR_KPSEL + G, 0:N] = kp_sel
    struct[SR_KPM:SR_KPM + N, 0:1] = kp_mask

    # -------------------- pack parameter slab (1 DMA) -------------------------
    wslab = np.zeros((WSLAB_ROWS, WSLAB_COLS), np.float32)
    wslab[WR_FEAT:WR_FEAT + N_FEAT, 0:HIDDEN] = W_feat
    for l in range(LAYERS):
        Ai = np.zeros((HIDDEN, HEADS), np.float32)
        Aj = np.zeros((HIDDEN, HEADS), np.float32)
        for h in range(HEADS):
            Ai[h * DH:(h + 1) * DH, h] = att_param[l, h, :DH]     # att_i (target)
            Aj[h * DH:(h + 1) * DH, h] = att_param[l, h, DH:]     # att_j (source)
        r0 = WR_GATP + l * HIDDEN
        wslab[r0:r0 + HIDDEN, 0:HIDDEN] = W_gat[l]
        wslab[r0:r0 + HIDDEN, HIDDEN:HIDDEN + HEADS] = W_gat[l] @ Ai
        wslab[r0:r0 + HIDDEN, HIDDEN + HEADS:HIDDEN + 2 * HEADS] = W_gat[l] @ Aj
    wslab[WR_EN:WR_EN + HIDDEN, 0] = W_edge[:HIDDEN, 1] - W_edge[:HIDDEN, 0]
    wslab[WR_EN:WR_EN + HIDDEN, 1] = W_edge[HIDDEN:, 1] - W_edge[HIDDEN:, 0]
    wslab[WR_EN:WR_EN + HIDDEN, 2] = W_node[:, 1] - W_node[:, 0]
    wslab[WR_GCN:WR_GCN + HIDDEN, 0:HIDDEN] = Wc
    wslab[WR_GCN + HIDDEN:WR_GCN + 2 * HIDDEN, HIDDEN:2 * HIDDEN] = Wo
    wslab[WR_FC1:WR_FC1 + HIDDEN, 0:HIDDEN] = W1c
    wslab[WR_FC1 + HIDDEN:WR_FC1 + 2 * HIDDEN, HIDDEN:2 * HIDDEN] = W1o[:HIDDEN]
    wslab[WR_FC1 + 2 * HIDDEN:WR_FC1 + 2 * HIDDEN + N_FEAT,
          HIDDEN:2 * HIDDEN] = W1o[HIDDEN:]
    wslab[WR_FC2:WR_FC2 + HIDDEN, 0:NUM_CLASSES] = W2c
    wslab[WR_FC2 + HIDDEN:WR_FC2 + 2 * HIDDEN,
          HIDDEN:HIDDEN + NUM_CLASSES] = W2o

    bn_scale = 1.0 / np.sqrt(1.0 + BN_EPS)               # eval BN stats folded

    def vrow(idx):
        return WR_VEC + idx

    wslab[vrow(RV_GFEAT), :N_FEAT] = g_feat
    wslab[vrow(RV_BFEAT), :N_FEAT] = b_feat
    wslab[vrow(RV_FMASK), :N_FEAT] = 1.0
    for l in range(LAYERS):
        wslab[vrow(RV_BN_G0 + 2 * l), :HIDDEN] = bn_g[l] * bn_scale
        wslab[vrow(RV_BN_B0 + 2 * l), :HIDDEN] = bn_b[l]
        wslab[vrow(RV_BGAT0 + l), :HIDDEN] = b_gat[l]
    wslab[vrow(RV_BNCO_G), :HIDDEN] = bnc_g * bn_scale
    wslab[vrow(RV_BNCO_G), HIDDEN:2 * HIDDEN] = bno_g * bn_scale
    wslab[vrow(RV_BNCO_B), :HIDDEN] = bnc_b
    wslab[vrow(RV_BNCO_B), HIDDEN:2 * HIDDEN] = bno_b
    wslab[vrow(RV_BGCN), :HIDDEN] = bc
    wslab[vrow(RV_BGCN), HIDDEN:2 * HIDDEN] = bo
    wslab[vrow(RV_G1C), :HIDDEN] = g1c
    wslab[vrow(RV_B1C), :HIDDEN] = b1c
    wslab[vrow(RV_G1OH), :HIDDEN] = g1o[:HIDDEN]
    wslab[vrow(RV_B1OH), :HIDDEN] = b1o[:HIDDEN]
    wslab[vrow(RV_G1OF), :N_FEAT] = g1o[HIDDEN:]
    wslab[vrow(RV_B1OF), :N_FEAT] = b1o[HIDDEN:]
    wslab[vrow(RV_BB1), :HIDDEN] = bb1c
    wslab[vrow(RV_BB1), HIDDEN:2 * HIDDEN] = bb1o
    wslab[vrow(RV_G2), :HIDDEN] = g2c
    wslab[vrow(RV_G2), HIDDEN:2 * HIDDEN] = g2o
    wslab[vrow(RV_B2), :HIDDEN] = b2c
    wslab[vrow(RV_B2), HIDDEN:2 * HIDDEN] = b2o
    wslab[vrow(RV_BB2), :NUM_CLASSES] = bb2c
    wslab[vrow(RV_BB2), HIDDEN:HIDDEN + NUM_CLASSES] = bb2o
    wslab[vrow(RV_SCAL), 0] = b_edge[1] - b_edge[0]
    wslab[vrow(RV_SCAL), 1] = b_node[1] - b_node[0]
    for h in range(HEADS):
        wslab[WR_EXPAND + h, h * DH:(h + 1) * DH] = 1.0

    xc_logis, xo_logis, xo_pooled = jax.block_until_ready(
        run_causal_gat(jnp.asarray(struct), jnp.asarray(wslab)))

    assert xc_logis.shape == (G, NUM_CLASSES)
    assert xo_logis.shape == (G, NUM_CLASSES)
    assert xo_pooled.shape == (G, HIDDEN)
    assert bool(jnp.all(jnp.isfinite(xc_logis)))
    assert bool(jnp.all(jnp.isfinite(xo_logis)))
    assert bool(jnp.all(jnp.isfinite(xo_pooled)))
    print("KERNEL_OK")
</pallas_src>

<mosaic_0001>
module attributes {stable_mosaic.version = 11 : i64} {
  func.func @causal_gat_kernel(%arg0: i32, %arg1: memref<176x64xf32, #tpu.memory_space<vmem>>, %arg2: memref<384x64xf32, #tpu.memory_space<vmem>>, %arg3: memref<2x128xf32, #tpu.memory_space<vmem>>) attributes {dimension_semantics = [#tpu.dimension_semantics<arbitrary>], iteration_bounds = array<i64: 1>, scalar_prefetch = 0 : i64, scratch_operands = 0 : i64, tpu.core_type = #tpu.core_type<tc>, window_params = [{pipeline_mode = #tpu.pipeline_mode<synchronous>, transform_indices = @transform_0, window_bounds = array<i64: 176, 64>}, {pipeline_mode = #tpu.pipeline_mode<synchronous>, transform_indices = @transform_1, window_bounds = array<i64: 384, 64>}, {pipeline_mode = #tpu.pipeline_mode<synchronous>, transform_indices = @transform_2, window_bounds = array<i64: 2, 128>}]} {
    %c0 = arith.constant 0 : index
    %c0_0 = arith.constant 0 : index
    %0 = vector.load %arg1[%c0, %c0_0] : memref<176x64xf32, #tpu.memory_space<vmem>>, vector<48x32xf32>
    %c48 = arith.constant 48 : index
    %c0_1 = arith.constant 0 : index
    %1 = vector.load %arg1[%c48, %c0_1] : memref<176x64xf32, #tpu.memory_space<vmem>>, vector<48x16xf32>
    %c96 = arith.constant 96 : index
    %c0_2 = arith.constant 0 : index
    %2 = vector.load %arg1[%c96, %c0_2] : memref<176x64xf32, #tpu.memory_space<vmem>>, vector<16x48xf32>
    %c112 = arith.constant 112 : index
    %c0_3 = arith.constant 0 : index
    %3 = vector.load %arg1[%c112, %c0_3] : memref<176x64xf32, #tpu.memory_space<vmem>>, vector<16x48xf32>
    %c128 = arith.constant 128 : index
    %c0_4 = arith.constant 0 : index
    %4 = vector.load %arg1[%c128, %c0_4] : memref<176x64xf32, #tpu.memory_space<vmem>>, vector<16x32xf32>
    %c144 = arith.constant 144 : index
    %c0_5 = arith.constant 0 : index
    %5 = vector.load %arg1[%c144, %c0_5] : memref<176x64xf32, #tpu.memory_space<vmem>>, vector<2x16xf32>
    %c152 = arith.constant 152 : index
    %c0_6 = arith.constant 0 : index
    %6 = vector.load %arg1[%c152, %c0_6] : memref<176x64xf32, #tpu.memory_space<vmem>>, vector<2x16xf32>
    %c160 = arith.constant 160 : index
    %c0_7 = arith.constant 0 : index
    %7 = vector.load %arg1[%c160, %c0_7] : memref<176x64xf32, #tpu.memory_space<vmem>>, vector<16x1xf32>
    %c376 = arith.constant 376 : index
    %c0_8 = arith.constant 0 : index
    %8 = vector.load %arg2[%c376, %c0_8] : memref<384x64xf32, #tpu.memory_space<vmem>>, vector<4x32xf32>
    %c354 = arith.constant 354 : index
    %c0_9 = arith.constant 0 : index
    %9 = vector.load %arg2[%c354, %c0_9] : memref<384x64xf32, #tpu.memory_space<vmem>>, vector<1x32xf32>
    %cst = arith.constant dense<0.000000e+00> : vector<2x32xf32>
    %10 = tpu.matmul %6, %4, %cst {dimension_numbers = #tpu.dot_dimension_numbers<[1], [0], [0], [1], [0, 0, 1, 1], [], []>} : vector<2x16xf32>, vector<16x32xf32>, vector<2x32xf32> -> vector<2x32xf32>
    %cst_10 = arith.constant dense<0.000000e+00> : vector<16xf32>
    %11 = vector.multi_reduction <add>, %4, %cst_10 [1] : vector<16x32xf32> to vector<16xf32>
    %12 = vector.shape_cast %11 : vector<16xf32> to vector<16x1xf32>
    %cst_11 = arith.constant 1.250000e-01 : f32
    %13 = vector.broadcast %cst_11 : f32 to vector<16x1xf32>
    %14 = arith.mulf %12, %13 : vector<16x1xf32>
    %15 = vector.broadcast %14 : vector<16x1xf32> to vector<16x32xf32>
    %16 = arith.subf %4, %15 : vector<16x32xf32>
    %17 = vector.broadcast %9 : vector<1x32xf32> to vector<16x32xf32>
    %18 = arith.mulf %16, %17 : vector<16x32xf32>
    %19 = arith.mulf %18, %18 : vector<16x32xf32>
    %cst_12 = arith.constant dense<0.000000e+00> : vector<16xf32>
    %20 = vector.multi_reduction <add>, %19, %cst_12 [1] : vector<16x32xf32> to vector<16xf32>
    %21 = vector.shape_cast %20 : vector<16xf32> to vector<16x1xf32>
    %cst_13 = arith.constant 1.250000e-01 : f32
    %22 = vector.broadcast %cst_13 : f32 to vector<16x1xf32>
    %23 = arith.mulf %21, %22 : vector<16x1xf32>
    %cst_14 = arith.constant 9.99999974E-6 : f32
    %24 = vector.broadcast %cst_14 : f32 to vector<16x1xf32>
    %25 = arith.addf %23, %24 : vector<16x1xf32>
    %26 = math.rsqrt %25 : vector<16x1xf32>
    %27 = vector.broadcast %26 : vector<16x1xf32> to vector<16x32xf32>
    %28 = arith.mulf %18, %27 : vector<16x32xf32>
    %c352 = arith.constant 352 : index
    %c0_15 = arith.constant 0 : index
    %29 = vector.load %arg2[%c352, %c0_15] : memref<384x64xf32, #tpu.memory_space<vmem>>, vector<1x32xf32>
    %30 = vector.broadcast %29 : vector<1x32xf32> to vector<16x32xf32>
    %31 = arith.mulf %28, %30 : vector<16x32xf32>
    %c353 = arith.constant 353 : index
    %c0_16 = arith.constant 0 : index
    %32 = vector.load %arg2[%c353, %c0_16] : memref<384x64xf32, #tpu.memory_space<vmem>>, vector<1x32xf32>
    %33 = vector.broadcast %32 : vector<1x32xf32> to vector<16x32xf32>
    %34 = arith.addf %31, %33 : vector<16x32xf32>
    %c0_17 = arith.constant 0 : index
    %c0_18 = arith.constant 0 : index
    %35 = vector.load %arg2[%c0_17, %c0_18] : memref<384x64xf32, #tpu.memory_space<vmem>>, vector<32x32xf32>
    %cst_19 = arith.constant dense<0.000000e+00> : vector<16x32xf32>
    %36 = tpu.matmul %34, %35, %cst_19 {dimension_numbers = #tpu.dot_dimension_numbers<[1], [0], [0], [1], [0, 0, 1, 1], [], []>} : vector<16x32xf32>, vector<32x32xf32>, vector<16x32xf32> -> vector<16x32xf32>
    %cst_20 = arith.constant 0.000000e+00 : f32
    %37 = vector.broadcast %cst_20 : f32 to vector<16x32xf32>
    %38 = arith.maximumf %36, %37 : vector<16x32xf32>
    %c355 = arith.constant 355 : index
    %c0_21 = arith.constant 0 : index
    %39 = vector.load %arg2[%c355, %c0_21] : memref<384x64xf32, #tpu.memory_space<vmem>>, vector<1x32xf32>
    %40 = vector.broadcast %39 : vector<1x32xf32> to vector<16x32xf32>
    %41 = arith.mulf %38, %40 : vector<16x32xf32>
    %c356 = arith.constant 356 : index
    %c0_22 = arith.constant 0 : index
    %42 = vector.load %arg2[%c356, %c0_22] : memref<384x64xf32, #tpu.memory_space<vmem>>, vector<1x32xf32>
    %43 = vector.broadcast %42 : vector<1x32xf32> to vector<16x32xf32>
    %44 = arith.addf %41, %43 : vector<16x32xf32>
    %c32 = arith.constant 32 : index
    %c0_23 = arith.constant 0 : index
    %45 = vector.load %arg2[%c32, %c0_23] : memref<384x64xf32, #tpu.memory_space<vmem>>, vector<32x40xf32>
    %cst_24 = arith.constant dense<0.000000e+00> : vector<16x40xf32>
    %46 = tpu.matmul %44, %45, %cst_24 {dimension_numbers = #tpu.dot_dimension_numbers<[1], [0], [0], [1], [0, 0, 1, 1], [], []>} : vector<16x32xf32>, vector<32x40xf32>, vector<16x40xf32> -> vector<16x40xf32>
    %47 = vector.extract_strided_slice %46 {offsets = [0, 0], sizes = [16, 32], strides = [1, 1]} : vector<16x40xf32> to vector<16x32xf32>
    %48 = vector.extract_strided_slice %46 {offsets = [0, 32], sizes = [16, 4], strides = [1, 1]} : vector<16x40xf32> to vector<16x4xf32>
    %49 = vector.extract_strided_slice %46 {offsets = [0, 36], sizes = [16, 4], strides = [1, 1]} : vector<16x40xf32> to vector<16x4xf32>
    %50 = tpu.concatenate %48, %49 in 0 : vector<16x4xf32>, vector<16x4xf32> -> vector<32x4xf32>
    %cst_25 = arith.constant dense<0.000000e+00> : vector<48x4xf32>
    %51 = tpu.matmul %0, %50, %cst_25 {dimension_numbers = #tpu.dot_dimension_numbers<[1], [0], [0], [1], [0, 0, 1, 1], [], []>} : vector<48x32xf32>, vector<32x4xf32>, vector<48x4xf32> -> vector<48x4xf32>
    %cst_26 = arith.constant 0.000000e+00 : f32
    %52 = vector.broadcast %cst_26 : f32 to vector<48x4xf32>
    %53 = arith.cmpf ogt, %51, %52 : vector<48x4xf32>
    %cst_27 = arith.constant 2.000000e-01 : f32
    %54 = vector.broadcast %cst_27 : f32 to vector<48x4xf32>
    %55 = arith.mulf %54, %51 : vector<48x4xf32>
    %56 = arith.select %53, %51, %55 : vector<48x4xi1>, vector<48x4xf32>
    %57 = vector.shape_cast %56 : vector<48x4xf32> to vector<1x48x4xf32>
    %cst_28 = arith.constant dense<0xFF800000> : vector<1xf32>
    %58 = vector.multi_reduction <maximumf>, %57, %cst_28 [1, 2] : vector<1x48x4xf32> to vector<1xf32>
    %59 = vector.shape_cast %58 : vector<1xf32> to vector<1x1x1xf32>
    %60 = vector.extract %59[0, 0, 0] : f32 from vector<1x1x1xf32>
    %61 = vector.broadcast %60 : f32 to vector<1x1xf32>
    %62 = vector.broadcast %61 : vector<1x1xf32> to vector<48x4xf32>
    %63 = arith.subf %56, %62 : vector<48x4xf32>
    %64 = math.exp %63 : vector<48x4xf32>
    %cst_29 = arith.constant dense<0.000000e+00> : vector<48x32xf32>
    %65 = tpu.matmul %1, %47, %cst_29 {dimension_numbers = #tpu.dot_dimension_numbers<[1], [0], [0], [1], [0, 0, 1, 1], [], []>} : vector<48x16xf32>, vector<16x32xf32>, vector<48x32xf32> -> vector<48x32xf32>
    %cst_30 = arith.constant dense<0.000000e+00> : vector<16x4xf32>
    %66 = tpu.matmul %2, %64, %cst_30 {dimension_numbers = #tpu.dot_dimension_numbers<[1], [0], [0], [1], [0, 0, 1, 1], [], []>} : vector<16x48xf32>, vector<48x4xf32>, vector<16x4xf32> -> vector<16x4xf32>
    %cst_31 = arith.constant dense<0.000000e+00> : vector<48x32xf32>
    %67 = tpu.matmul %64, %8, %cst_31 {dimension_numbers = #tpu.dot_dimension_numbers<[1], [0], [0], [1], [0, 0, 1, 1], [], []>} : vector<48x4xf32>, vector<4x32xf32>, vector<48x32xf32> -> vector<48x32xf32>
    %68 = arith.mulf %65, %67 : vector<48x32xf32>
    %cst_32 = arith.constant dense<0.000000e+00> : vector<16x32xf32>
    %69 = tpu.matmul %2, %68, %cst_32 {dimension_numbers = #tpu.dot_dimension_numbers<[1], [0], [0], [1], [0, 0, 1, 1], [], []>} : vector<16x48xf32>, vector<48x32xf32>, vector<16x32xf32> -> vector<16x32xf32>
    %cst_33 = arith.constant dense<0.000000e+00> : vector<16x32xf32>
    %70 = tpu.matmul %66, %8, %cst_33 {dimension_numbers = #tpu.dot_dimension_numbers<[1], [0], [0], [1], [0, 0, 1, 1], [], []>} : vector<16x4xf32>, vector<4x32xf32>, vector<16x32xf32> -> vector<16x32xf32>
    %cst_34 = arith.constant 1.000000e-16 : f32
    %71 = vector.broadcast %cst_34 : f32 to vector<16x32xf32>
    %72 = arith.addf %70, %71 : vector<16x32xf32>
    %73 = tpu.reciprocal %72 {approx = true} : vector<16x32xf32> -> vector<16x32xf32>
    %74 = arith.mulf %69, %73 : vector<16x32xf32>
    %c359 = arith.constant 359 : index
    %c0_35 = arith.constant 0 : index
    %75 = vector.load %arg2[%c359, %c0_35] : memref<384x64xf32, #tpu.memory_space<vmem>>, vector<1x32xf32>
    %76 = vector.broadcast %75 : vector<1x32xf32> to vector<16x32xf32>
    %77 = arith.addf %74, %76 : vector<16x32xf32>
    %cst_36 = arith.constant 0.000000e+00 : f32
    %78 = vector.broadcast %cst_36 : f32 to vector<16x32xf32>
    %79 = arith.maximumf %77, %78 : vector<16x32xf32>
    %c357 = arith.constant 357 : index
    %c0_37 = arith.constant 0 : index
    %80 = vector.load %arg2[%c357, %c0_37] : memref<384x64xf32, #tpu.memory_space<vmem>>, vector<1x32xf32>
    %81 = vector.broadcast %80 : vector<1x32xf32> to vector<16x32xf32>
    %82 = arith.mulf %79, %81 : vector<16x32xf32>
    %c358 = arith.constant 358 : index
    %c0_38 = arith.constant 0 : index
    %83 = vector.load %arg2[%c358, %c0_38] : memref<384x64xf32, #tpu.memory_space<vmem>>, vector<1x32xf32>
    %84 = vector.broadcast %83 : vector<1x32xf32> to vector<16x32xf32>
    %85 = arith.addf %82, %84 : vector<16x32xf32>
    %c64 = arith.constant 64 : index
    %c0_39 = arith.constant 0 : index
    %86 = vector.load %arg2[%c64, %c0_39] : memref<384x64xf32, #tpu.memory_space<vmem>>, vector<32x40xf32>
    %cst_40 = arith.constant dense<0.000000e+00> : vector<16x40xf32>
    %87 = tpu.matmul %85, %86, %cst_40 {dimension_numbers = #tpu.dot_dimension_numbers<[1], [0], [0], [1], [0, 0, 1, 1], [], []>} : vector<16x32xf32>, vector<32x40xf32>, vector<16x40xf32> -> vector<16x40xf32>
    %88 = vector.extract_strided_slice %87 {offsets = [0, 0], sizes = [16, 32], strides = [1, 1]} : vector<16x40xf32> to vector<16x32xf32>
    %89 = vector.extract_strided_slice %87 {offsets = [0, 32], sizes = [16, 4], strides = [1, 1]} : vector<16x40xf32> to vector<16x4xf32>
    %90 = vector.extract_strided_slice %87 {offsets = [0, 36], sizes = [16, 4], strides = [1, 1]} : vector<16x40xf32> to vector<16x4xf32>
    %91 = tpu.concatenate %89, %90 in 0 : vector<16x4xf32>, vector<16x4xf32> -> vector<32x4xf32>
    %cst_41 = arith.constant dense<0.000000e+00> : vector<48x4xf32>
    %92 = tpu.matmul %0, %91, %cst_41 {dimension_numbers = #tpu.dot_dimension_numbers<[1], [0], [0], [1], [0, 0, 1, 1], [], []>} : vector<48x32xf32>, vector<32x4xf32>, vector<48x4xf32> -> vector<48x4xf32>
    %cst_42 = arith.constant 0.000000e+00 : f32
    %93 = vector.broadcast %cst_42 : f32 to vector<48x4xf32>
    %94 = arith.cmpf ogt, %92, %93 : vector<48x4xf32>
    %cst_43 = arith.constant 2.000000e-01 : f32
    %95 = vector.broadcast %cst_43 : f32 to vector<48x4xf32>
    %96 = arith.mulf %95, %92 : vector<48x4xf32>
    %97 = arith.select %94, %92, %96 : vector<48x4xi1>, vector<48x4xf32>
    %98 = vector.shape_cast %97 : vector<48x4xf32> to vector<1x48x4xf32>
    %cst_44 = arith.constant dense<0xFF800000> : vector<1xf32>
    %99 = vector.multi_reduction <maximumf>, %98, %cst_44 [1, 2] : vector<1x48x4xf32> to vector<1xf32>
    %100 = vector.shape_cast %99 : vector<1xf32> to vector<1x1x1xf32>
    %101 = vector.extract %100[0, 0, 0] : f32 from vector<1x1x1xf32>
    %102 = vector.broadcast %101 : f32 to vector<1x1xf32>
    %103 = vector.broadcast %102 : vector<1x1xf32> to vector<48x4xf32>
    %104 = arith.subf %97, %103 : vector<48x4xf32>
    %105 = math.exp %104 : vector<48x4xf32>
    %cst_45 = arith.constant dense<0.000000e+00> : vector<48x32xf32>
    %106 = tpu.matmul %1, %88, %cst_45 {dimension_numbers = #tpu.dot_dimension_numbers<[1], [0], [0], [1], [0, 0, 1, 1], [], []>} : vector<48x16xf32>, vector<16x32xf32>, vector<48x32xf32> -> vector<48x32xf32>
    %cst_46 = arith.constant dense<0.000000e+00> : vector<16x4xf32>
    %107 = tpu.matmul %2, %105, %cst_46 {dimension_numbers = #tpu.dot_dimension_numbers<[1], [0], [0], [1], [0, 0, 1, 1], [], []>} : vector<16x48xf32>, vector<48x4xf32>, vector<16x4xf32> -> vector<16x4xf32>
    %cst_47 = arith.constant dense<0.000000e+00> : vector<48x32xf32>
    %108 = tpu.matmul %105, %8, %cst_47 {dimension_numbers = #tpu.dot_dimension_numbers<[1], [0], [0], [1], [0, 0, 1, 1], [], []>} : vector<48x4xf32>, vector<4x32xf32>, vector<48x32xf32> -> vector<48x32xf32>
    %109 = arith.mulf %106, %108 : vector<48x32xf32>
    %cst_48 = arith.constant dense<0.000000e+00> : vector<16x32xf32>
    %110 = tpu.matmul %2, %109, %cst_48 {dimension_numbers = #tpu.dot_dimension_numbers<[1], [0], [0], [1], [0, 0, 1, 1], [], []>} : vector<16x48xf32>, vector<48x32xf32>, vector<16x32xf32> -> vector<16x32xf32>
    %cst_49 = arith.constant dense<0.000000e+00> : vector<16x32xf32>
    %111 = tpu.matmul %107, %8, %cst_49 {dimension_numbers = #tpu.dot_dimension_numbers<[1], [0], [0], [1], [0, 0, 1, 1], [], []>} : vector<16x4xf32>, vector<4x32xf32>, vector<16x32xf32> -> vector<16x32xf32>
    %cst_50 = arith.constant 1.000000e-16 : f32
    %112 = vector.broadcast %cst_50 : f32 to vector<16x32xf32>
    %113 = arith.addf %111, %112 : vector<16x32xf32>
    %114 = tpu.reciprocal %113 {approx = true} : vector<16x32xf32> -> vector<16x32xf32>
    %115 = arith.mulf %110, %114 : vector<16x32xf32>
    %c360 = arith.constant 360 : index
    %c0_51 = arith.constant 0 : index
    %116 = vector.load %arg2[%c360, %c0_51] : memref<384x64xf32, #tpu.memory_space<vmem>>, vector<1x32xf32>
    %117 = vector.broadcast %116 : vector<1x32xf32> to vector<16x32xf32>
    %118 = arith.addf %115, %117 : vector<16x32xf32>
    %cst_52 = arith.constant 0.000000e+00 : f32
    %119 = vector.broadcast %cst_52 : f32 to vector<16x32xf32>
    %120 = arith.maximumf %118, %119 : vector<16x32xf32>
    %c96_53 = arith.constant 96 : index
    %c0_54 = arith.constant 0 : index
    %121 = vector.load %arg2[%c96_53, %c0_54] : memref<384x64xf32, #tpu.memory_space<vmem>>, vector<32x3xf32>
    %cst_55 = arith.constant dense<0.000000e+00> : vector<16x3xf32>
    %122 = tpu.matmul %120, %121, %cst_55 {dimension_numbers = #tpu.dot_dimension_numbers<[1], [0], [0], [1], [0, 0, 1, 1], [], []>} : vector<16x32xf32>, vector<32x3xf32>, vector<16x3xf32> -> vector<16x3xf32>
    %c374 = arith.constant 374 : index
    %c0_56 = arith.constant 0 : index
    %123 = vector.load %arg2[%c374, %c0_56] : memref<384x64xf32, #tpu.memory_space<vmem>>, vector<1x32xf32>
    %124 = vector.extract_strided_slice %122 {offsets = [0, 2], sizes = [16, 1], strides = [1, 1]} : vector<16x3xf32> to vector<16x1xf32>
    %125 = vector.extract_strided_slice %123 {offsets = [0, 1], sizes = [1, 1], strides = [1, 1]} : vector<1x32xf32> to vector<1x1xf32>
    %126 = vector.broadcast %125 : vector<1x1xf32> to vector<16x1xf32>
    %127 = arith.addf %124, %126 : vector<16x1xf32>
    %128 = vector.extract_strided_slice %122 {offsets = [0, 1], sizes = [16, 1], strides = [1, 1]} : vector<16x3xf32> to vector<16x1xf32>
    %129 = vector.extract_strided_slice %122 {offsets = [0, 0], sizes = [16, 1], strides = [1, 1]} : vector<16x3xf32> to vector<16x1xf32>
    %130 = tpu.concatenate %128, %129 in 0 : vector<16x1xf32>, vector<16x1xf32> -> vector<32x1xf32>
    %cst_57 = arith.constant dense<0.000000e+00> : vector<48x1xf32>
    %131 = tpu.matmul %0, %130, %cst_57 {dimension_numbers = #tpu.dot_dimension_numbers<[1], [0], [0], [1], [0, 0, 1, 1], [], []>} : vector<48x32xf32>, vector<32x1xf32>, vector<48x1xf32> -> vector<48x1xf32>
    %132 = vector.extract_strided_slice %123 {offsets = [0, 0], sizes = [1, 1], strides = [1, 1]} : vector<1x32xf32> to vector<1x1xf32>
    %133 = vector.broadcast %132 : vector<1x1xf32> to vector<48x1xf32>
    %134 = arith.addf %131, %133 : vector<48x1xf32>
    %135 = tpu.iota {dimensions = array<i32: 0>} : vector<48x1xi32>
    %c32_i32 = arith.constant 32 : i32
    %136 = vector.broadcast %c32_i32 : i32 to vector<48x1xi32>
    %137 = arith.cmpi sge, %135, %136 : vector<48x1xi32>
    %cst_58 = arith.constant 0.000000e+00 : f32
    %138 = vector.broadcast %cst_58 : f32 to vector<48x1xf32>
    %139 = arith.subf %138, %134 : vector<48x1xf32>
    %140 = math.exp %139 : vector<48x1xf32>
    %cst_59 = arith.constant 1.000000e+00 : f32
    %141 = vector.broadcast %cst_59 : f32 to vector<48x1xf32>
    %142 = arith.addf %141, %140 : vector<48x1xf32>
    %cst_60 = arith.constant 1.000000e+00 : f32
    %143 = vector.broadcast %cst_60 : f32 to vector<48x1xf32>
    %144 = arith.divf %143, %142 : vector<48x1xf32>
    %cst_61 = arith.constant 1.000000e+00 : f32
    %145 = vector.broadcast %cst_61 : f32 to vector<48x1xf32>
    %146 = arith.subf %145, %144 : vector<48x1xf32>
    %cst_62 = arith.constant 1.000000e+00 : f32
    %147 = vector.broadcast %cst_62 : f32 to vector<48x1xf32>
    %148 = arith.select %137, %147, %144 : vector<48x1xi1>, vector<48x1xf32>
    %cst_63 = arith.constant 1.000000e+00 : f32
    %149 = vector.broadcast %cst_63 : f32 to vector<48x1xf32>
    %150 = arith.select %137, %149, %146 : vector<48x1xi1>, vector<48x1xf32>
    %cst_64 = arith.constant 0.000000e+00 : f32
    %151 = vector.broadcast %cst_64 : f32 to vector<16x1xf32>
    %152 = arith.subf %151, %127 : vector<16x1xf32>
    %153 = math.exp %152 : vector<16x1xf32>
    %cst_65 = arith.constant 1.000000e+00 : f32
    %154 = vector.broadcast %cst_65 : f32 to vector<16x1xf32>
    %155 = arith.addf %154, %153 : vector<16x1xf32>
    %cst_66 = arith.constant 1.000000e+00 : f32
    %156 = vector.broadcast %cst_66 : f32 to vector<16x1xf32>
    %157 = arith.divf %156, %155 : vector<16x1xf32>
    %cst_67 = arith.constant 1.000000e+00 : f32
    %158 = vector.broadcast %cst_67 : f32 to vector<16x1xf32>
    %159 = arith.subf %158, %157 : vector<16x1xf32>
    %cst_68 = arith.constant 0.000000e+00 : f32
    %160 = vector.broadcast %cst_68 : f32 to vector<16x1xf32>
    %161 = arith.cmpf ogt, %7, %160 : vector<16x1xf32>
    %cst_69 = arith.constant 1.000000e+00 : f32
    %162 = vector.broadcast %cst_69 : f32 to vector<16x1xf32>
    %163 = arith.select %161, %162, %157 : vector<16x1xi1>, vector<16x1xf32>
    %cst_70 = arith.constant 0.000000e+00 : f32
    %164 = vector.broadcast %cst_70 : f32 to vector<16x1xf32>
    %165 = arith.cmpf ogt, %7, %164 : vector<16x1xf32>
    %cst_71 = arith.constant 0.000000e+00 : f32
    %166 = vector.broadcast %cst_71 : f32 to vector<16x1xf32>
    %167 = arith.select %165, %166, %159 : vector<16x1xi1>, vector<16x1xf32>
    %168 = vector.broadcast %167 : vector<16x1xf32> to vector<16x32xf32>
    %169 = arith.mulf %168, %120 : vector<16x32xf32>
    %170 = vector.broadcast %163 : vector<16x1xf32> to vector<16x32xf32>
    %171 = arith.mulf %170, %120 : vector<16x32xf32>
    %172 = tpu.concatenate %169, %171 in 1 : vector<16x32xf32>, vector<16x32xf32> -> vector<16x64xf32>
    %c361 = arith.constant 361 : index
    %c0_72 = arith.constant 0 : index
    %173 = vector.load %arg2[%c361, %c0_72] : memref<384x64xf32, #tpu.memory_space<vmem>>, vector<1x64xf32>
    %174 = vector.broadcast %173 : vector<1x64xf32> to vector<16x64xf32>
    %175 = arith.mulf %172, %174 : vector<16x64xf32>
    %c362 = arith.constant 362 : index
    %c0_73 = arith.constant 0 : index
    %176 = vector.load %arg2[%c362, %c0_73] : memref<384x64xf32, #tpu.memory_space<vmem>>, vector<1x64xf32>
    %177 = vector.broadcast %176 : vector<1x64xf32> to vector<16x64xf32>
    %178 = arith.addf %175, %177 : vector<16x64xf32>
    %c128_74 = arith.constant 128 : index
    %c0_75 = arith.constant 0 : index
    %179 = vector.load %arg2[%c128_74, %c0_75] : memref<384x64xf32, #tpu.memory_space<vmem>>, vector<64x64xf32>
    %cst_76 = arith.constant dense<0.000000e+00> : vector<16x64xf32>
    %180 = tpu.matmul %178, %179, %cst_76 {dimension_numbers = #tpu.dot_dimension_numbers<[1], [0], [0], [1], [0, 0, 1, 1], [], []>} : vector<16x64xf32>, vector<64x64xf32>, vector<16x64xf32> -> vector<16x64xf32>
    %181 = tpu.concatenate %150, %148 in 1 : vector<48x1xf32>, vector<48x1xf32> -> vector<48x2xf32>
    %cst_77 = arith.constant dense<0.000000e+00> : vector<16x2xf32>
    %182 = tpu.matmul %3, %181, %cst_77 {dimension_numbers = #tpu.dot_dimension_numbers<[1], [0], [0], [1], [0, 0, 1, 1], [], []>} : vector<16x48xf32>, vector<48x2xf32>, vector<16x2xf32> -> vector<16x2xf32>
    %cst_78 = arith.constant 0.000000e+00 : f32
    %183 = vector.broadcast %cst_78 : f32 to vector<16x2xf32>
    %184 = arith.cmpf ogt, %182, %183 : vector<16x2xf32>
    %185 = math.rsqrt %182 : vector<16x2xf32>
    %cst_79 = arith.constant 0.000000e+00 : f32
    %186 = vector.broadcast %cst_79 : f32 to vector<16x2xf32>
    %187 = arith.select %184, %185, %186 : vector<16x2xi1>, vector<16x2xf32>
    %cst_80 = arith.constant 1.000000e+00 : f32
    %188 = vector.broadcast %cst_80 : f32 to vector<1x32xf32>
    %189 = vector.extract_strided_slice %187 {offsets = [0, 0], sizes = [16, 1], strides = [1, 1]} : vector<16x2xf32> to vector<16x1xf32>
    %190 = vector.broadcast %189 : vector<16x1xf32> to vector<16x32xf32>
    %191 = vector.broadcast %188 : vector<1x32xf32> to vector<16x32xf32>
    %192 = arith.mulf %190, %191 : vector<16x32xf32>
    %193 = vector.extract_strided_slice %187 {offsets = [0, 1], sizes = [16, 1], strides = [1, 1]} : vector<16x2xf32> to vector<16x1xf32>
    %194 = vector.broadcast %193 : vector<16x1xf32> to vector<16x32xf32>
    %195 = vector.broadcast %188 : vector<1x32xf32> to vector<16x32xf32>
    %196 = arith.mulf %194, %195 : vector<16x32xf32>
    %197 = tpu.concatenate %192, %196 in 1 : vector<16x32xf32>, vector<16x32xf32> -> vector<16x64xf32>
    %198 = vector.broadcast %150 : vector<48x1xf32> to vector<48x32xf32>
    %199 = vector.broadcast %188 : vector<1x32xf32> to vector<48x32xf32>
    %200 = arith.mulf %198, %199 : vector<48x32xf32>
    %201 = vector.broadcast %148 : vector<48x1xf32> to vector<48x32xf32>
    %202 = vector.broadcast %188 : vector<1x32xf32> to vector<48x32xf32>
    %203 = arith.mulf %201, %202 : vector<48x32xf32>
    %204 = tpu.concatenate %200, %203 in 1 : vector<48x32xf32>, vector<48x32xf32> -> vector<48x64xf32>
    %205 = arith.mulf %197, %180 : vector<16x64xf32>
    %cst_81 = arith.constant dense<0.000000e+00> : vector<48x64xf32>
    %206 = tpu.matmul %1, %205, %cst_81 {dimension_numbers = #tpu.dot_dimension_numbers<[1], [0], [0], [1], [0, 0, 1, 1], [], []>} : vector<48x16xf32>, vector<16x64xf32>, vector<48x64xf32> -> vector<48x64xf32>
    %207 = arith.mulf %204, %206 : vector<48x64xf32>
    %cst_82 = arith.constant dense<0.000000e+00> : vector<16x64xf32>
    %208 = tpu.matmul %2, %207, %cst_82 {dimension_numbers = #tpu.dot_dimension_numbers<[1], [0], [0], [1], [0, 0, 1, 1], [], []>} : vector<16x48xf32>, vector<48x64xf32>, vector<16x64xf32> -> vector<16x64xf32>
    %209 = arith.mulf %197, %208 : vector<16x64xf32>
    %c363 = arith.constant 363 : index
    %c0_83 = arith.constant 0 : index
    %210 = vector.load %arg2[%c363, %c0_83] : memref<384x64xf32, #tpu.memory_space<vmem>>, vector<1x64xf32>
    %211 = vector.broadcast %210 : vector<1x64xf32> to vector<16x64xf32>
    %212 = arith.addf %209, %211 : vector<16x64xf32>
    %cst_84 = arith.constant 0.000000e+00 : f32
    %213 = vector.broadcast %cst_84 : f32 to vector<16x64xf32>
    %214 = arith.maximumf %212, %213 : vector<16x64xf32>
    %cst_85 = arith.constant dense<0.000000e+00> : vector<2x64xf32>
    %215 = tpu.matmul %5, %214, %cst_85 {dimension_numbers = #tpu.dot_dimension_numbers<[1], [0], [0], [1], [0, 0, 1, 1], [], []>} : vector<2x16xf32>, vector<16x64xf32>, vector<2x64xf32> -> vector<2x64xf32>
    %216 = vector.extract_strided_slice %215 {offsets = [0, 32], sizes = [2, 32], strides = [1, 1]} : vector<2x64xf32> to vector<2x32xf32>
    %217 = vector.extract_strided_slice %215 {offsets = [0, 0], sizes = [2, 32], strides = [1, 1]} : vector<2x64xf32> to vector<2x32xf32>
    %cst_86 = arith.constant dense<0.000000e+00> : vector<2xf32>
    %218 = vector.multi_reduction <add>, %217, %cst_86 [1] : vector<2x32xf32> to vector<2xf32>
    %219 = vector.shape_cast %218 : vector<2xf32> to vector<2x1xf32>
    %cst_87 = arith.constant 3.200000e+01 : f32
    %220 = vector.broadcast %cst_87 : f32 to vector<2x1xf32>
    %221 = arith.divf %219, %220 : vector<2x1xf32>
    %222 = vector.broadcast %221 : vector<2x1xf32> to vector<2x32xf32>
    %223 = arith.subf %217, %222 : vector<2x32xf32>
    %224 = arith.mulf %223, %223 : vector<2x32xf32>
    %cst_88 = arith.constant dense<0.000000e+00> : vector<2xf32>
    %225 = vector.multi_reduction <add>, %224, %cst_88 [1] : vector<2x32xf32> to vector<2xf32>
    %226 = vector.shape_cast %225 : vector<2xf32> to vector<2x1xf32>
    %cst_89 = arith.constant 3.200000e+01 : f32
    %227 = vector.broadcast %cst_89 : f32 to vector<2x1xf32>
    %228 = arith.divf %226, %227 : vector<2x1xf32>
    %cst_90 = arith.constant 9.99999974E-6 : f32
    %229 = vector.broadcast %cst_90 : f32 to vector<2x1xf32>
    %230 = arith.addf %228, %229 : vector<2x1xf32>
    %231 = math.rsqrt %230 : vector<2x1xf32>
    %232 = vector.broadcast %231 : vector<2x1xf32> to vector<2x32xf32>
    %233 = arith.mulf %223, %232 : vector<2x32xf32>
    %c364 = arith.constant 364 : index
    %c0_91 = arith.constant 0 : index
    %234 = vector.load %arg2[%c364, %c0_91] : memref<384x64xf32, #tpu.memory_space<vmem>>, vector<1x32xf32>
    %235 = vector.broadcast %234 : vector<1x32xf32> to vector<2x32xf32>
    %236 = arith.mulf %233, %235 : vector<2x32xf32>
    %c365 = arith.constant 365 : index
    %c0_92 = arith.constant 0 : index
    %237 = vector.load %arg2[%c365, %c0_92] : memref<384x64xf32, #tpu.memory_space<vmem>>, vector<1x32xf32>
    %238 = vector.broadcast %237 : vector<1x32xf32> to vector<2x32xf32>
    %239 = arith.addf %236, %238 : vector<2x32xf32>
    %cst_93 = arith.constant dense<0.000000e+00> : vector<2xf32>
    %240 = vector.multi_reduction <add>, %216, %cst_93 [1] : vector<2x32xf32> to vector<2xf32>
    %241 = vector.shape_cast %240 : vector<2xf32> to vector<2x1xf32>
    %cst_94 = arith.constant dense<0.000000e+00> : vector<2xf32>
    %242 = vector.multi_reduction <add>, %10, %cst_94 [1] : vector<2x32xf32> to vector<2xf32>
    %243 = vector.shape_cast %242 : vector<2xf32> to vector<2x1xf32>
    %244 = arith.addf %241, %243 : vector<2x1xf32>
    %cst_95 = arith.constant 2.500000e-02 : f32
    %245 = vector.broadcast %cst_95 : f32 to vector<2x1xf32>
    %246 = arith.mulf %244, %245 : vector<2x1xf32>
    %247 = vector.broadcast %246 : vector<2x1xf32> to vector<2x32xf32>
    %248 = arith.subf %216, %247 : vector<2x32xf32>
    %249 = vector.broadcast %246 : vector<2x1xf32> to vector<2x32xf32>
    %250 = arith.subf %10, %249 : vector<2x32xf32>
    %251 = vector.broadcast %9 : vector<1x32xf32> to vector<2x32xf32>
    %252 = arith.mulf %250, %251 : vector<2x32xf32>
    %253 = arith.mulf %248, %248 : vector<2x32xf32>
    %cst_96 = arith.constant dense<0.000000e+00> : vector<2xf32>
    %254 = vector.multi_reduction <add>, %253, %cst_96 [1] : vector<2x32xf32> to vector<2xf32>
    %255 = vector.shape_cast %254 : vector<2xf32> to vector<2x1xf32>
    %256 = arith.mulf %252, %252 : vector<2x32xf32>
    %cst_97 = arith.constant dense<0.000000e+00> : vector<2xf32>
    %257 = vector.multi_reduction <add>, %256, %cst_97 [1] : vector<2x32xf32> to vector<2xf32>
    %258 = vector.shape_cast %257 : vector<2xf32> to vector<2x1xf32>
    %259 = arith.addf %255, %258 : vector<2x1xf32>
    %cst_98 = arith.constant 2.500000e-02 : f32
    %260 = vector.broadcast %cst_98 : f32 to vector<2x1xf32>
    %261 = arith.mulf %259, %260 : vector<2x1xf32>
    %cst_99 = arith.constant 9.99999974E-6 : f32
    %262 = vector.broadcast %cst_99 : f32 to vector<2x1xf32>
    %263 = arith.addf %261, %262 : vector<2x1xf32>
    %264 = math.rsqrt %263 : vector<2x1xf32>
    %265 = vector.broadcast %264 : vector<2x1xf32> to vector<2x32xf32>
    %266 = arith.mulf %248, %265 : vector<2x32xf32>
    %c366 = arith.constant 366 : index
    %c0_100 = arith.constant 0 : index
    %267 = vector.load %arg2[%c366, %c0_100] : memref<384x64xf32, #tpu.memory_space<vmem>>, vector<1x32xf32>
    %268 = vector.broadcast %267 : vector<1x32xf32> to vector<2x32xf32>
    %269 = arith.mulf %266, %268 : vector<2x32xf32>
    %c367 = arith.constant 367 : index
    %c0_101 = arith.constant 0 : index
    %270 = vector.load %arg2[%c367, %c0_101] : memref<384x64xf32, #tpu.memory_space<vmem>>, vector<1x32xf32>
    %271 = vector.broadcast %270 : vector<1x32xf32> to vector<2x32xf32>
    %272 = arith.addf %269, %271 : vector<2x32xf32>
    %273 = vector.broadcast %264 : vector<2x1xf32> to vector<2x32xf32>
    %274 = arith.mulf %252, %273 : vector<2x32xf32>
    %c368 = arith.constant 368 : index
    %c0_102 = arith.constant 0 : index
    %275 = vector.load %arg2[%c368, %c0_102] : memref<384x64xf32, #tpu.memory_space<vmem>>, vector<1x32xf32>
    %276 = vector.broadcast %275 : vector<1x32xf32> to vector<2x32xf32>
    %277 = arith.mulf %274, %276 : vector<2x32xf32>
    %c369 = arith.constant 369 : index
    %c0_103 = arith.constant 0 : index
    %278 = vector.load %arg2[%c369, %c0_103] : memref<384x64xf32, #tpu.memory_space<vmem>>, vector<1x32xf32>
    %279 = vector.broadcast %278 : vector<1x32xf32> to vector<2x32xf32>
    %280 = arith.addf %277, %279 : vector<2x32xf32>
    %281 = tpu.concatenate %239, %272, %280 in 1 : vector<2x32xf32>, vector<2x32xf32>, vector<2x32xf32> -> vector<2x96xf32>
    %c192 = arith.constant 192 : index
    %c0_104 = arith.constant 0 : index
    %282 = vector.load %arg2[%c192, %c0_104] : memref<384x64xf32, #tpu.memory_space<vmem>>, vector<96x64xf32>
    %cst_105 = arith.constant dense<0.000000e+00> : vector<2x64xf32>
    %283 = tpu.matmul %281, %282, %cst_105 {dimension_numbers = #tpu.dot_dimension_numbers<[1], [0], [0], [1], [0, 0, 1, 1], [], []>} : vector<2x96xf32>, vector<96x64xf32>, vector<2x64xf32> -> vector<2x64xf32>
    %c370 = arith.constant 370 : index
    %c0_106 = arith.constant 0 : index
    %284 = vector.load %arg2[%c370, %c0_106] : memref<384x64xf32, #tpu.memory_space<vmem>>, vector<1x64xf32>
    %285 = vector.broadcast %284 : vector<1x64xf32> to vector<2x64xf32>
    %286 = arith.addf %283, %285 : vector<2x64xf32>
    %cst_107 = arith.constant 0.000000e+00 : f32
    %287 = vector.broadcast %cst_107 : f32 to vector<2x64xf32>
    %288 = arith.maximumf %286, %287 : vector<2x64xf32>
    %289 = vector.extract_strided_slice %288 {offsets = [0, 0], sizes = [2, 32], strides = [1, 1]} : vector<2x64xf32> to vector<2x32xf32>
    %cst_108 = arith.constant dense<0.000000e+00> : vector<2xf32>
    %290 = vector.multi_reduction <add>, %289, %cst_108 [1] : vector<2x32xf32> to vector<2xf32>
    %291 = vector.shape_cast %290 : vector<2xf32> to vector<2x1xf32>
    %cst_109 = arith.constant 3.200000e+01 : f32
    %292 = vector.broadcast %cst_109 : f32 to vector<2x1xf32>
    %293 = arith.divf %291, %292 : vector<2x1xf32>
    %294 = vector.broadcast %293 : vector<2x1xf32> to vector<2x32xf32>
    %295 = arith.subf %289, %294 : vector<2x32xf32>
    %296 = arith.mulf %295, %295 : vector<2x32xf32>
    %cst_110 = arith.constant dense<0.000000e+00> : vector<2xf32>
    %297 = vector.multi_reduction <add>, %296, %cst_110 [1] : vector<2x32xf32> to vector<2xf32>
    %298 = vector.shape_cast %297 : vector<2xf32> to vector<2x1xf32>
    %cst_111 = arith.constant 3.200000e+01 : f32
    %299 = vector.broadcast %cst_111 : f32 to vector<2x1xf32>
    %300 = arith.divf %298, %299 : vector<2x1xf32>
    %cst_112 = arith.constant 9.99999974E-6 : f32
    %301 = vector.broadcast %cst_112 : f32 to vector<2x1xf32>
    %302 = arith.addf %300, %301 : vector<2x1xf32>
    %303 = math.rsqrt %302 : vector<2x1xf32>
    %304 = vector.broadcast %303 : vector<2x1xf32> to vector<2x32xf32>
    %305 = arith.mulf %295, %304 : vector<2x32xf32>
    %306 = vector.extract_strided_slice %288 {offsets = [0, 32], sizes = [2, 32], strides = [1, 1]} : vector<2x64xf32> to vector<2x32xf32>
    %cst_113 = arith.constant dense<0.000000e+00> : vector<2xf32>
    %307 = vector.multi_reduction <add>, %306, %cst_113 [1] : vector<2x32xf32> to vector<2xf32>
    %308 = vector.shape_cast %307 : vector<2xf32> to vector<2x1xf32>
    %cst_114 = arith.constant 3.200000e+01 : f32
    %309 = vector.broadcast %cst_114 : f32 to vector<2x1xf32>
    %310 = arith.divf %308, %309 : vector<2x1xf32>
    %311 = vector.broadcast %310 : vector<2x1xf32> to vector<2x32xf32>
    %312 = arith.subf %306, %311 : vector<2x32xf32>
    %313 = arith.mulf %312, %312 : vector<2x32xf32>
    %cst_115 = arith.constant dense<0.000000e+00> : vector<2xf32>
    %314 = vector.multi_reduction <add>, %313, %cst_115 [1] : vector<2x32xf32> to vector<2xf32>
    %315 = vector.shape_cast %314 : vector<2xf32> to vector<2x1xf32>
    %cst_116 = arith.constant 3.200000e+01 : f32
    %316 = vector.broadcast %cst_116 : f32 to vector<2x1xf32>
    %317 = arith.divf %315, %316 : vector<2x1xf32>
    %cst_117 = arith.constant 9.99999974E-6 : f32
    %318 = vector.broadcast %cst_117 : f32 to vector<2x1xf32>
    %319 = arith.addf %317, %318 : vector<2x1xf32>
    %320 = math.rsqrt %319 : vector<2x1xf32>
    %321 = vector.broadcast %320 : vector<2x1xf32> to vector<2x32xf32>
    %322 = arith.mulf %312, %321 : vector<2x32xf32>
    %323 = tpu.concatenate %305, %322 in 1 : vector<2x32xf32>, vector<2x32xf32> -> vector<2x64xf32>
    %c371 = arith.constant 371 : index
    %c0_118 = arith.constant 0 : index
    %324 = vector.load %arg2[%c371, %c0_118] : memref<384x64xf32, #tpu.memory_space<vmem>>, vector<1x64xf32>
    %325 = vector.broadcast %324 : vector<1x64xf32> to vector<2x64xf32>
    %326 = arith.mulf %323, %325 : vector<2x64xf32>
    %c372 = arith.constant 372 : index
    %c0_119 = arith.constant 0 : index
    %327 = vector.load %arg2[%c372, %c0_119] : memref<384x64xf32, #tpu.memory_space<vmem>>, vector<1x64xf32>
    %328 = vector.broadcast %327 : vector<1x64xf32> to vector<2x64xf32>
    %329 = arith.addf %326, %328 : vector<2x64xf32>
    %c288 = arith.constant 288 : index
    %c0_120 = arith.constant 0 : index
    %330 = vector.load %arg2[%c288, %c0_120] : memref<384x64xf32, #tpu.memory_space<vmem>>, vector<64x64xf32>
    %cst_121 = arith.constant dense<0.000000e+00> : vector<2x64xf32>
    %331 = tpu.matmul %329, %330, %cst_121 {dimension_numbers = #tpu.dot_dimension_numbers<[1], [0], [0], [1], [0, 0, 1, 1], [], []>} : vector<2x64xf32>, vector<64x64xf32>, vector<2x64xf32> -> vector<2x64xf32>
    %c373 = arith.constant 373 : index
    %c0_122 = arith.constant 0 : index
    %332 = vector.load %arg2[%c373, %c0_122] : memref<384x64xf32, #tpu.memory_space<vmem>>, vector<1x64xf32>
    %333 = vector.broadcast %332 : vector<1x64xf32> to vector<2x64xf32>
    %334 = arith.addf %331, %333 : vector<2x64xf32>
    %cst_123 = arith.constant 0.000000e+00 : f32
    %335 = vector.broadcast %cst_123 : f32 to vector<2x32xf32>
    %336 = tpu.concatenate %334, %216, %335 in 1 : vector<2x64xf32>, vector<2x32xf32>, vector<2x32xf32> -> vector<2x128xf32>
    %c0_124 = arith.constant 0 : index
    %c0_125 = arith.constant 0 : index
    %337 = vector.load %arg3[%c0_124, %c0_125] : memref<2x128xf32, #tpu.memory_space<vmem>>, vector<2x128xf32>
    tpu.vector_store %arg3[%c0_124, %c0_125], %336 {strides = array<i32>} : memref<2x128xf32, #tpu.memory_space<vmem>>, vector<2x128xf32>,
    return
  }
  func.func @transform_0(%arg0: i32) -> (i32, i32) {
    %c0_i32 = arith.constant 0 : i32
    %c0_i32_0 = arith.constant 0 : i32
    %c0_i32_1 = arith.constant 0 : i32
    return %c0_i32, %c0_i32_0 : i32, i32
  }
  func.func @transform_1(%arg0: i32) -> (i32, i32) {
    %c0_i32 = arith.constant 0 : i32
    %c0_i32_0 = arith.constant 0 : i32
    %c0_i32_1 = arith.constant 0 : i32
    return %c0_i32, %c0_i32_0 : i32, i32
  }
  func.func @transform_2(%arg0: i32) -> (i32, i32) {
    %c0_i32 = arith.constant 0 : i32
    %c0_i32_0 = arith.constant 0 : i32
    %c0_i32_1 = arith.constant 0 : i32
    return %c0_i32, %c0_i32_0 : i32, i32
  }
}

</mosaic_0001>

<llo_original>
// kernel: tpu_custom_call.1
$region0: #{tpu_custom_call.1}
  #allocation0 [shape = 'u32[]', space=smem, size = 0x4, offset = 0x4, fixed_abs, tag = 'smem constant byte address 0x4 - core index']
  #allocation1 [shape = 'u32[144,128]{1,0:T(1,128)}', space=vmem, size = 0x12000, scoped, tag = 'internal scratch']
  %s0 = inlined_call_operand.vmem [shape: f32[176,64], index: 0, kind: input, shape index: {}]
  %s1 = inlined_call_operand.vmem [shape: f32[384,64], index: 1, kind: input, shape index: {}]
  %s2 = inlined_call_operand.hbm [shape: f32[2,128], index: 2, kind: output, shape index: {}]
  %s3 = sld [smem:[#allocation0]]
  $region18: #{tpu_custom_call.1} parent=0
    _
  %s5 = ssub.s32 1, %s3
  %s6 = scalar_select 0, %s5, %s3
  $region1: #{tpu_custom_call.1} parent=0
    #allocation2 [shape = 'u8[1024]{0}', space=vmem, size = 0x400, scoped, tag = 'output window, operand 0, single buffered']
    #allocation3 [shape = 's32[1]{0}', space=sflag, size = 0x4, scoped, tag = 'scoped memory for tpu_custom_call.1']
    %7 = vsyncpa [#allocation3], 0
    // Predicated region
    $region2: #{tpu_custom_call.1} parent=1 // pred_check
      _
    $region3: #{tpu_custom_call.1} parent=1 // pred_check_branch
      %9 = sbr.rel (0) target = $region5
    $region4: #{tpu_custom_call.1} parent=1 // pred_region
      _
    $region5: #{tpu_custom_call.1} parent=1 // pred_fallthru
      _
    // Predicated region
    $region6: #{tpu_custom_call.1} parent=1 // pred_check
      _
    $region7: #{tpu_custom_call.1} parent=1 // pred_check_branch
      %11 = sbr.rel (0) target = $region9
    $region8: #{tpu_custom_call.1} parent=1 // pred_region
      _
    $region9: #{tpu_custom_call.1} parent=1 // pred_fallthru
      _
    %v12 = vld [vmem:[%s0] sm:$0xff]
    %v13 = vld [vmem:[%s0 + $0x8] sm:$0xff]
    %v14 = vld [vmem:[%s0 + $0x10] sm:$0xff]
    %v15 = vld [vmem:[%s0 + $0x18] sm:$0xff]
    %v16 = vld [vmem:[%s0 + $0x20] sm:$0xff]
    %v17 = vld [vmem:[%s0 + $0x28] sm:$0xff]
    %v18 = vld [vmem:[%s0 + $0x30] sm:$0xff]
    %v19 = vld [vmem:[%s0 + $0x38] sm:$0xff]
    %v20 = vld [vmem:[%s0 + $0x40] sm:$0xff]
    %v21 = vld [vmem:[%s0 + $0x48] sm:$0xff]
    %v22 = vld [vmem:[%s0 + $0x50] sm:$0xff]
    %v23 = vld [vmem:[%s0 + $0x58] sm:$0xff]
    %v24 = vld [vmem:[%s0 + $0x60] sm:$0xff]
    %v25 = vld [vmem:[%s0 + $0x68] sm:$0xff]
    %v26 = vld [vmem:[%s0 + $0x70] sm:$0xff]
    %v27 = vld [vmem:[%s0 + $0x78] sm:$0xff]
    %v28 = vld [vmem:[%s0 + $0x80] sm:$0xff]
    %v29 = vld [vmem:[%s0 + $0x88] sm:$0xff]
    %v30 = vld [vmem:[%s0 + $0x90] sm:$0x3]
    %v31 = vld [vmem:[%s0 + $0x98] sm:$0x3]
    %v32 = vld [vmem:[%s0 + $0xa0] sm:$0xff]
    %v33 = vld [vmem:[%s0 + $0xa8] sm:$0xff]
    %v34 = vld [vmem:[%s1 + $0x178] sm:$0xf]
    %v35 = vld [vmem:[%s1 + $0x162] sm:$0x1]
    %vm36 = vcmask 130048
    %v38 = vsel %vm36, %v31, 0
    %40 = vmatprep.subr.mxu0 0.0
    %41 = vmatpush1.msra.mxu0 %v28
    %42 = vmatprep.subr.mxu0 0.0
    %43 = vmatpush1.msra.mxu0 %v29
    %44 = vmatprep.subr.mxu0 0.0
    %45 = vmatpush1.msra.mxu0 0.0
    %46 = vmatprep.subr.mxu0 0.0
    %47 = vmatpush1.msra.mxu0 0.0
    %48 = vmatprep.subr.mxu0 0.0
    %49 = vmatpush1.msra.mxu0 0.0
    %50 = vmatprep.subr.mxu0 0.0
    %51 = vmatpush1.msra.mxu0 0.0
    %52 = vmatprep.subr.mxu0 0.0
    %53 = vmatpush1.msra.mxu0 0.0
    %54 = vmatprep.subr.mxu0 0.0
    %55 = vmatpush1.msra.mxu0 0.0
    %56 = vmatprep.subr.mxu0 0.0
    %57 = vmatpush1.msra.mxu0 0.0
    %58 = vmatprep.subr.mxu0 0.0
    %59 = vmatpush1.msra.mxu0 0.0
    %60 = vmatprep.subr.mxu0 0.0
    %61 = vmatpush1.msra.mxu0 0.0
    %62 = vmatprep.subr.mxu0 0.0
    %63 = vmatpush1.msra.mxu0 0.0
    %64 = vmatprep.subr.mxu0 0.0
    %65 = vmatpush1.msra.mxu0 0.0
    %66 = vmatprep.subr.mxu0 0.0
    %67 = vmatpush1.msra.mxu0 0.0
    %68 = vmatprep.subr.mxu0 0.0
    %69 = vmatpush1.msra.mxu0 0.0
    %70 = vmatprep.subr.mxu0 0.0
    %71 = vmatpush1.msra.mxu0 0.0
    %72 = vmatprep.subr.mxu0 0.0
    %73 = vmatpush1.msra.mxu0 0.0
    %74 = vmatprep.subr.mxu0 0.0
    %75 = vmatpush1.msra.mxu0 0.0
    %76 = vmatprep.subr.mxu0 0.0
    %77 = vmatpush1.msra.mxu0 0.0
    %78 = vmatprep.subr.mxu0 0.0
    %79 = vmatpush1.msra.mxu0 0.0
    %80 = vmatprep.subr.mxu0 0.0
    %81 = vmatpush1.msra.mxu0 0.0
    %82 = vmatprep.subr.mxu0 0.0
    %83 = vmatpush1.msra.mxu0 0.0
    %84 = vmatprep.subr.mxu0 0.0
    %85 = vmatpush1.msra.mxu0 0.0
    %86 = vmatprep.subr.mxu0 0.0
    %87 = vmatpush1.msra.mxu0 0.0
    %88 = vmatprep.subr.mxu0 0.0
    %89 = vmatpush1.msra.mxu0 0.0
    %90 = vmatprep.subr.mxu0 0.0
    %91 = vmatpush1.msra.mxu0 0.0
    %92 = vmatprep.subr.mxu0 0.0
    %93 = vmatpush1.msra.mxu0 0.0
    %94 = vmatprep.subr.mxu0 0.0
    %95 = vmatpush1.msra.mxu0 0.0
    %96 = vmatprep.subr.mxu0 0.0
    %97 = vmatpush1.msra.mxu0 0.0
    %98 = vmatprep.subr.mxu0 0.0
    %99 = vmatpush1.msra.mxu0 0.0
    %100 = vmatprep.subr.mxu0 0.0
    %101 = vmatpush1.msra.mxu0 0.0
    %102 = vmatprep.subr.mxu0 0.0
    %103 = vmatpush1.msra.mxu0 0.0
    %104 = vmatprep.mubr.f32.mxu0 0.0
    %105 = vmatmul.mubr.f32.gmra.mrb[0].mxu0 %v38
    %v106 = vpop.f32.mrb[0].mxu0
    %v107 = vadd.f32 0.0, %v106
    %v108 = vpop.f32.mrb[0].mxu0
    %109 = vdwg.mxu0
    %vm110 = vcmask 261120
    %v111 = vsel %vm110, %v28, 0.0
    %112 = vadd.xlane.f32.xlu0 %v111
    %v113 = vpop.xlane.xlu0 %112
    %v114 = vsel %vm110, %v29, 0.0
    %115 = vadd.xlane.f32.xlu0 %v114
    %v116 = vpop.xlane.xlu0 %115
    %v117 = vmul.f32 %v113, 0.125
    %v118 = vmul.f32 %v116, 0.125
    %v119 = vsub.f32 %v28, %v117
    %v120 = vsub.f32 %v29, %v118
    %v121 = vlaneseq
    %v122 = vshrl.u32 %v121, 7
    %v123 = vsub.s32 0, %v122
    %v124 = vrot.slane %v35, %v123
    %v125 = vmul.f32 %v119, %v124
    %v126 = vmul.f32 %v120, %v124
    %v127 = vmul.f32 %v125, %v125
    %v128 = vmul.f32 %v126, %v126
    %v129 = vsel %vm110, %v127, 0.0
    %130 = vadd.xlane.f32.xlu0 %v129
    %v131 = vpop.xlane.xlu0 %130
    %v132 = vsel %vm110, %v128, 0.0
    %133 = vadd.xlane.f32.xlu0 %v132
    %v134 = vpop.xlane.xlu0 %133
    %v135 = vmul.f32 %v131, 0.125
    %v136 = vmul.f32 %v134, 0.125
    %v137 = vadd.f32 %v135, 1e-05
    %v138 = vadd.f32 %v136, 1e-05
    %v139 = vrsqrt.pop %v137
    %v140 = vrsqrt.pop %v138
    %v141 = vmul.f32 %v125, %v139
    %v142 = vmul.f32 %v126, %v140
    %v143 = vld [vmem:[%s1 + $0x160] sm:$0x1]
    %v144 = vlaneseq
    %v145 = vshrl.u32 %v144, 7
    %v146 = vsub.s32 0, %v145
    %v147 = vrot.slane %v143, %v146
    %v148 = vmul.f32 %v141, %v147
    %v149 = vmul.f32 %v142, %v147
    %v150 = vld [vmem:[%s1 + $0x161] sm:$0x1]
    %v151 = vlaneseq
    %v152 = vshrl.u32 %v151, 7
    %v153 = vsub.s32 0, %v152
    %v154 = vrot.slane %v150, %v153
    %v155 = vadd.f32 %v148, %v154
    %v156 = vadd.f32 %v149, %v154
    %v157 = vld [vmem:[%s1] sm:$0xff]
    %v158 = vld [vmem:[%s1 + $0x8] sm:$0xff]
    %v159 = vld [vmem:[%s1 + $0x10] sm:$0xff]
    %v160 = vld [vmem:[%s1 + $0x18] sm:$0xff]
    %v162 = vsel %vm110, %v155, 0
    %v165 = vsel %vm110, %v156, 0
    %167 = vmatprep.subr.mxu0 0.0
    %168 = vmatpush1.msra.mxu0 %v157
    %169 = vmatprep.subr.mxu0 0.0
    %170 = vmatpush1.msra.mxu0 %v158
    %171 = vmatprep.subr.mxu0 0.0
    %172 = vmatpush1.msra.mxu0 %v159
    %173 = vmatprep.subr.mxu0 0.0
    %174 = vmatpush1.msra.mxu0 %v160
    %175 = vmatprep.subr.mxu0 0.0
    %176 = vmatpush1.msra.mxu0 0.0
    %177 = vmatprep.subr.mxu0 0.0
    %178 = vmatpush1.msra.mxu0 0.0
    %179 = vmatprep.subr.mxu0 0.0
    %180 = vmatpush1.msra.mxu0 0.0
    %181 = vmatprep.subr.mxu0 0.0
    %182 = vmatpush1.msra.mxu0 0.0
    %183 = vmatprep.subr.mxu0 0.0
    %184 = vmatpush1.msra.mxu0 0.0
    %185 = vmatprep.subr.mxu0 0.0
    %186 = vmatpush1.msra.mxu0 0.0
    %187 = vmatprep.subr.mxu0 0.0
    %188 = vmatpush1.msra.mxu0 0.0
    %189 = vmatprep.subr.mxu0 0.0
    %190 = vmatpush1.msra.mxu0 0.0
    %191 = vmatprep.subr.mxu0 0.0
    %192 = vmatpush1.msra.mxu0 0.0
    %193 = vmatprep.subr.mxu0 0.0
    %194 = vmatpush1.msra.mxu0 0.0
    %195 = vmatprep.subr.mxu0 0.0
    %196 = vmatpush1.msra.mxu0 0.0
    %197 = vmatprep.subr.mxu0 0.0
    %198 = vmatpush1.msra.mxu0 0.0
    %199 = vmatprep.subr.mxu0 0.0
    %200 = vmatpush1.msra.mxu0 0.0
    %201 = vmatprep.subr.mxu0 0.0
    %202 = vmatpush1.msra.mxu0 0.0
    %203 = vmatprep.subr.mxu0 0.0
    %204 = vmatpush1.msra.mxu0 0.0
    %205 = vmatprep.subr.mxu0 0.0
    %206 = vmatpush1.msra.mxu0 0.0
    %207 = vmatprep.subr.mxu0 0.0
    %208 = vmatpush1.msra.mxu0 0.0
    %209 = vmatprep.subr.mxu0 0.0
    %210 = vmatpush1.msra.mxu0 0.0
    %211 = vmatprep.subr.mxu0 0.0
    %212 = vmatpush1.msra.mxu0 0.0
    %213 = vmatprep.subr.mxu0 0.0
    %214 = vmatpush1.msra.mxu0 0.0
    %215 = vmatprep.subr.mxu0 0.0
    %216 = vmatpush1.msra.mxu0 0.0
    %217 = vmatprep.subr.mxu0 0.0
    %218 = vmatpush1.msra.mxu0 0.0
    %219 = vmatprep.subr.mxu0 0.0
    %220 = vmatpush1.msra.mxu0 0.0
    %221 = vmatprep.subr.mxu0 0.0
    %222 = vmatpush1.msra.mxu0 0.0
    %223 = vmatprep.subr.mxu0 0.0
    %224 = vmatpush1.msra.mxu0 0.0
    %225 = vmatprep.subr.mxu0 0.0
    %226 = vmatpush1.msra.mxu0 0.0
    %227 = vmatprep.subr.mxu0 0.0
    %228 = vmatpush1.msra.mxu0 0.0
    %229 = vmatprep.subr.mxu0 0.0
    %230 = vmatpush1.msra.mxu0 0.0
    %231 = vmatprep.mubr.f32.mxu0 0.0
    %232 = vmatmul.mubr.f32.gmra.mrb[0].mxu0 %v162
    %v233 = vpop.f32.mrb[0].mxu0
    %v234 = vadd.f32 0.0, %v233
    %v235 = vpop.f32.mrb[0].mxu0
    %236 = vmatprep.mubr.f32.mxu0 0.0
    %237 = vmatmul.mubr.f32.gmra.mrb[0].mxu0 %v165
    %v238 = vpop.f32.mrb[0].mxu0
    %v239 = vadd.f32 0.0, %v238
    %v240 = vpop.f32.mrb[0].mxu0
    %241 = vdwg.mxu0
    %v242 = vmax.f32 %v234, 0.0
    %v243 = vmax.f32 %v239, 0.0
    %v244 = vld [vmem:[%s1 + $0x163] sm:$0x1]
    %v245 = vlaneseq
    %v246 = vshrl.u32 %v245, 7
    %v247 = vsub.s32 0, %v246
    %v248 = vrot.slane %v244, %v247
    %v249 = vmul.f32 %v242, %v248
    %v250 = vmul.f32 %v243, %v248
    %v251 = vld [vmem:[%s1 + $0x164] sm:$0x1]
    %v252 = vlaneseq
    %v253 = vshrl.u32 %v252, 7
    %v254 = vsub.s32 0, %v253
    %v255 = vrot.slane %v251, %v254
    %v256 = vadd.f32 %v249, %v255
    %v257 = vadd.f32 %v250, %v255
    %v258 = vld [vmem:[%s1 + $0x20] sm:$0xff]
    %v259 = vld [vmem:[%s1 + $0x28] sm:$0xff]
    %v260 = vld [vmem:[%s1 + $0x30] sm:$0xff]
    %v261 = vld [vmem:[%s1 + $0x38] sm:$0xff]
    %v263 = vsel %vm110, %v256, 0
    %v266 = vsel %vm110, %v257, 0
    %268 = vmatprep.subr.mxu0 0.0
    %269 = vmatpush1.msra.mxu0 %v258
    %270 = vmatprep.subr.mxu0 0.0
    %271 = vmatpush1.msra.mxu0 %v259
    %272 = vmatprep.subr.mxu0 0.0
    %273 = vmatpush1.msra.mxu0 %v260
    %274 = vmatprep.subr.mxu0 0.0
    %275 = vmatpush1.msra.mxu0 %v261
    %276 = vmatprep.subr.mxu0 0.0
    %277 = vmatpush1.msra.mxu0 0.0
    %278 = vmatprep.subr.mxu0 0.0
    %279 = vmatpush1.msra.mxu0 0.0
    %280 = vmatprep.subr.mxu0 0.0
    %281 = vmatpush1.msra.mxu0 0.0
    %282 = vmatprep.subr.mxu0 0.0
    %283 = vmatpush1.msra.mxu0 0.0
    %284 = vmatprep.subr.mxu0 0.0
    %285 = vmatpush1.msra.mxu0 0.0
    %286 = vmatprep.subr.mxu0 0.0
    %287 = vmatpush1.msra.mxu0 0.0
    %288 = vmatprep.subr.mxu0 0.0
    %289 = vmatpush1.msra.mxu0 0.0
    %290 = vmatprep.subr.mxu0 0.0
    %291 = vmatpush1.msra.mxu0 0.0
    %292 = vmatprep.subr.mxu0 0.0
    %293 = vmatpush1.msra.mxu0 0.0
    %294 = vmatprep.subr.mxu0 0.0
    %295 = vmatpush1.msra.mxu0 0.0
    %296 = vmatprep.subr.mxu0 0.0
    %297 = vmatpush1.msra.mxu0 0.0
    %298 = vmatprep.subr.mxu0 0.0
    %299 = vmatpush1.msra.mxu0 0.0
    %300 = vmatprep.subr.mxu0 0.0
    %301 = vmatpush1.msra.mxu0 0.0
    %302 = vmatprep.subr.mxu0 0.0
    %303 = vmatpush1.msra.mxu0 0.0
    %304 = vmatprep.subr.mxu0 0.0
    %305 = vmatpush1.msra.mxu0 0.0
    %306 = vmatprep.subr.mxu0 0.0
    %307 = vmatpush1.msra.mxu0 0.0
    %308 = vmatprep.subr.mxu0 0.0
    %309 = vmatpush1.msra.mxu0 0.0
    %310 = vmatprep.subr.mxu0 0.0
    %311 = vmatpush1.msra.mxu0 0.0
    %312 = vmatprep.subr.mxu0 0.0
    %313 = vmatpush1.msra.mxu0 0.0
    %314 = vmatprep.subr.mxu0 0.0
    %315 = vmatpush1.msra.mxu0 0.0
    %316 = vmatprep.subr.mxu0 0.0
    %317 = vmatpush1.msra.mxu0 0.0
    %318 = vmatprep.subr.mxu0 0.0
    %319 = vmatpush1.msra.mxu0 0.0
    %320 = vmatprep.subr.mxu0 0.0
    %321 = vmatpush1.msra.mxu0 0.0
    %322 = vmatprep.subr.mxu0 0.0
    %323 = vmatpush1.msra.mxu0 0.0
    %324 = vmatprep.subr.mxu0 0.0
    %325 = vmatpush1.msra.mxu0 0.0
    %326 = vmatprep.subr.mxu0 0.0
    %327 = vmatpush1.msra.mxu0 0.0
    %328 = vmatprep.subr.mxu0 0.0
    %329 = vmatpush1.msra.mxu0 0.0
    %330 = vmatprep.subr.mxu0 0.0
    %331 = vmatpush1.msra.mxu0 0.0
    %332 = vmatprep.mubr.f32.mxu0 0.0
    %333 = vmatmul.mubr.f32.gmra.mrb[0].mxu0 %v263
    %v334 = vpop.f32.mrb[0].mxu0
    %v335 = vadd.f32 0.0, %v334
    %v336 = vpop.f32.mrb[0].mxu0
    %337 = vmatprep.mubr.f32.mxu0 0.0
    %338 = vmatmul.mubr.f32.gmra.mrb[0].mxu0 %v266
    %v339 = vpop.f32.mrb[0].mxu0
    %v340 = vadd.f32 0.0, %v339
    %v341 = vpop.f32.mrb[0].mxu0
    %342 = vdwg.mxu0
    %345 = vrot.lane.b32.xlu0 %v335, 124
    %v346 = vpop.permute.xlu0 %345
    %347 = vrot.lane.b32.xlu0 %v340, 124
    %v348 = vpop.permute.xlu0 %347
    %349 = vrot.lane.b32.xlu0 %v335, 96
    %v350 = vpop.permute.xlu0 %349
    %351 = vrot.lane.b32.xlu0 %v340, 96
    %v352 = vpop.permute.xlu0 %351
    %353 = vrot.lane.b32.xlu0 %v346, 96
    %v354 = vpop.permute.xlu0 %353
    %355 = vrot.lane.b32.xlu0 %v348, 96
    %v356 = vpop.permute.xlu0 %355
    %v362 = vsel %vm110, %v12, 0
    %v365 = vsel %vm110, %v13, 0
    %v368 = vsel %vm110, %v14, 0
    %v371 = vsel %vm110, %v15, 0
    %v374 = vsel %vm110, %v16, 0
    %v377 = vsel %vm110, %v17, 0
    %379 = vmatprep.subr.mxu0 0.0
    %380 = vmatpush1.msra.mxu0 %v350
    %381 = vmatprep.subr.mxu0 0.0
    %382 = vmatpush1.msra.mxu0 %v352
    %383 = vmatprep.subr.mxu0 0.0
    %384 = vmatpush1.msra.mxu0 %v354
    %385 = vmatprep.subr.mxu0 0.0
    %386 = vmatpush1.msra.mxu0 %v356
    %387 = vmatprep.subr.mxu0 0.0
    %388 = vmatpush1.msra.mxu0 0.0
    %389 = vmatprep.subr.mxu0 0.0
    %390 = vmatpush1.msra.mxu0 0.0
    %391 = vmatprep.subr.mxu0 0.0
    %392 = vmatpush1.msra.mxu0 0.0
    %393 = vmatprep.subr.mxu0 0.0
    %394 = vmatpush1.msra.mxu0 0.0
    %395 = vmatprep.subr.mxu0 0.0
    %396 = vmatpush1.msra.mxu0 0.0
    %397 = vmatprep.subr.mxu0 0.0
    %398 = vmatpush1.msra.mxu0 0.0
    %399 = vmatprep.subr.mxu0 0.0
    %400 = vmatpush1.msra.mxu0 0.0
    %401 = vmatprep.subr.mxu0 0.0
    %402 = vmatpush1.msra.mxu0 0.0
    %403 = vmatprep.subr.mxu0 0.0
    %404 = vmatpush1.msra.mxu0 0.0
    %405 = vmatprep.subr.mxu0 0.0
    %406 = vmatpush1.msra.mxu0 0.0
    %407 = vmatprep.subr.mxu0 0.0
    %408 = vmatpush1.msra.mxu0 0.0
    %409 = vmatprep.subr.mxu0 0.0
    %410 = vmatpush1.msra.mxu0 0.0
    %411 = vmatprep.subr.mxu0 0.0
    %412 = vmatpush1.msra.mxu0 0.0
    %413 = vmatprep.subr.mxu0 0.0
    %414 = vmatpush1.msra.mxu0 0.0
    %415 = vmatprep.subr.mxu0 0.0
    %416 = vmatpush1.msra.mxu0 0.0
    %417 = vmatprep.subr.mxu0 0.0
    %418 = vmatpush1.msra.mxu0 0.0
    %419 = vmatprep.subr.mxu0 0.0
    %420 = vmatpush1.msra.mxu0 0.0
    %421 = vmatprep.subr.mxu0 0.0
    %422 = vmatpush1.msra.mxu0 0.0
    %423 = vmatprep.subr.mxu0 0.0
    %424 = vmatpush1.msra.mxu0 0.0
    %425 = vmatprep.subr.mxu0 0.0
    %426 = vmatpush1.msra.mxu0 0.0
    %427 = vmatprep.subr.mxu0 0.0
    %428 = vmatpush1.msra.mxu0 0.0
    %429 = vmatprep.subr.mxu0 0.0
    %430 = vmatpush1.msra.mxu0 0.0
    %431 = vmatprep.subr.mxu0 0.0
    %432 = vmatpush1.msra.mxu0 0.0
    %433 = vmatprep.subr.mxu0 0.0
    %434 = vmatpush1.msra.mxu0 0.0
    %435 = vmatprep.subr.mxu0 0.0
    %436 = vmatpush1.msra.mxu0 0.0
    %437 = vmatprep.subr.mxu0 0.0
    %438 = vmatpush1.msra.mxu0 0.0
    %439 = vmatprep.subr.mxu0 0.0
    %440 = vmatpush1.msra.mxu0 0.0
    %441 = vmatprep.subr.mxu0 0.0
    %442 = vmatpush1.msra.mxu0 0.0
    %443 = vmatprep.mubr.f32.mxu0 0.0
    %444 = vmatmul.mubr.f32.gmra.mrb[0].mxu0 %v362
    %v445 = vpop.f32.mrb[0].mxu0
    %v446 = vadd.f32 0.0, %v445
    %v447 = vpop.f32.mrb[0].mxu0
    %448 = vmatprep.mubr.f32.mxu0 0.0
    %449 = vmatmul.mubr.f32.gmra.mrb[0].mxu0 %v365
    %v450 = vpop.f32.mrb[0].mxu0
    %v451 = vadd.f32 0.0, %v450
    %v452 = vpop.f32.mrb[0].mxu0
    %453 = vmatprep.mubr.f32.mxu0 0.0
    %454 = vmatmul.mubr.f32.gmra.mrb[0].mxu0 %v368
    %v455 = vpop.f32.mrb[0].mxu0
    %v456 = vadd.f32 0.0, %v455
    %v457 = vpop.f32.mrb[0].mxu0
    %458 = vmatprep.mubr.f32.mxu0 0.0
    %459 = vmatmul.mubr.f32.gmra.mrb[0].mxu0 %v371
    %v460 = vpop.f32.mrb[0].mxu0
    %v461 = vadd.f32 0.0, %v460
    %v462 = vpop.f32.mrb[0].mxu0
    %463 = vmatprep.mubr.f32.mxu0 0.0
    %464 = vmatmul.mubr.f32.gmra.mrb[0].mxu0 %v374
    %v465 = vpop.f32.mrb[0].mxu0
    %v466 = vadd.f32 0.0, %v465
    %v467 = vpop.f32.mrb[0].mxu0
    %468 = vmatprep.mubr.f32.mxu0 0.0
    %469 = vmatmul.mubr.f32.gmra.mrb[0].mxu0 %v377
    %v470 = vpop.f32.mrb[0].mxu0
    %v471 = vadd.f32 0.0, %v470
    %v472 = vpop.f32.mrb[0].mxu0
    %473 = vdwg.mxu0
    %vm474 = vcmp.gt.f32.partialorder %v446, 0.0
    %vm475 = vcmp.gt.f32.partialorder %v451, 0.0
    %vm476 = vcmp.gt.f32.partialorder %v456, 0.0
    %vm477 = vcmp.gt.f32.partialorder %v461, 0.0
    %vm478 = vcmp.gt.f32.partialorder %v466, 0.0
    %vm479 = vcmp.gt.f32.partialorder %v471, 0.0
    %v480 = vmul.f32 %v446, 0.2
    %v481 = vmul.f32 %v451, 0.2
    %v482 = vmul.f32 %v456, 0.2
    %v483 = vmul.f32 %v461, 0.2
    %v484 = vmul.f32 %v466, 0.2
    %v485 = vmul.f32 %v471, 0.2
    %v486 = vsel %vm474, %v446, %v480
    %v487 = vsel %vm475, %v451, %v481
    %v488 = vsel %vm476, %v456, %v482
    %v489 = vsel %vm477, %v461, %v483
    %v490 = vsel %vm478, %v466, %v484
    %v491 = vsel %vm479, %v471, %v485
    %vm492 = vcmask 31744
    %v493 = vsel %vm492, %v486, -inf
    %v494 = vsel %vm492, %v487, -inf
    %v495 = vsel %vm492, %v488, -inf
    %v496 = vsel %vm492, %v489, -inf
    %v497 = vsel %vm492, %v490, -inf
    %v498 = vmax.f32 %v493, %v497
    %v499 = vsel %vm492, %v491, -inf
    %v500 = vmax.f32 %v494, %v499
    %v501 = vmax.f32 %v498, %v500
    %v502 = vmax.f32 %v495, %v496
    %v503 = vmax.f32 %v501, %v502
    %504 = vmax.xlane.f32.xlu0 %v503
    %v505 = vpop.xlane.xlu0 %504
    %v506 = vrot.slane %v505, 4
    %v507 = vmax.f32 %v505, %v506
    %v508 = vrot.slane %v507, 2
    %v509 = vmax.f32 %v507, %v508
    %v510 = vrot.slane %v509, 1
    %v511 = vmax.f32 %v509, %v510
    %s512 = vtos %v511
    %v513 = vstv %s512
    %v514 = vsub.f32 %v486, %v513
    %v515 = vsub.f32 %v487, %v513
    %v516 = vsub.f32 %v488, %v513
    %v517 = vsub.f32 %v489, %v513
    %v518 = vsub.f32 %v490, %v513
    %v519 = vsub.f32 %v491, %v513
    %v520 = vmul.f32 %v514, 1.442695
    %v521 = vpow.pop %v520
    %v522 = vmul.f32 %v515, 1.442695
    %v523 = vpow.pop %v522
    %v524 = vmul.f32 %v516, 1.442695
    %v525 = vpow.pop %v524
    %v526 = vmul.f32 %v517, 1.442695
    %v527 = vpow.pop %v526
    %v528 = vmul.f32 %v518, 1.442695
    %v529 = vpow.pop %v528
    %v530 = vmul.f32 %v519, 1.442695
    %v531 = vpow.pop %v530
    %v533 = vsel %vm36, %v18, 0
    %v536 = vsel %vm36, %v19, 0
    %v539 = vsel %vm36, %v20, 0
    %v542 = vsel %vm36, %v21, 0
    %v545 = vsel %vm36, %v22, 0
    %v548 = vsel %vm36, %v23, 0
    %550 = vmatprep.subr.mxu0 0.0
    %551 = vmatpush1.msra.mxu0 %v335
    %552 = vmatprep.subr.mxu0 0.0
    %553 = vmatpush1.msra.mxu0 %v340
    %554 = vmatprep.subr.mxu0 0.0
    %555 = vmatpush1.msra.mxu0 0.0
    %556 = vmatprep.subr.mxu0 0.0
    %557 = vmatpush1.msra.mxu0 0.0
    %558 = vmatprep.subr.mxu0 0.0
    %559 = vmatpush1.msra.mxu0 0.0
    %560 = vmatprep.subr.mxu0 0.0
    %561 = vmatpush1.msra.mxu0 0.0
    %562 = vmatprep.subr.mxu0 0.0
    %563 = vmatpush1.msra.mxu0 0.0
    %564 = vmatprep.subr.mxu0 0.0
    %565 = vmatpush1.msra.mxu0 0.0
    %566 = vmatprep.subr.mxu0 0.0
    %567 = vmatpush1.msra.mxu0 0.0
    %568 = vmatprep.subr.mxu0 0.0
    %569 = vmatpush1.msra.mxu0 0.0
    %570 = vmatprep.subr.mxu0 0.0
    %571 = vmatpush1.msra.mxu0 0.0
    %572 = vmatprep.subr.mxu0 0.0
    %573 = vmatpush1.msra.mxu0 0.0
    %574 = vmatprep.subr.mxu0 0.0
    %575 = vmatpush1.msra.mxu0 0.0
    %576 = vmatprep.subr.mxu0 0.0
    %577 = vmatpush1.msra.mxu0 0.0
    %578 = vmatprep.subr.mxu0 0.0
    %579 = vmatpush1.msra.mxu0 0.0
    %580 = vmatprep.subr.mxu0 0.0
    %581 = vmatpush1.msra.mxu0 0.0
    %582 = vmatprep.subr.mxu0 0.0
    %583 = vmatpush1.msra.mxu0 0.0
    %584 = vmatprep.subr.mxu0 0.0
    %585 = vmatpush1.msra.mxu0 0.0
    %586 = vmatprep.subr.mxu0 0.0
    %587 = vmatpush1.msra.mxu0 0.0
    %588 = vmatprep.subr.mxu0 0.0
    %589 = vmatpush1.msra.mxu0 0.0
    %590 = vmatprep.subr.mxu0 0.0
    %591 = vmatpush1.msra.mxu0 0.0
    %592 = vmatprep.subr.mxu0 0.0
    %593 = vmatpush1.msra.mxu0 0.0
    %594 = vmatprep.subr.mxu0 0.0
    %595 = vmatpush1.msra.mxu0 0.0
    %596 = vmatprep.subr.mxu0 0.0
    %597 = vmatpush1.msra.mxu0 0.0
    %598 = vmatprep.subr.mxu0 0.0
    %599 = vmatpush1.msra.mxu0 0.0
    %600 = vmatprep.subr.mxu0 0.0
    %601 = vmatpush1.msra.mxu0 0.0
    %602 = vmatprep.subr.mxu0 0.0
    %603 = vmatpush1.msra.mxu0 0.0
    %604 = vmatprep.subr.mxu0 0.0
    %605 = vmatpush1.msra.mxu0 0.0
    %606 = vmatprep.subr.mxu0 0.0
    %607 = vmatpush1.msra.mxu0 0.0
    %608 = vmatprep.subr.mxu0 0.0
    %609 = vmatpush1.msra.mxu0 0.0
    %610 = vmatprep.subr.mxu0 0.0
    %611 = vmatpush1.msra.mxu0 0.0
    %612 = vmatprep.subr.mxu0 0.0
    %613 = vmatpush1.msra.mxu0 0.0
    %614 = vmatprep.mubr.f32.mxu0 0.0
    %615 = vmatmul.mubr.f32.gmra.mrb[0].mxu0 %v533
    %v616 = vpop.f32.mrb[0].mxu0
    %v617 = vadd.f32 0.0, %v616
    %v618 = vpop.f32.mrb[0].mxu0
    %619 = vmatprep.mubr.f32.mxu0 0.0
    %620 = vmatmul.mubr.f32.gmra.mrb[0].mxu0 %v536
    %v621 = vpop.f32.mrb[0].mxu0
    %v622 = vadd.f32 0.0, %v621
    %v623 = vpop.f32.mrb[0].mxu0
    %624 = vmatprep.mubr.f32.mxu0 0.0
    %625 = vmatmul.mubr.f32.gmra.mrb[0].mxu0 %v539
    %v626 = vpop.f32.mrb[0].mxu0
    %v627 = vadd.f32 0.0, %v626
    %v628 = vpop.f32.mrb[0].mxu0
    %629 = vmatprep.mubr.f32.mxu0 0.0
    %630 = vmatmul.mubr.f32.gmra.mrb[0].mxu0 %v542
    %v631 = vpop.f32.mrb[0].mxu0
    %v632 = vadd.f32 0.0, %v631
    %v633 = vpop.f32.mrb[0].mxu0
    %634 = vmatprep.mubr.f32.mxu0 0.0
    %635 = vmatmul.mubr.f32.gmra.mrb[0].mxu0 %v545
    %v636 = vpop.f32.mrb[0].mxu0
    %v637 = vadd.f32 0.0, %v636
    %v638 = vpop.f32.mrb[0].mxu0
    %639 = vmatprep.mubr.f32.mxu0 0.0
    %640 = vmatmul.mubr.f32.gmra.mrb[0].mxu0 %v548
    %v641 = vpop.f32.mrb[0].mxu0
    %v642 = vadd.f32 0.0, %v641
    %v643 = vpop.f32.mrb[0].mxu0
    %644 = vdwg.mxu0
    %vm645 = vcmask 392192
    %v647 = vsel %vm645, %v24, 0
    %v650 = vsel %vm645, %v25, 0
    %652 = vmatprep.subr.mxu0 0.0
    %653 = vmatpush1.msra.mxu0 %v521
    %654 = vmatprep.subr.mxu0 0.0
    %655 = vmatpush1.msra.mxu0 %v523
    %656 = vmatprep.subr.mxu0 0.0
    %657 = vmatpush1.msra.mxu0 %v525
    %658 = vmatprep.subr.mxu0 0.0
    %659 = vmatpush1.msra.mxu0 %v527
    %660 = vmatprep.subr.mxu0 0.0
    %661 = vmatpush1.msra.mxu0 %v529
    %662 = vmatprep.subr.mxu0 0.0
    %663 = vmatpush1.msra.mxu0 %v531
    %664 = vmatprep.subr.mxu0 0.0
    %665 = vmatpush1.msra.mxu0 0.0
    %666 = vmatprep.subr.mxu0 0.0
    %667 = vmatpush1.msra.mxu0 0.0
    %668 = vmatprep.subr.mxu0 0.0
    %669 = vmatpush1.msra.mxu0 0.0
    %670 = vmatprep.subr.mxu0 0.0
    %671 = vmatpush1.msra.mxu0 0.0
    %672 = vmatprep.subr.mxu0 0.0
    %673 = vmatpush1.msra.mxu0 0.0
    %674 = vmatprep.subr.mxu0 0.0
    %675 = vmatpush1.msra.mxu0 0.0
    %676 = vmatprep.subr.mxu0 0.0
    %677 = vmatpush1.msra.mxu0 0.0
    %678 = vmatprep.subr.mxu0 0.0
    %679 = vmatpush1.msra.mxu0 0.0
    %680 = vmatprep.subr.mxu0 0.0
    %681 = vmatpush1.msra.mxu0 0.0
    %682 = vmatprep.subr.mxu0 0.0
    %683 = vmatpush1.msra.mxu0 0.0
    %684 = vmatprep.subr.mxu0 0.0
    %685 = vmatpush1.msra.mxu0 0.0
    %686 = vmatprep.subr.mxu0 0.0
    %687 = vmatpush1.msra.mxu0 0.0
    %688 = vmatprep.subr.mxu0 0.0
    %689 = vmatpush1.msra.mxu0 0.0
    %690 = vmatprep.subr.mxu0 0.0
    %691 = vmatpush1.msra.mxu0 0.0
    %692 = vmatprep.subr.mxu0 0.0
    %693 = vmatpush1.msra.mxu0 0.0
    %694 = vmatprep.subr.mxu0 0.0
    %695 = vmatpush1.msra.mxu0 0.0
    %696 = vmatprep.subr.mxu0 0.0
    %697 = vmatpush1.msra.mxu0 0.0
    %698 = vmatprep.subr.mxu0 0.0
    %699 = vmatpush1.msra.mxu0 0.0
    %700 = vmatprep.subr.mxu0 0.0
    %701 = vmatpush1.msra.mxu0 0.0
    %702 = vmatprep.subr.mxu0 0.0
    %703 = vmatpush1.msra.mxu0 0.0
    %704 = vmatprep.subr.mxu0 0.0
    %705 = vmatpush1.msra.mxu0 0.0
    %706 = vmatprep.subr.mxu0 0.0
    %707 = vmatpush1.msra.mxu0 0.0
    %708 = vmatprep.subr.mxu0 0.0
    %709 = vmatpush1.msra.mxu0 0.0
    %710 = vmatprep.subr.mxu0 0.0
    %711 = vmatpush1.msra.mxu0 0.0
    %712 = vmatprep.subr.mxu0 0.0
    %713 = vmatpush1.msra.mxu0 0.0
    %714 = vmatprep.subr.mxu0 0.0
    %715 = vmatpush1.msra.mxu0 0.0
    %716 = vmatprep.mubr.f32.mxu0 0.0
    %717 = vmatmul.mubr.f32.gmra.mrb[0].mxu0 %v647
    %v718 = vpop.f32.mrb[0].mxu0
    %v719 = vadd.f32 0.0, %v718
    %v720 = vpop.f32.mrb[0].mxu0
    %721 = vmatprep.mubr.f32.mxu0 0.0
    %722 = vmatmul.mubr.f32.gmra.mrb[0].mxu0 %v650
    %v723 = vpop.f32.mrb[0].mxu0
    %v724 = vadd.f32 0.0, %v723
    %v725 = vpop.f32.mrb[0].mxu0
    %726 = vdwg.mxu0
    %v728 = vsel %vm492, %v521, 0
    %v731 = vsel %vm492, %v523, 0
    %v734 = vsel %vm492, %v525, 0
    %v737 = vsel %vm492, %v527, 0
    %v740 = vsel %vm492, %v529, 0
    %v743 = vsel %vm492, %v531, 0
    %vm745 = vcmask 1043456
    %v747 = vsel %vm745, %v34, 0
    %749 = vmatprep.subr.mxu0 0.0
    %750 = vmatpush1.msra.mxu0 %v747
    %751 = vmatprep.subr.mxu0 0.0
    %752 = vmatpush1.msra.mxu0 0.0
    %753 = vmatprep.subr.mxu0 0.0
    %754 = vmatpush1.msra.mxu0 0.0
    %755 = vmatprep.subr.mxu0 0.0
    %756 = vmatpush1.msra.mxu0 0.0
    %757 = vmatprep.subr.mxu0 0.0
    %758 = vmatpush1.msra.mxu0 0.0
    %759 = vmatprep.subr.mxu0 0.0
    %760 = vmatpush1.msra.mxu0 0.0
    %761 = vmatprep.subr.mxu0 0.0
    %762 = vmatpush1.msra.mxu0 0.0
    %763 = vmatprep.subr.mxu0 0.0
    %764 = vmatpush1.msra.mxu0 0.0
    %765 = vmatprep.subr.mxu0 0.0
    %766 = vmatpush1.msra.mxu0 0.0
    %767 = vmatprep.subr.mxu0 0.0
    %768 = vmatpush1.msra.mxu0 0.0
    %769 = vmatprep.subr.mxu0 0.0
    %770 = vmatpush1.msra.mxu0 0.0
    %771 = vmatprep.subr.mxu0 0.0
    %772 = vmatpush1.msra.mxu0 0.0
    %773 = vmatprep.subr.mxu0 0.0
    %774 = vmatpush1.msra.mxu0 0.0
    %775 = vmatprep.subr.mxu0 0.0
    %776 = vmatpush1.msra.mxu0 0.0
    %777 = vmatprep.subr.mxu0 0.0
    %778 = vmatpush1.msra.mxu0 0.0
    %779 = vmatprep.subr.mxu0 0.0
    %780 = vmatpush1.msra.mxu0 0.0
    %781 = vmatprep.subr.mxu0 0.0
    %782 = vmatpush1.msra.mxu0 0.0
    %783 = vmatprep.subr.mxu0 0.0
    %784 = vmatpush1.msra.mxu0 0.0
    %785 = vmatprep.subr.mxu0 0.0
    %786 = vmatpush1.msra.mxu0 0.0
    %787 = vmatprep.subr.mxu0 0.0
    %788 = vmatpush1.msra.mxu0 0.0
    %789 = vmatprep.subr.mxu0 0.0
    %790 = vmatpush1.msra.mxu0 0.0
    %791 = vmatprep.subr.mxu0 0.0
    %792 = vmatpush1.msra.mxu0 0.0
    %793 = vmatprep.subr.mxu0 0.0
    %794 = vmatpush1.msra.mxu0 0.0
    %795 = vmatprep.subr.mxu0 0.0
    %796 = vmatpush1.msra.mxu0 0.0
    %797 = vmatprep.subr.mxu0 0.0
    %798 = vmatpush1.msra.mxu0 0.0
    %799 = vmatprep.subr.mxu0 0.0
    %800 = vmatpush1.msra.mxu0 0.0
    %801 = vmatprep.subr.mxu0 0.0
    %802 = vmatpush1.msra.mxu0 0.0
    %803 = vmatprep.subr.mxu0 0.0
    %804 = vmatpush1.msra.mxu0 0.0
    %805 = vmatprep.subr.mxu0 0.0
    %806 = vmatpush1.msra.mxu0 0.0
    %807 = vmatprep.subr.mxu0 0.0
    %808 = vmatpush1.msra.mxu0 0.0
    %809 = vmatprep.subr.mxu0 0.0
    %810 = vmatpush1.msra.mxu0 0.0
    %811 = vmatprep.subr.mxu0 0.0
    %812 = vmatpush1.msra.mxu0 0.0
    %813 = vmatprep.mubr.f32.mxu0 0.0
    %814 = vmatmul.mubr.f32.gmra.mrb[0].mxu0 %v728
    %v815 = vpop.f32.mrb[0].mxu0
    %v816 = vadd.f32 0.0, %v815
    %v817 = vpop.f32.mrb[0].mxu0
    %818 = vmatprep.mubr.f32.mxu0 0.0
    %819 = vmatmul.mubr.f32.gmra.mrb[0].mxu0 %v731
    %v820 = vpop.f32.mrb[0].mxu0
    %v821 = vadd.f32 0.0, %v820
    %v822 = vpop.f32.mrb[0].mxu0
    %823 = vmatprep.mubr.f32.mxu0 0.0
    %824 = vmatmul.mubr.f32.gmra.mrb[0].mxu0 %v734
    %v825 = vpop.f32.mrb[0].mxu0
    %v826 = vadd.f32 0.0, %v825
    %v827 = vpop.f32.mrb[0].mxu0
    %828 = vmatprep.mubr.f32.mxu0 0.0
    %829 = vmatmul.mubr.f32.gmra.mrb[0].mxu0 %v737
    %v830 = vpop.f32.mrb[0].mxu0
    %v831 = vadd.f32 0.0, %v830
    %v832 = vpop.f32.mrb[0].mxu0
    %833 = vmatprep.mubr.f32.mxu0 0.0
    %834 = vmatmul.mubr.f32.gmra.mrb[0].mxu0 %v740
    %v835 = vpop.f32.mrb[0].mxu0
    %v836 = vadd.f32 0.0, %v835
    %v837 = vpop.f32.mrb[0].mxu0
    %838 = vmatprep.mubr.f32.mxu0 0.0
    %839 = vmatmul.mubr.f32.gmra.mrb[0].mxu0 %v743
    %v840 = vpop.f32.mrb[0].mxu0
    %v841 = vadd.f32 0.0, %v840
    %v842 = vpop.f32.mrb[0].mxu0
    %843 = vdwg.mxu0
    %v844 = vmul.f32 %v617, %v816
    %v845 = vmul.f32 %v622, %v821
    %v846 = vmul.f32 %v627, %v826
    %v847 = vmul.f32 %v632, %v831
    %v848 = vmul.f32 %v637, %v836
    %v849 = vmul.f32 %v642, %v841
    %850 = vmatprep.subr.mxu0 0.0
    %851 = vmatpush1.msra.mxu0 %v844
    %852 = vmatprep.subr.mxu0 0.0
    %853 = vmatpush1.msra.mxu0 %v845
    %854 = vmatprep.subr.mxu0 0.0
    %855 = vmatpush1.msra.mxu0 %v846
    %856 = vmatprep.subr.mxu0 0.0
    %857 = vmatpush1.msra.mxu0 %v847
    %858 = vmatprep.subr.mxu0 0.0
    %859 = vmatpush1.msra.mxu0 %v848
    %860 = vmatprep.subr.mxu0 0.0
    %861 = vmatpush1.msra.mxu0 %v849
    %862 = vmatprep.subr.mxu0 0.0
    %863 = vmatpush1.msra.mxu0 0.0
    %864 = vmatprep.subr.mxu0 0.0
    %865 = vmatpush1.msra.mxu0 0.0
    %866 = vmatprep.subr.mxu0 0.0
    %867 = vmatpush1.msra.mxu0 0.0
    %868 = vmatprep.subr.mxu0 0.0
    %869 = vmatpush1.msra.mxu0 0.0
    %870 = vmatprep.subr.mxu0 0.0
    %871 = vmatpush1.msra.mxu0 0.0
    %872 = vmatprep.subr.mxu0 0.0
    %873 = vmatpush1.msra.mxu0 0.0
    %874 = vmatprep.subr.mxu0 0.0
    %875 = vmatpush1.msra.mxu0 0.0
    %876 = vmatprep.subr.mxu0 0.0
    %877 = vmatpush1.msra.mxu0 0.0
    %878 = vmatprep.subr.mxu0 0.0
    %879 = vmatpush1.msra.mxu0 0.0
    %880 = vmatprep.subr.mxu0 0.0
    %881 = vmatpush1.msra.mxu0 0.0
    %882 = vmatprep.subr.mxu0 0.0
    %883 = vmatpush1.msra.mxu0 0.0
    %884 = vmatprep.subr.mxu0 0.0
    %885 = vmatpush1.msra.mxu0 0.0
    %886 = vmatprep.subr.mxu0 0.0
    %887 = vmatpush1.msra.mxu0 0.0
    %888 = vmatprep.subr.mxu0 0.0
    %889 = vmatpush1.msra.mxu0 0.0
    %890 = vmatprep.subr.mxu0 0.0
    %891 = vmatpush1.msra.mxu0 0.0
    %892 = vmatprep.subr.mxu0 0.0
    %893 = vmatpush1.msra.mxu0 0.0
    %894 = vmatprep.subr.mxu0 0.0
    %895 = vmatpush1.msra.mxu0 0.0
    %896 = vmatprep.subr.mxu0 0.0
    %897 = vmatpush1.msra.mxu0 0.0
    %898 = vmatprep.subr.mxu0 0.0
    %899 = vmatpush1.msra.mxu0 0.0
    %900 = vmatprep.subr.mxu0 0.0
    %901 = vmatpush1.msra.mxu0 0.0
    %902 = vmatprep.subr.mxu0 0.0
    %903 = vmatpush1.msra.mxu0 0.0
    %904 = vmatprep.subr.mxu0 0.0
    %905 = vmatpush1.msra.mxu0 0.0
    %906 = vmatprep.subr.mxu0 0.0
    %907 = vmatpush1.msra.mxu0 0.0
    %908 = vmatprep.subr.mxu0 0.0
    %909 = vmatpush1.msra.mxu0 0.0
    %910 = vmatprep.subr.mxu0 0.0
    %911 = vmatpush1.msra.mxu0 0.0
    %912 = vmatprep.subr.mxu0 0.0
    %913 = vmatpush1.msra.mxu0 0.0
    %914 = vmatprep.mubr.f32.mxu0 0.0
    %915 = vmatmul.mubr.f32.gmra.mrb[0].mxu0 %v647
    %v916 = vpop.f32.mrb[0].mxu0
    %v917 = vadd.f32 0.0, %v916
    %v918 = vpop.f32.mrb[0].mxu0
    %919 = vmatprep.mubr.f32.mxu0 0.0
    %920 = vmatmul.mubr.f32.gmra.mrb[0].mxu0 %v650
    %v921 = vpop.f32.mrb[0].mxu0
    %v922 = vadd.f32 0.0, %v921
    %v923 = vpop.f32.mrb[0].mxu0
    %924 = vdwg.mxu0
    %v926 = vsel %vm492, %v719, 0
    %v929 = vsel %vm492, %v724, 0
    %931 = vmatprep.subr.mxu0 0.0
    %932 = vmatpush1.msra.mxu0 %v747
    %933 = vmatprep.subr.mxu0 0.0
    %934 = vmatpush1.msra.mxu0 0.0
    %935 = vmatprep.subr.mxu0 0.0
    %936 = vmatpush1.msra.mxu0 0.0
    %937 = vmatprep.subr.mxu0 0.0
    %938 = vmatpush1.msra.mxu0 0.0
    %939 = vmatprep.subr.mxu0 0.0
    %940 = vmatpush1.msra.mxu0 0.0
    %941 = vmatprep.subr.mxu0 0.0
    %942 = vmatpush1.msra.mxu0 0.0
    %943 = vmatprep.subr.mxu0 0.0
    %944 = vmatpush1.msra.mxu0 0.0
    %945 = vmatprep.subr.mxu0 0.0
    %946 = vmatpush1.msra.mxu0 0.0
    %947 = vmatprep.subr.mxu0 0.0
    %948 = vmatpush1.msra.mxu0 0.0
    %949 = vmatprep.subr.mxu0 0.0
    %950 = vmatpush1.msra.mxu0 0.0
    %951 = vmatprep.subr.mxu0 0.0
    %952 = vmatpush1.msra.mxu0 0.0
    %953 = vmatprep.subr.mxu0 0.0
    %954 = vmatpush1.msra.mxu0 0.0
    %955 = vmatprep.subr.mxu0 0.0
    %956 = vmatpush1.msra.mxu0 0.0
    %957 = vmatprep.subr.mxu0 0.0
    %958 = vmatpush1.msra.mxu0 0.0
    %959 = vmatprep.subr.mxu0 0.0
    %960 = vmatpush1.msra.mxu0 0.0
    %961 = vmatprep.subr.mxu0 0.0
    %962 = vmatpush1.msra.mxu0 0.0
    %963 = vmatprep.subr.mxu0 0.0
    %964 = vmatpush1.msra.mxu0 0.0
    %965 = vmatprep.subr.mxu0 0.0
    %966 = vmatpush1.msra.mxu0 0.0
    %967 = vmatprep.subr.mxu0 0.0
    %968 = vmatpush1.msra.mxu0 0.0
    %969 = vmatprep.subr.mxu0 0.0
    %970 = vmatpush1.msra.mxu0 0.0
    %971 = vmatprep.subr.mxu0 0.0
    %972 = vmatpush1.msra.mxu0 0.0
    %973 = vmatprep.subr.mxu0 0.0
    %974 = vmatpush1.msra.mxu0 0.0
    %975 = vmatprep.subr.mxu0 0.0
    %976 = vmatpush1.msra.mxu0 0.0
    %977 = vmatprep.subr.mxu0 0.0
    %978 = vmatpush1.msra.mxu0 0.0
    %979 = vmatprep.subr.mxu0 0.0
    %980 = vmatpush1.msra.mxu0 0.0
    %981 = vmatprep.subr.mxu0 0.0
    %982 = vmatpush1.msra.mxu0 0.0
    %983 = vmatprep.subr.mxu0 0.0
    %984 = vmatpush1.msra.mxu0 0.0
    %985 = vmatprep.subr.mxu0 0.0
    %986 = vmatpush1.msra.mxu0 0.0
    %987 = vmatprep.subr.mxu0 0.0
    %988 = vmatpush1.msra.mxu0 0.0
    %989 = vmatprep.subr.mxu0 0.0
    %990 = vmatpush1.msra.mxu0 0.0
    %991 = vmatprep.subr.mxu0 0.0
    %992 = vmatpush1.msra.mxu0 0.0
    %993 = vmatprep.subr.mxu0 0.0
    %994 = vmatpush1.msra.mxu0 0.0
    %995 = vmatprep.mubr.f32.mxu0 0.0
    %996 = vmatmul.mubr.f32.gmra.mrb[0].mxu0 %v926
    %v997 = vpop.f32.mrb[0].mxu0
    %v998 = vadd.f32 1e-16, %v997
    %v999 = vpop.f32.mrb[0].mxu0
    %1000 = vmatprep.mubr.f32.mxu0 0.0
    %1001 = vmatmul.mubr.f32.gmra.mrb[0].mxu0 %v929
    %v1002 = vpop.f32.mrb[0].mxu0
    %v1003 = vadd.f32 1e-16, %v1002
    %v1004 = vpop.f32.mrb[0].mxu0
    %1005 = vdwg.mxu0
    %v1006 = vrcp.pop %v998
    %v1007 = vrcp.pop %v1003
    %v1008 = vmul.f32 %v917, %v1006
    %v1009 = vmul.f32 %v922, %v1007
    %v1010 = vld [vmem:[%s1 + $0x167] sm:$0x1]
    %v1011 = vlaneseq
    %v1012 = vshrl.u32 %v1011, 7
    %v1013 = vsub.s32 0, %v1012
    %v1014 = vrot.slane %v1010, %v1013
    %v1015 = vadd.f32 %v1008, %v1014
    %v1016 = vadd.f32 %v1009, %v1014
    %v1017 = vmax.f32 %v1015, 0.0
    %v1018 = vmax.f32 %v1016, 0.0
    %v1019 = vld [vmem:[%s1 + $0x165] sm:$0x1]
    %v1020 = vlaneseq
    %v1021 = vshrl.u32 %v1020, 7
    %v1022 = vsub.s32 0, %v1021
    %v1023 = vrot.slane %v1019, %v1022
    %v1024 = vmul.f32 %v1017, %v1023
    %v1025 = vmul.f32 %v1018, %v1023
    %v1026 = vld [vmem:[%s1 + $0x166] sm:$0x1]
    %v1027 = vlaneseq
    %v1028 = vshrl.u32 %v1027, 7
    %v1029 = vsub.s32 0, %v1028
    %v1030 = vrot.slane %v1026, %v1029
    %v1031 = vadd.f32 %v1024, %v1030
    %v1032 = vadd.f32 %v1025, %v1030
    %v1033 = vld [vmem:[%s1 + $0x40] sm:$0xff]
    %v1034 = vld [vmem:[%s1 + $0x48] sm:$0xff]
    %v1035 = vld [vmem:[%s1 + $0x50] sm:$0xff]
    %v1036 = vld [vmem:[%s1 + $0x58] sm:$0xff]
    %v1038 = vsel %vm110, %v1031, 0
    %v1041 = vsel %vm110, %v1032, 0
    %1043 = vmatprep.subr.mxu0 0.0
    %1044 = vmatpush1.msra.mxu0 %v1033
    %1045 = vmatprep.subr.mxu0 0.0
    %1046 = vmatpush1.msra.mxu0 %v1034
    %1047 = vmatprep.subr.mxu0 0.0
    %1048 = vmatpush1.msra.mxu0 %v1035
    %1049 = vmatprep.subr.mxu0 0.0
    %1050 = vmatpush1.msra.mxu0 %v1036
    %1051 = vmatprep.subr.mxu0 0.0
    %1052 = vmatpush1.msra.mxu0 0.0
    %1053 = vmatprep.subr.mxu0 0.0
    %1054 = vmatpush1.msra.mxu0 0.0
    %1055 = vmatprep.subr.mxu0 0.0
    %1056 = vmatpush1.msra.mxu0 0.0
    %1057 = vmatprep.subr.mxu0 0.0
    %1058 = vmatpush1.msra.mxu0 0.0
    %1059 = vmatprep.subr.mxu0 0.0
    %1060 = vmatpush1.msra.mxu0 0.0
    %1061 = vmatprep.subr.mxu0 0.0
    %1062 = vmatpush1.msra.mxu0 0.0
    %1063 = vmatprep.subr.mxu0 0.0
    %1064 = vmatpush1.msra.mxu0 0.0
    %1065 = vmatprep.subr.mxu0 0.0
    %1066 = vmatpush1.msra.mxu0 0.0
    %1067 = vmatprep.subr.mxu0 0.0
    %1068 = vmatpush1.msra.mxu0 0.0
    %1069 = vmatprep.subr.mxu0 0.0
    %1070 = vmatpush1.msra.mxu0 0.0
    %1071 = vmatprep.subr.mxu0 0.0
    %1072 = vmatpush1.msra.mxu0 0.0
    %1073 = vmatprep.subr.mxu0 0.0
    %1074 = vmatpush1.msra.mxu0 0.0
    %1075 = vmatprep.subr.mxu0 0.0
    %1076 = vmatpush1.msra.mxu0 0.0
    %1077 = vmatprep.subr.mxu0 0.0
    %1078 = vmatpush1.msra.mxu0 0.0
    %1079 = vmatprep.subr.mxu0 0.0
    %1080 = vmatpush1.msra.mxu0 0.0
    %1081 = vmatprep.subr.mxu0 0.0
    %1082 = vmatpush1.msra.mxu0 0.0
    %1083 = vmatprep.subr.mxu0 0.0
    %1084 = vmatpush1.msra.mxu0 0.0
    %1085 = vmatprep.subr.mxu0 0.0
    %1086 = vmatpush1.msra.mxu0 0.0
    %1087 = vmatprep.subr.mxu0 0.0
    %1088 = vmatpush1.msra.mxu0 0.0
    %1089 = vmatprep.subr.mxu0 0.0
    %1090 = vmatpush1.msra.mxu0 0.0
    %1091 = vmatprep.subr.mxu0 0.0
    %1092 = vmatpush1.msra.mxu0 0.0
    %1093 = vmatprep.subr.mxu0 0.0
    %1094 = vmatpush1.msra.mxu0 0.0
    %1095 = vmatprep.subr.mxu0 0.0
    %1096 = vmatpush1.msra.mxu0 0.0
    %1097 = vmatprep.subr.mxu0 0.0
    %1098 = vmatpush1.msra.mxu0 0.0
    %1099 = vmatprep.subr.mxu0 0.0
    %1100 = vmatpush1.msra.mxu0 0.0
    %1101 = vmatprep.subr.mxu0 0.0
    %1102 = vmatpush1.msra.mxu0 0.0
    %1103 = vmatprep.subr.mxu0 0.0
    %1104 = vmatpush1.msra.mxu0 0.0
    %1105 = vmatprep.subr.mxu0 0.0
    %1106 = vmatpush1.msra.mxu0 0.0
    %1107 = vmatprep.mubr.f32.mxu0 0.0
    %1108 = vmatmul.mubr.f32.gmra.mrb[0].mxu0 %v1038
    %v1109 = vpop.f32.mrb[0].mxu0
    %v1110 = vadd.f32 0.0, %v1109
    %v1111 = vpop.f32.mrb[0].mxu0
    %1112 = vmatprep.mubr.f32.mxu0 0.0
    %1113 = vmatmul.mubr.f32.gmra.mrb[0].mxu0 %v1041
    %v1114 = vpop.f32.mrb[0].mxu0
    %v1115 = vadd.f32 0.0, %v1114
    %v1116 = vpop.f32.mrb[0].mxu0
    %1117 = vdwg.mxu0
    %1120 = vrot.lane.b32.xlu0 %v1110, 124
    %v1121 = vpop.permute.xlu0 %1120
    %1122 = vrot.lane.b32.xlu0 %v1115, 124
    %v1123 = vpop.permute.xlu0 %1122
    %1124 = vrot.lane.b32.xlu0 %v1110, 96
    %v1125 = vpop.permute.xlu0 %1124
    %1126 = vrot.lane.b32.xlu0 %v1115, 96
    %v1127 = vpop.permute.xlu0 %1126
    %1128 = vrot.lane.b32.xlu0 %v1121, 96
    %v1129 = vpop.permute.xlu0 %1128
    %1130 = vrot.lane.b32.xlu0 %v1123, 96
    %v1131 = vpop.permute.xlu0 %1130
    %1136 = vmatprep.subr.mxu0 0.0
    %1137 = vmatpush1.msra.mxu0 %v1125
    %1138 = vmatprep.subr.mxu0 0.0
    %1139 = vmatpush1.msra.mxu0 %v1127
    %1140 = vmatprep.subr.mxu0 0.0
    %1141 = vmatpush1.msra.mxu0 %v1129
    %1142 = vmatprep.subr.mxu0 0.0
    %1143 = vmatpush1.msra.mxu0 %v1131
    %1144 = vmatprep.subr.mxu0 0.0
    %1145 = vmatpush1.msra.mxu0 0.0
    %1146 = vmatprep.subr.mxu0 0.0
    %1147 = vmatpush1.msra.mxu0 0.0
    %1148 = vmatprep.subr.mxu0 0.0
    %1149 = vmatpush1.msra.mxu0 0.0
    %1150 = vmatprep.subr.mxu0 0.0
    %1151 = vmatpush1.msra.mxu0 0.0
    %1152 = vmatprep.subr.mxu0 0.0
    %1153 = vmatpush1.msra.mxu0 0.0
    %1154 = vmatprep.subr.mxu0 0.0
    %1155 = vmatpush1.msra.mxu0 0.0
    %1156 = vmatprep.subr.mxu0 0.0
    %1157 = vmatpush1.msra.mxu0 0.0
    %1158 = vmatprep.subr.mxu0 0.0
    %1159 = vmatpush1.msra.mxu0 0.0
    %1160 = vmatprep.subr.mxu0 0.0
    %1161 = vmatpush1.msra.mxu0 0.0
    %1162 = vmatprep.subr.mxu0 0.0
    %1163 = vmatpush1.msra.mxu0 0.0
    %1164 = vmatprep.subr.mxu0 0.0
    %1165 = vmatpush1.msra.mxu0 0.0
    %1166 = vmatprep.subr.mxu0 0.0
    %1167 = vmatpush1.msra.mxu0 0.0
    %1168 = vmatprep.subr.mxu0 0.0
    %1169 = vmatpush1.msra.mxu0 0.0
    %1170 = vmatprep.subr.mxu0 0.0
    %1171 = vmatpush1.msra.mxu0 0.0
    %1172 = vmatprep.subr.mxu0 0.0
    %1173 = vmatpush1.msra.mxu0 0.0
    %1174 = vmatprep.subr.mxu0 0.0
    %1175 = vmatpush1.msra.mxu0 0.0
    %1176 = vmatprep.subr.mxu0 0.0
    %1177 = vmatpush1.msra.mxu0 0.0
    %1178 = vmatprep.subr.mxu0 0.0
    %1179 = vmatpush1.msra.mxu0 0.0
    %1180 = vmatprep.subr.mxu0 0.0
    %1181 = vmatpush1.msra.mxu0 0.0
    %1182 = vmatprep.subr.mxu0 0.0
    %1183 = vmatpush1.msra.mxu0 0.0
    %1184 = vmatprep.subr.mxu0 0.0
    %1185 = vmatpush1.msra.mxu0 0.0
    %1186 = vmatprep.subr.mxu0 0.0
    %1187 = vmatpush1.msra.mxu0 0.0
    %1188 = vmatprep.subr.mxu0 0.0
    %1189 = vmatpush1.msra.mxu0 0.0
    %1190 = vmatprep.subr.mxu0 0.0
    %1191 = vmatpush1.msra.mxu0 0.0
    %1192 = vmatprep.subr.mxu0 0.0
    %1193 = vmatpush1.msra.mxu0 0.0
    %1194 = vmatprep.subr.mxu0 0.0
    %1195 = vmatpush1.msra.mxu0 0.0
    %1196 = vmatprep.subr.mxu0 0.0
    %1197 = vmatpush1.msra.mxu0 0.0
    %1198 = vmatprep.subr.mxu0 0.0
    %1199 = vmatpush1.msra.mxu0 0.0
    %1200 = vmatprep.mubr.f32.mxu0 0.0
    %1201 = vmatmul.mubr.f32.gmra.mrb[0].mxu0 %v362
    %v1202 = vpop.f32.mrb[0].mxu0
    %v1203 = vadd.f32 0.0, %v1202
    %v1204 = vpop.f32.mrb[0].mxu0
    %1205 = vmatprep.mubr.f32.mxu0 0.0
    %1206 = vmatmul.mubr.f32.gmra.mrb[0].mxu0 %v365
    %v1207 = vpop.f32.mrb[0].mxu0
    %v1208 = vadd.f32 0.0, %v1207
    %v1209 = vpop.f32.mrb[0].mxu0
    %1210 = vmatprep.mubr.f32.mxu0 0.0
    %1211 = vmatmul.mubr.f32.gmra.mrb[0].mxu0 %v368
    %v1212 = vpop.f32.mrb[0].mxu0
    %v1213 = vadd.f32 0.0, %v1212
    %v1214 = vpop.f32.mrb[0].mxu0
    %1215 = vmatprep.mubr.f32.mxu0 0.0
    %1216 = vmatmul.mubr.f32.gmra.mrb[0].mxu0 %v371
    %v1217 = vpop.f32.mrb[0].mxu0
    %v1218 = vadd.f32 0.0, %v1217
    %v1219 = vpop.f32.mrb[0].mxu0
    %1220 = vmatprep.mubr.f32.mxu0 0.0
    %1221 = vmatmul.mubr.f32.gmra.mrb[0].mxu0 %v374
    %v1222 = vpop.f32.mrb[0].mxu0
    %v1223 = vadd.f32 0.0, %v1222
    %v1224 = vpop.f32.mrb[0].mxu0
    %1225 = vmatprep.mubr.f32.mxu0 0.0
    %1226 = vmatmul.mubr.f32.gmra.mrb[0].mxu0 %v377
    %v1227 = vpop.f32.mrb[0].mxu0
    %v1228 = vadd.f32 0.0, %v1227
    %v1229 = vpop.f32.mrb[0].mxu0
    %1230 = vdwg.mxu0
    %vm1231 = vcmp.gt.f32.partialorder %v1203, 0.0
    %vm1232 = vcmp.gt.f32.partialorder %v1208, 0.0
    %vm1233 = vcmp.gt.f32.partialorder %v1213, 0.0
    %vm1234 = vcmp.gt.f32.partialorder %v1218, 0.0
    %vm1235 = vcmp.gt.f32.partialorder %v1223, 0.0
    %vm1236 = vcmp.gt.f32.partialorder %v1228, 0.0
    %v1237 = vmul.f32 %v1203, 0.2
    %v1238 = vmul.f32 %v1208, 0.2
    %v1239 = vmul.f32 %v1213, 0.2
    %v1240 = vmul.f32 %v1218, 0.2
    %v1241 = vmul.f32 %v1223, 0.2
    %v1242 = vmul.f32 %v1228, 0.2
    %v1243 = vsel %vm1231, %v1203, %v1237
    %v1244 = vsel %vm1232, %v1208, %v1238
    %v1245 = vsel %vm1233, %v1213, %v1239
    %v1246 = vsel %vm1234, %v1218, %v1240
    %v1247 = vsel %vm1235, %v1223, %v1241
    %v1248 = vsel %vm1236, %v1228, %v1242
    %v1249 = vsel %vm492, %v1243, -inf
    %v1250 = vsel %vm492, %v1244, -inf
    %v1251 = vsel %vm492, %v1245, -inf
    %v1252 = vsel %vm492, %v1246, -inf
    %v1253 = vsel %vm492, %v1247, -inf
    %v1254 = vmax.f32 %v1249, %v1253
    %v1255 = vsel %vm492, %v1248, -inf
    %v1256 = vmax.f32 %v1250, %v1255
    %v1257 = vmax.f32 %v1254, %v1256
    %v1258 = vmax.f32 %v1251, %v1252
    %v1259 = vmax.f32 %v1257, %v1258
    %1260 = vmax.xlane.f32.xlu0 %v1259
    %v1261 = vpop.xlane.xlu0 %1260
    %v1262 = vrot.slane %v1261, 4
    %v1263 = vmax.f32 %v1261, %v1262
    %v1264 = vrot.slane %v1263, 2
    %v1265 = vmax.f32 %v1263, %v1264
    %v1266 = vrot.slane %v1265, 1
    %v1267 = vmax.f32 %v1265, %v1266
    %s1268 = vtos %v1267
    %v1269 = vstv %s1268
    %v1270 = vsub.f32 %v1243, %v1269
    %v1271 = vsub.f32 %v1244, %v1269
    %v1272 = vsub.f32 %v1245, %v1269
    %v1273 = vsub.f32 %v1246, %v1269
    %v1274 = vsub.f32 %v1247, %v1269
    %v1275 = vsub.f32 %v1248, %v1269
    %v1276 = vmul.f32 %v1270, 1.442695
    %v1277 = vpow.pop %v1276
    %v1278 = vmul.f32 %v1271, 1.442695
    %v1279 = vpow.pop %v1278
    %v1280 = vmul.f32 %v1272, 1.442695
    %v1281 = vpow.pop %v1280
    %v1282 = vmul.f32 %v1273, 1.442695
    %v1283 = vpow.pop %v1282
    %v1284 = vmul.f32 %v1274, 1.442695
    %v1285 = vpow.pop %v1284
    %v1286 = vmul.f32 %v1275, 1.442695
    %v1287 = vpow.pop %v1286
    %1288 = vmatprep.subr.mxu0 0.0
    %1289 = vmatpush1.msra.mxu0 %v1110
    %1290 = vmatprep.subr.mxu0 0.0
    %1291 = vmatpush1.msra.mxu0 %v1115
    %1292 = vmatprep.subr.mxu0 0.0
    %1293 = vmatpush1.msra.mxu0 0.0
    %1294 = vmatprep.subr.mxu0 0.0
    %1295 = vmatpush1.msra.mxu0 0.0
    %1296 = vmatprep.subr.mxu0 0.0
    %1297 = vmatpush1.msra.mxu0 0.0
    %1298 = vmatprep.subr.mxu0 0.0
    %1299 = vmatpush1.msra.mxu0 0.0
    %1300 = vmatprep.subr.mxu0 0.0
    %1301 = vmatpush1.msra.mxu0 0.0
    %1302 = vmatprep.subr.mxu0 0.0
    %1303 = vmatpush1.msra.mxu0 0.0
    %1304 = vmatprep.subr.mxu0 0.0
    %1305 = vmatpush1.msra.mxu0 0.0
    %1306 = vmatprep.subr.mxu0 0.0
    %1307 = vmatpush1.msra.mxu0 0.0
    %1308 = vmatprep.subr.mxu0 0.0
    %1309 = vmatpush1.msra.mxu0 0.0
    %1310 = vmatprep.subr.mxu0 0.0
    %1311 = vmatpush1.msra.mxu0 0.0
    %1312 = vmatprep.subr.mxu0 0.0
    %1313 = vmatpush1.msra.mxu0 0.0
    %1314 = vmatprep.subr.mxu0 0.0
    %1315 = vmatpush1.msra.mxu0 0.0
    %1316 = vmatprep.subr.mxu0 0.0
    %1317 = vmatpush1.msra.mxu0 0.0
    %1318 = vmatprep.subr.mxu0 0.0
    %1319 = vmatpush1.msra.mxu0 0.0
    %1320 = vmatprep.subr.mxu0 0.0
    %1321 = vmatpush1.msra.mxu0 0.0
    %1322 = vmatprep.subr.mxu0 0.0
    %1323 = vmatpush1.msra.mxu0 0.0
    %1324 = vmatprep.subr.mxu0 0.0
    %1325 = vmatpush1.msra.mxu0 0.0
    %1326 = vmatprep.subr.mxu0 0.0
    %1327 = vmatpush1.msra.mxu0 0.0
    %1328 = vmatprep.subr.mxu0 0.0
    %1329 = vmatpush1.msra.mxu0 0.0
    %1330 = vmatprep.subr.mxu0 0.0
    %1331 = vmatpush1.msra.mxu0 0.0
    %1332 = vmatprep.subr.mxu0 0.0
    %1333 = vmatpush1.msra.mxu0 0.0
    %1334 = vmatprep.subr.mxu0 0.0
    %1335 = vmatpush1.msra.mxu0 0.0
    %1336 = vmatprep.subr.mxu0 0.0
    %1337 = vmatpush1.msra.mxu0 0.0
    %1338 = vmatprep.subr.mxu0 0.0
    %1339 = vmatpush1.msra.mxu0 0.0
    %1340 = vmatprep.subr.mxu0 0.0
    %1341 = vmatpush1.msra.mxu0 0.0
    %1342 = vmatprep.subr.mxu0 0.0
    %1343 = vmatpush1.msra.mxu0 0.0
    %1344 = vmatprep.subr.mxu0 0.0
    %1345 = vmatpush1.msra.mxu0 0.0
    %1346 = vmatprep.subr.mxu0 0.0
    %1347 = vmatpush1.msra.mxu0 0.0
    %1348 = vmatprep.subr.mxu0 0.0
    %1349 = vmatpush1.msra.mxu0 0.0
    %1350 = vmatprep.subr.mxu0 0.0
    %1351 = vmatpush1.msra.mxu0 0.0
    %1352 = vmatprep.mubr.f32.mxu0 0.0
    %1353 = vmatmul.mubr.f32.gmra.mrb[0].mxu0 %v533
    %v1354 = vpop.f32.mrb[0].mxu0
    %v1355 = vadd.f32 0.0, %v1354
    %v1356 = vpop.f32.mrb[0].mxu0
    %1357 = vmatprep.mubr.f32.mxu0 0.0
    %1358 = vmatmul.mubr.f32.gmra.mrb[0].mxu0 %v536
    %v1359 = vpop.f32.mrb[0].mxu0
    %v1360 = vadd.f32 0.0, %v1359
    %v1361 = vpop.f32.mrb[0].mxu0
    %1362 = vmatprep.mubr.f32.mxu0 0.0
    %1363 = vmatmul.mubr.f32.gmra.mrb[0].mxu0 %v539
    %v1364 = vpop.f32.mrb[0].mxu0
    %v1365 = vadd.f32 0.0, %v1364
    %v1366 = vpop.f32.mrb[0].mxu0
    %1367 = vmatprep.mubr.f32.mxu0 0.0
    %1368 = vmatmul.mubr.f32.gmra.mrb[0].mxu0 %v542
    %v1369 = vpop.f32.mrb[0].mxu0
    %v1370 = vadd.f32 0.0, %v1369
    %v1371 = vpop.f32.mrb[0].mxu0
    %1372 = vmatprep.mubr.f32.mxu0 0.0
    %1373 = vmatmul.mubr.f32.gmra.mrb[0].mxu0 %v545
    %v1374 = vpop.f32.mrb[0].mxu0
    %v1375 = vadd.f32 0.0, %v1374
    %v1376 = vpop.f32.mrb[0].mxu0
    %1377 = vmatprep.mubr.f32.mxu0 0.0
    %1378 = vmatmul.mubr.f32.gmra.mrb[0].mxu0 %v548
    %v1379 = vpop.f32.mrb[0].mxu0
    %v1380 = vadd.f32 0.0, %v1379
    %v1381 = vpop.f32.mrb[0].mxu0
    %1382 = vdwg.mxu0
    %1383 = vmatprep.subr.mxu0 0.0
    %1384 = vmatpush1.msra.mxu0 %v1277
    %1385 = vmatprep.subr.mxu0 0.0
    %1386 = vmatpush1.msra.mxu0 %v1279
    %1387 = vmatprep.subr.mxu0 0.0
    %1388 = vmatpush1.msra.mxu0 %v1281
    %1389 = vmatprep.subr.mxu0 0.0
    %1390 = vmatpush1.msra.mxu0 %v1283
    %1391 = vmatprep.subr.mxu0 0.0
    %1392 = vmatpush1.msra.mxu0 %v1285
    %1393 = vmatprep.subr.mxu0 0.0
    %1394 = vmatpush1.msra.mxu0 %v1287
    %1395 = vmatprep.subr.mxu0 0.0
    %1396 = vmatpush1.msra.mxu0 0.0
    %1397 = vmatprep.subr.mxu0 0.0
    %1398 = vmatpush1.msra.mxu0 0.0
    %1399 = vmatprep.subr.mxu0 0.0
    %1400 = vmatpush1.msra.mxu0 0.0
    %1401 = vmatprep.subr.mxu0 0.0
    %1402 = vmatpush1.msra.mxu0 0.0
    %1403 = vmatprep.subr.mxu0 0.0
    %1404 = vmatpush1.msra.mxu0 0.0
    %1405 = vmatprep.subr.mxu0 0.0
    %1406 = vmatpush1.msra.mxu0 0.0
    %1407 = vmatprep.subr.mxu0 0.0
    %1408 = vmatpush1.msra.mxu0 0.0
    %1409 = vmatprep.subr.mxu0 0.0
    %1410 = vmatpush1.msra.mxu0 0.0
    %1411 = vmatprep.subr.mxu0 0.0
    %1412 = vmatpush1.msra.mxu0 0.0
    %1413 = vmatprep.subr.mxu0 0.0
    %1414 = vmatpush1.msra.mxu0 0.0
    %1415 = vmatprep.subr.mxu0 0.0
    %1416 = vmatpush1.msra.mxu0 0.0
    %1417 = vmatprep.subr.mxu0 0.0
    %1418 = vmatpush1.msra.mxu0 0.0
    %1419 = vmatprep.subr.mxu0 0.0
    %1420 = vmatpush1.msra.mxu0 0.0
    %1421 = vmatprep.subr.mxu0 0.0
    %1422 = vmatpush1.msra.mxu0 0.0
    %1423 = vmatprep.subr.mxu0 0.0
    %1424 = vmatpush1.msra.mxu0 0.0
    %1425 = vmatprep.subr.mxu0 0.0
    %1426 = vmatpush1.msra.mxu0 0.0
    %1427 = vmatprep.subr.mxu0 0.0
    %1428 = vmatpush1.msra.mxu0 0.0
    %1429 = vmatprep.subr.mxu0 0.0
    %1430 = vmatpush1.msra.mxu0 0.0
    %1431 = vmatprep.subr.mxu0 0.0
    %1432 = vmatpush1.msra.mxu0 0.0
    %1433 = vmatprep.subr.mxu0 0.0
    %1434 = vmatpush1.msra.mxu0 0.0
    %1435 = vmatprep.subr.mxu0 0.0
    %1436 = vmatpush1.msra.mxu0 0.0
    %1437 = vmatprep.subr.mxu0 0.0
    %1438 = vmatpush1.msra.mxu0 0.0
    %1439 = vmatprep.subr.mxu0 0.0
    %1440 = vmatpush1.msra.mxu0 0.0
    %1441 = vmatprep.subr.mxu0 0.0
    %1442 = vmatpush1.msra.mxu0 0.0
    %1443 = vmatprep.subr.mxu0 0.0
    %1444 = vmatpush1.msra.mxu0 0.0
    %1445 = vmatprep.subr.mxu0 0.0
    %1446 = vmatpush1.msra.mxu0 0.0
    %1447 = vmatprep.mubr.f32.mxu0 0.0
    %1448 = vmatmul.mubr.f32.gmra.mrb[0].mxu0 %v647
    %v1449 = vpop.f32.mrb[0].mxu0
    %v1450 = vadd.f32 0.0, %v1449
    %v1451 = vpop.f32.mrb[0].mxu0
    %1452 = vmatprep.mubr.f32.mxu0 0.0
    %1453 = vmatmul.mubr.f32.gmra.mrb[0].mxu0 %v650
    %v1454 = vpop.f32.mrb[0].mxu0
    %v1455 = vadd.f32 0.0, %v1454
    %v1456 = vpop.f32.mrb[0].mxu0
    %1457 = vdwg.mxu0
    %v1459 = vsel %vm492, %v1277, 0
    %v1462 = vsel %vm492, %v1279, 0
    %v1465 = vsel %vm492, %v1281, 0
    %v1468 = vsel %vm492, %v1283, 0
    %v1471 = vsel %vm492, %v1285, 0
    %v1474 = vsel %vm492, %v1287, 0
    %1476 = vmatprep.subr.mxu0 0.0
    %1477 = vmatpush1.msra.mxu0 %v747
    %1478 = vmatprep.subr.mxu0 0.0
    %1479 = vmatpush1.msra.mxu0 0.0
    %1480 = vmatprep.subr.mxu0 0.0
    %1481 = vmatpush1.msra.mxu0 0.0
    %1482 = vmatprep.subr.mxu0 0.0
    %1483 = vmatpush1.msra.mxu0 0.0
    %1484 = vmatprep.subr.mxu0 0.0
    %1485 = vmatpush1.msra.mxu0 0.0
    %1486 = vmatprep.subr.mxu0 0.0
    %1487 = vmatpush1.msra.mxu0 0.0
    %1488 = vmatprep.subr.mxu0 0.0
    %1489 = vmatpush1.msra.mxu0 0.0
    %1490 = vmatprep.subr.mxu0 0.0
    %1491 = vmatpush1.msra.mxu0 0.0
    %1492 = vmatprep.subr.mxu0 0.0
    %1493 = vmatpush1.msra.mxu0 0.0
    %1494 = vmatprep.subr.mxu0 0.0
    %1495 = vmatpush1.msra.mxu0 0.0
    %1496 = vmatprep.subr.mxu0 0.0
    %1497 = vmatpush1.msra.mxu0 0.0
    %1498 = vmatprep.subr.mxu0 0.0
    %1499 = vmatpush1.msra.mxu0 0.0
    %1500 = vmatprep.subr.mxu0 0.0
    %1501 = vmatpush1.msra.mxu0 0.0
    %1502 = vmatprep.subr.mxu0 0.0
    %1503 = vmatpush1.msra.mxu0 0.0
    %1504 = vmatprep.subr.mxu0 0.0
    %1505 = vmatpush1.msra.mxu0 0.0
    %1506 = vmatprep.subr.mxu0 0.0
    %1507 = vmatpush1.msra.mxu0 0.0
    %1508 = vmatprep.subr.mxu0 0.0
    %1509 = vmatpush1.msra.mxu0 0.0
    %1510 = vmatprep.subr.mxu0 0.0
    %1511 = vmatpush1.msra.mxu0 0.0
    %1512 = vmatprep.subr.mxu0 0.0
    %1513 = vmatpush1.msra.mxu0 0.0
    %1514 = vmatprep.subr.mxu0 0.0
    %1515 = vmatpush1.msra.mxu0 0.0
    %1516 = vmatprep.subr.mxu0 0.0
    %1517 = vmatpush1.msra.mxu0 0.0
    %1518 = vmatprep.subr.mxu0 0.0
    %1519 = vmatpush1.msra.mxu0 0.0
    %1520 = vmatprep.subr.mxu0 0.0
    %1521 = vmatpush1.msra.mxu0 0.0
    %1522 = vmatprep.subr.mxu0 0.0
    %1523 = vmatpush1.msra.mxu0 0.0
    %1524 = vmatprep.subr.mxu0 0.0
    %1525 = vmatpush1.msra.mxu0 0.0
    %1526 = vmatprep.subr.mxu0 0.0
    %1527 = vmatpush1.msra.mxu0 0.0
    %1528 = vmatprep.subr.mxu0 0.0
    %1529 = vmatpush1.msra.mxu0 0.0
    %1530 = vmatprep.subr.mxu0 0.0
    %1531 = vmatpush1.msra.mxu0 0.0
    %1532 = vmatprep.subr.mxu0 0.0
    %1533 = vmatpush1.msra.mxu0 0.0
    %1534 = vmatprep.subr.mxu0 0.0
    %1535 = vmatpush1.msra.mxu0 0.0
    %1536 = vmatprep.subr.mxu0 0.0
    %1537 = vmatpush1.msra.mxu0 0.0
    %1538 = vmatprep.subr.mxu0 0.0
    %1539 = vmatpush1.msra.mxu0 0.0
    %1540 = vmatprep.mubr.f32.mxu0 0.0
    %1541 = vmatmul.mubr.f32.gmra.mrb[0].mxu0 %v1459
    %v1542 = vpop.f32.mrb[0].mxu0
    %v1543 = vadd.f32 0.0, %v1542
    %v1544 = vpop.f32.mrb[0].mxu0
    %1545 = vmatprep.mubr.f32.mxu0 0.0
    %1546 = vmatmul.mubr.f32.gmra.mrb[0].mxu0 %v1462
    %v1547 = vpop.f32.mrb[0].mxu0
    %v1548 = vadd.f32 0.0, %v1547
    %v1549 = vpop.f32.mrb[0].mxu0
    %1550 = vmatprep.mubr.f32.mxu0 0.0
    %1551 = vmatmul.mubr.f32.gmra.mrb[0].mxu0 %v1465
    %v1552 = vpop.f32.mrb[0].mxu0
    %v1553 = vadd.f32 0.0, %v1552
    %v1554 = vpop.f32.mrb[0].mxu0
    %1555 = vmatprep.mubr.f32.mxu0 0.0
    %1556 = vmatmul.mubr.f32.gmra.mrb[0].mxu0 %v1468
    %v1557 = vpop.f32.mrb[0].mxu0
    %v1558 = vadd.f32 0.0, %v1557
    %v1559 = vpop.f32.mrb[0].mxu0
    %1560 = vmatprep.mubr.f32.mxu0 0.0
    %1561 = vmatmul.mubr.f32.gmra.mrb[0].mxu0 %v1471
    %v1562 = vpop.f32.mrb[0].mxu0
    %v1563 = vadd.f32 0.0, %v1562
    %v1564 = vpop.f32.mrb[0].mxu0
    %1565 = vmatprep.mubr.f32.mxu0 0.0
    %1566 = vmatmul.mubr.f32.gmra.mrb[0].mxu0 %v1474
    %v1567 = vpop.f32.mrb[0].mxu0
    %v1568 = vadd.f32 0.0, %v1567
    %v1569 = vpop.f32.mrb[0].mxu0
    %1570 = vdwg.mxu0
    %v1571 = vmul.f32 %v1355, %v1543
    %v1572 = vmul.f32 %v1360, %v1548
    %v1573 = vmul.f32 %v1365, %v1553
    %v1574 = vmul.f32 %v1370, %v1558
    %v1575 = vmul.f32 %v1375, %v1563
    %v1576 = vmul.f32 %v1380, %v1568
    %1577 = vmatprep.subr.mxu0 0.0
    %1578 = vmatpush1.msra.mxu0 %v1571
    %1579 = vmatprep.subr.mxu0 0.0
    %1580 = vmatpush1.msra.mxu0 %v1572
    %1581 = vmatprep.subr.mxu0 0.0
    %1582 = vmatpush1.msra.mxu0 %v1573
    %1583 = vmatprep.subr.mxu0 0.0
    %1584 = vmatpush1.msra.mxu0 %v1574
    %1585 = vmatprep.subr.mxu0 0.0
    %1586 = vmatpush1.msra.mxu0 %v1575
    %1587 = vmatprep.subr.mxu0 0.0
    %1588 = vmatpush1.msra.mxu0 %v1576
    %1589 = vmatprep.subr.mxu0 0.0
    %1590 = vmatpush1.msra.mxu0 0.0
    %1591 = vmatprep.subr.mxu0 0.0
    %1592 = vmatpush1.msra.mxu0 0.0
    %1593 = vmatprep.subr.mxu0 0.0
    %1594 = vmatpush1.msra.mxu0 0.0
    %1595 = vmatprep.subr.mxu0 0.0
    %1596 = vmatpush1.msra.mxu0 0.0
    %1597 = vmatprep.subr.mxu0 0.0
    %1598 = vmatpush1.msra.mxu0 0.0
    %1599 = vmatprep.subr.mxu0 0.0
    %1600 = vmatpush1.msra.mxu0 0.0
    %1601 = vmatprep.subr.mxu0 0.0
    %1602 = vmatpush1.msra.mxu0 0.0
    %1603 = vmatprep.subr.mxu0 0.0
    %1604 = vmatpush1.msra.mxu0 0.0
    %1605 = vmatprep.subr.mxu0 0.0
    %1606 = vmatpush1.msra.mxu0 0.0
    %1607 = vmatprep.subr.mxu0 0.0
    %1608 = vmatpush1.msra.mxu0 0.0
    %1609 = vmatprep.subr.mxu0 0.0
    %1610 = vmatpush1.msra.mxu0 0.0
    %1611 = vmatprep.subr.mxu0 0.0
    %1612 = vmatpush1.msra.mxu0 0.0
    %1613 = vmatprep.subr.mxu0 0.0
    %1614 = vmatpush1.msra.mxu0 0.0
    %1615 = vmatprep.subr.mxu0 0.0
    %1616 = vmatpush1.msra.mxu0 0.0
    %1617 = vmatprep.subr.mxu0 0.0
    %1618 = vmatpush1.msra.mxu0 0.0
    %1619 = vmatprep.subr.mxu0 0.0
    %1620 = vmatpush1.msra.mxu0 0.0
    %1621 = vmatprep.subr.mxu0 0.0
    %1622 = vmatpush1.msra.mxu0 0.0
    %1623 = vmatprep.subr.mxu0 0.0
    %1624 = vmatpush1.msra.mxu0 0.0
    %1625 = vmatprep.subr.mxu0 0.0
    %1626 = vmatpush1.msra.mxu0 0.0
    %1627 = vmatprep.subr.mxu0 0.0
    %1628 = vmatpush1.msra.mxu0 0.0
    %1629 = vmatprep.subr.mxu0 0.0
    %1630 = vmatpush1.msra.mxu0 0.0
    %1631 = vmatprep.subr.mxu0 0.0
    %1632 = vmatpush1.msra.mxu0 0.0
    %1633 = vmatprep.subr.mxu0 0.0
    %1634 = vmatpush1.msra.mxu0 0.0
    %1635 = vmatprep.subr.mxu0 0.0
    %1636 = vmatpush1.msra.mxu0 0.0
    %1637 = vmatprep.subr.mxu0 0.0
    %1638 = vmatpush1.msra.mxu0 0.0
    %1639 = vmatprep.subr.mxu0 0.0
    %1640 = vmatpush1.msra.mxu0 0.0
    %1641 = vmatprep.mubr.f32.mxu0 0.0
    %1642 = vmatmul.mubr.f32.gmra.mrb[0].mxu0 %v647
    %v1643 = vpop.f32.mrb[0].mxu0
    %v1644 = vadd.f32 0.0, %v1643
    %v1645 = vpop.f32.mrb[0].mxu0
    %1646 = vmatprep.mubr.f32.mxu0 0.0
    %1647 = vmatmul.mubr.f32.gmra.mrb[0].mxu0 %v650
    %v1648 = vpop.f32.mrb[0].mxu0
    %v1649 = vadd.f32 0.0, %v1648
    %v1650 = vpop.f32.mrb[0].mxu0
    %1651 = vdwg.mxu0
    %v1653 = vsel %vm492, %v1450, 0
    %v1656 = vsel %vm492, %v1455, 0
    %1658 = vmatprep.subr.mxu0 0.0
    %1659 = vmatpush1.msra.mxu0 %v747
    %1660 = vmatprep.subr.mxu0 0.0
    %1661 = vmatpush1.msra.mxu0 0.0
    %1662 = vmatprep.subr.mxu0 0.0
    %1663 = vmatpush1.msra.mxu0 0.0
    %1664 = vmatprep.subr.mxu0 0.0
    %1665 = vmatpush1.msra.mxu0 0.0
    %1666 = vmatprep.subr.mxu0 0.0
    %1667 = vmatpush1.msra.mxu0 0.0
    %1668 = vmatprep.subr.mxu0 0.0
    %1669 = vmatpush1.msra.mxu0 0.0
    %1670 = vmatprep.subr.mxu0 0.0
    %1671 = vmatpush1.msra.mxu0 0.0
    %1672 = vmatprep.subr.mxu0 0.0
    %1673 = vmatpush1.msra.mxu0 0.0
    %1674 = vmatprep.subr.mxu0 0.0
    %1675 = vmatpush1.msra.mxu0 0.0
    %1676 = vmatprep.subr.mxu0 0.0
    %1677 = vmatpush1.msra.mxu0 0.0
    %1678 = vmatprep.subr.mxu0 0.0
    %1679 = vmatpush1.msra.mxu0 0.0
    %1680 = vmatprep.subr.mxu0 0.0
    %1681 = vmatpush1.msra.mxu0 0.0
    %1682 = vmatprep.subr.mxu0 0.0
    %1683 = vmatpush1.msra.mxu0 0.0
    %1684 = vmatprep.subr.mxu0 0.0
    %1685 = vmatpush1.msra.mxu0 0.0
    %1686 = vmatprep.subr.mxu0 0.0
    %1687 = vmatpush1.msra.mxu0 0.0
    %1688 = vmatprep.subr.mxu0 0.0
    %1689 = vmatpush1.msra.mxu0 0.0
    %1690 = vmatprep.subr.mxu0 0.0
    %1691 = vmatpush1.msra.mxu0 0.0
    %1692 = vmatprep.subr.mxu0 0.0
    %1693 = vmatpush1.msra.mxu0 0.0
    %1694 = vmatprep.subr.mxu0 0.0
    %1695 = vmatpush1.msra.mxu0 0.0
    %1696 = vmatprep.subr.mxu0 0.0
    %1697 = vmatpush1.msra.mxu0 0.0
    %1698 = vmatprep.subr.mxu0 0.0
    %1699 = vmatpush1.msra.mxu0 0.0
    %1700 = vmatprep.subr.mxu0 0.0
    %1701 = vmatpush1.msra.mxu0 0.0
    %1702 = vmatprep.subr.mxu0 0.0
    %1703 = vmatpush1.msra.mxu0 0.0
    %1704 = vmatprep.subr.mxu0 0.0
    %1705 = vmatpush1.msra.mxu0 0.0
    %1706 = vmatprep.subr.mxu0 0.0
    %1707 = vmatpush1.msra.mxu0 0.0
    %1708 = vmatprep.subr.mxu0 0.0
    %1709 = vmatpush1.msra.mxu0 0.0
    %1710 = vmatprep.subr.mxu0 0.0
    %1711 = vmatpush1.msra.mxu0 0.0
    %1712 = vmatprep.subr.mxu0 0.0
    %1713 = vmatpush1.msra.mxu0 0.0
    %1714 = vmatprep.subr.mxu0 0.0
    %1715 = vmatpush1.msra.mxu0 0.0
    %1716 = vmatprep.subr.mxu0 0.0
    %1717 = vmatpush1.msra.mxu0 0.0
    %1718 = vmatprep.subr.mxu0 0.0
    %1719 = vmatpush1.msra.mxu0 0.0
    %1720 = vmatprep.subr.mxu0 0.0
    %1721 = vmatpush1.msra.mxu0 0.0
    %1722 = vmatprep.mubr.f32.mxu0 0.0
    %1723 = vmatmul.mubr.f32.gmra.mrb[0].mxu0 %v1653
    %v1724 = vpop.f32.mrb[0].mxu0
    %v1725 = vadd.f32 1e-16, %v1724
    %v1726 = vpop.f32.mrb[0].mxu0
    %1727 = vmatprep.mubr.f32.mxu0 0.0
    %1728 = vmatmul.mubr.f32.gmra.mrb[0].mxu0 %v1656
    %v1729 = vpop.f32.mrb[0].mxu0
    %v1730 = vadd.f32 1e-16, %v1729
    %v1731 = vpop.f32.mrb[0].mxu0
    %1732 = vdwg.mxu0
    %v1733 = vrcp.pop %v1725
    %v1734 = vrcp.pop %v1730
    %v1735 = vmul.f32 %v1644, %v1733
    %v1736 = vmul.f32 %v1649, %v1734
    %v1737 = vld [vmem:[%s1 + $0x168] sm:$0x1]
    %v1738 = vlaneseq
    %v1739 = vshrl.u32 %v1738, 7
    %v1740 = vsub.s32 0, %v1739
    %v1741 = vrot.slane %v1737, %v1740
    %v1742 = vadd.f32 %v1735, %v1741
    %v1743 = vadd.f32 %v1736, %v1741
    %v1744 = vmax.f32 %v1742, 0.0
    %v1745 = vmax.f32 %v1743, 0.0
    %v1746 = vld [vmem:[%s1 + $0x60] sm:$0xff]
    %v1747 = vld [vmem:[%s1 + $0x68] sm:$0xff]
    %v1748 = vld [vmem:[%s1 + $0x70] sm:$0xff]
    %v1749 = vld [vmem:[%s1 + $0x78] sm:$0xff]
    %v1751 = vsel %vm110, %v1744, 0
    %v1754 = vsel %vm110, %v1745, 0
    %1756 = vmatprep.subr.mxu0 0.0
    %1757 = vmatpush1.msra.mxu0 %v1746
    %1758 = vmatprep.subr.mxu0 0.0
    %1759 = vmatpush1.msra.mxu0 %v1747
    %1760 = vmatprep.subr.mxu0 0.0
    %1761 = vmatpush1.msra.mxu0 %v1748
    %1762 = vmatprep.subr.mxu0 0.0
    %1763 = vmatpush1.msra.mxu0 %v1749
    %1764 = vmatprep.subr.mxu0 0.0
    %1765 = vmatpush1.msra.mxu0 0.0
    %1766 = vmatprep.subr.mxu0 0.0
    %1767 = vmatpush1.msra.mxu0 0.0
    %1768 = vmatprep.subr.mxu0 0.0
    %1769 = vmatpush1.msra.mxu0 0.0
    %1770 = vmatprep.subr.mxu0 0.0
    %1771 = vmatpush1.msra.mxu0 0.0
    %1772 = vmatprep.subr.mxu0 0.0
    %1773 = vmatpush1.msra.mxu0 0.0
    %1774 = vmatprep.subr.mxu0 0.0
    %1775 = vmatpush1.msra.mxu0 0.0
    %1776 = vmatprep.subr.mxu0 0.0
    %1777 = vmatpush1.msra.mxu0 0.0
    %1778 = vmatprep.subr.mxu0 0.0
    %1779 = vmatpush1.msra.mxu0 0.0
    %1780 = vmatprep.subr.mxu0 0.0
    %1781 = vmatpush1.msra.mxu0 0.0
    %1782 = vmatprep.subr.mxu0 0.0
    %1783 = vmatpush1.msra.mxu0 0.0
    %1784 = vmatprep.subr.mxu0 0.0
    %1785 = vmatpush1.msra.mxu0 0.0
    %1786 = vmatprep.subr.mxu0 0.0
    %1787 = vmatpush1.msra.mxu0 0.0
    %1788 = vmatprep.subr.mxu0 0.0
    %1789 = vmatpush1.msra.mxu0 0.0
    %1790 = vmatprep.subr.mxu0 0.0
    %1791 = vmatpush1.msra.mxu0 0.0
    %1792 = vmatprep.subr.mxu0 0.0
    %1793 = vmatpush1.msra.mxu0 0.0
    %1794 = vmatprep.subr.mxu0 0.0
    %1795 = vmatpush1.msra.mxu0 0.0
    %1796 = vmatprep.subr.mxu0 0.0
    %1797 = vmatpush1.msra.mxu0 0.0
    %1798 = vmatprep.subr.mxu0 0.0
    %1799 = vmatpush1.msra.mxu0 0.0
    %1800 = vmatprep.subr.mxu0 0.0
    %1801 = vmatpush1.msra.mxu0 0.0
    %1802 = vmatprep.subr.mxu0 0.0
    %1803 = vmatpush1.msra.mxu0 0.0
    %1804 = vmatprep.subr.mxu0 0.0
    %1805 = vmatpush1.msra.mxu0 0.0
    %1806 = vmatprep.subr.mxu0 0.0
    %1807 = vmatpush1.msra.mxu0 0.0
    %1808 = vmatprep.subr.mxu0 0.0
    %1809 = vmatpush1.msra.mxu0 0.0
    %1810 = vmatprep.subr.mxu0 0.0
    %1811 = vmatpush1.msra.mxu0 0.0
    %1812 = vmatprep.subr.mxu0 0.0
    %1813 = vmatpush1.msra.mxu0 0.0
    %1814 = vmatprep.subr.mxu0 0.0
    %1815 = vmatpush1.msra.mxu0 0.0
    %1816 = vmatprep.subr.mxu0 0.0
    %1817 = vmatpush1.msra.mxu0 0.0
    %1818 = vmatprep.subr.mxu0 0.0
    %1819 = vmatpush1.msra.mxu0 0.0
    %1820 = vmatprep.mubr.f32.mxu0 0.0
    %1821 = vmatmul.mubr.f32.gmra.mrb[0].mxu0 %v1751
    %v1822 = vpop.f32.mrb[0].mxu0
    %v1823 = vadd.f32 0.0, %v1822
    %v1824 = vpop.f32.mrb[0].mxu0
    %1825 = vmatprep.mubr.f32.mxu0 0.0
    %1826 = vmatmul.mubr.f32.gmra.mrb[0].mxu0 %v1754
    %v1827 = vpop.f32.mrb[0].mxu0
    %v1828 = vadd.f32 0.0, %v1827
    %v1829 = vpop.f32.mrb[0].mxu0
    %1830 = vdwg.mxu0
    %v1831 = vld [vmem:[%s1 + $0x176] sm:$0x1]
    %v1832 = vlaneseq
    %v1833 = vshrl.u32 %v1832, 7
    %v1834 = vsub.s32 0, %v1833
    %v1835 = vrot.slane %v1831, %v1834
    %1837 = vrot.lane.b32.xlu0 %v1835, 1
    %v1838 = vpop.permute.xlu0 %1837
    %v1840 = vadd.f32 %v1823, %v1838
    %v1841 = vadd.f32 %v1828, %v1838
    %1844 = vrot.lane.b32.xlu0 %v1823, 1
    %v1845 = vpop.permute.xlu0 %1844
    %1846 = vrot.lane.b32.xlu0 %v1828, 1
    %v1847 = vpop.permute.xlu0 %1846
    %1848 = vrot.lane.b32.xlu0 %v1823, 127
    %v1849 = vpop.permute.xlu0 %1848
    %1850 = vrot.lane.b32.xlu0 %v1828, 127
    %v1851 = vpop.permute.xlu0 %1850
    %1852 = vrot.lane.b32.xlu0 %v1845, 127
    %v1853 = vpop.permute.xlu0 %1852
    %1854 = vrot.lane.b32.xlu0 %v1847, 127
    %v1855 = vpop.permute.xlu0 %1854
    %1860 = vmatprep.subr.mxu0 0.0
    %1861 = vmatpush1.msra.mxu0 %v1849
    %1862 = vmatprep.subr.mxu0 0.0
    %1863 = vmatpush1.msra.mxu0 %v1851
    %1864 = vmatprep.subr.mxu0 0.0
    %1865 = vmatpush1.msra.mxu0 %v1853
    %1866 = vmatprep.subr.mxu0 0.0
    %1867 = vmatpush1.msra.mxu0 %v1855
    %1868 = vmatprep.subr.mxu0 0.0
    %1869 = vmatpush1.msra.mxu0 0.0
    %1870 = vmatprep.subr.mxu0 0.0
    %1871 = vmatpush1.msra.mxu0 0.0
    %1872 = vmatprep.subr.mxu0 0.0
    %1873 = vmatpush1.msra.mxu0 0.0
    %1874 = vmatprep.subr.mxu0 0.0
    %1875 = vmatpush1.msra.mxu0 0.0
    %1876 = vmatprep.subr.mxu0 0.0
    %1877 = vmatpush1.msra.mxu0 0.0
    %1878 = vmatprep.subr.mxu0 0.0
    %1879 = vmatpush1.msra.mxu0 0.0
    %1880 = vmatprep.subr.mxu0 0.0
    %1881 = vmatpush1.msra.mxu0 0.0
    %1882 = vmatprep.subr.mxu0 0.0
    %1883 = vmatpush1.msra.mxu0 0.0
    %1884 = vmatprep.subr.mxu0 0.0
    %1885 = vmatpush1.msra.mxu0 0.0
    %1886 = vmatprep.subr.mxu0 0.0
    %1887 = vmatpush1.msra.mxu0 0.0
    %1888 = vmatprep.subr.mxu0 0.0
    %1889 = vmatpush1.msra.mxu0 0.0
    %1890 = vmatprep.subr.mxu0 0.0
    %1891 = vmatpush1.msra.mxu0 0.0
    %1892 = vmatprep.subr.mxu0 0.0
    %1893 = vmatpush1.msra.mxu0 0.0
    %1894 = vmatprep.subr.mxu0 0.0
    %1895 = vmatpush1.msra.mxu0 0.0
    %1896 = vmatprep.subr.mxu0 0.0
    %1897 = vmatpush1.msra.mxu0 0.0
    %1898 = vmatprep.subr.mxu0 0.0
    %1899 = vmatpush1.msra.mxu0 0.0
    %1900 = vmatprep.subr.mxu0 0.0
    %1901 = vmatpush1.msra.mxu0 0.0
    %1902 = vmatprep.subr.mxu0 0.0
    %1903 = vmatpush1.msra.mxu0 0.0
    %1904 = vmatprep.subr.mxu0 0.0
    %1905 = vmatpush1.msra.mxu0 0.0
    %1906 = vmatprep.subr.mxu0 0.0
    %1907 = vmatpush1.msra.mxu0 0.0
    %1908 = vmatprep.subr.mxu0 0.0
    %1909 = vmatpush1.msra.mxu0 0.0
    %1910 = vmatprep.subr.mxu0 0.0
    %1911 = vmatpush1.msra.mxu0 0.0
    %1912 = vmatprep.subr.mxu0 0.0
    %1913 = vmatpush1.msra.mxu0 0.0
    %1914 = vmatprep.subr.mxu0 0.0
    %1915 = vmatpush1.msra.mxu0 0.0
    %1916 = vmatprep.subr.mxu0 0.0
    %1917 = vmatpush1.msra.mxu0 0.0
    %1918 = vmatprep.subr.mxu0 0.0
    %1919 = vmatpush1.msra.mxu0 0.0
    %1920 = vmatprep.subr.mxu0 0.0
    %1921 = vmatpush1.msra.mxu0 0.0
    %1922 = vmatprep.subr.mxu0 0.0
    %1923 = vmatpush1.msra.mxu0 0.0
    %1924 = vmatprep.mubr.f32.mxu0 0.0
    %1925 = vmatmul.mubr.f32.gmra.mrb[0].mxu0 %v362
    %v1926 = vpop.f32.mrb[0].mxu0
    %v1927 = vadd.f32 %v1835, %v1926
    %v1928 = vpop.f32.mrb[0].mxu0
    %1929 = vmatprep.mubr.f32.mxu0 0.0
    %1930 = vmatmul.mubr.f32.gmra.mrb[0].mxu0 %v365
    %v1931 = vpop.f32.mrb[0].mxu0
    %v1932 = vadd.f32 %v1835, %v1931
    %v1933 = vpop.f32.mrb[0].mxu0
    %1934 = vmatprep.mubr.f32.mxu0 0.0
    %1935 = vmatmul.mubr.f32.gmra.mrb[0].mxu0 %v368
    %v1936 = vpop.f32.mrb[0].mxu0
    %v1937 = vadd.f32 %v1835, %v1936
    %v1938 = vpop.f32.mrb[0].mxu0
    %1939 = vmatprep.mubr.f32.mxu0 0.0
    %1940 = vmatmul.mubr.f32.gmra.mrb[0].mxu0 %v371
    %v1941 = vpop.f32.mrb[0].mxu0
    %v1942 = vadd.f32 %v1835, %v1941
    %v1943 = vpop.f32.mrb[0].mxu0
    %1944 = vmatprep.mubr.f32.mxu0 0.0
    %1945 = vmatmul.mubr.f32.gmra.mrb[0].mxu0 %v374
    %v1946 = vpop.f32.mrb[0].mxu0
    %v1947 = vadd.f32 %v1835, %v1946
    %v1948 = vpop.f32.mrb[0].mxu0
    %1949 = vmatprep.mubr.f32.mxu0 0.0
    %1950 = vmatmul.mubr.f32.gmra.mrb[0].mxu0 %v377
    %v1951 = vpop.f32.mrb[0].mxu0
    %v1952 = vadd.f32 %v1835, %v1951
    %v1953 = vpop.f32.mrb[0].mxu0
    %1954 = vdwg.mxu0
    %v1955 = vlaneseq
    %v1956 = vshrl.u32 %v1955, 7
    %v1957 = vadd.s32 %v1956, 8
    %v1958 = vadd.s32 %v1956, 16
    %v1959 = vadd.s32 %v1956, 24
    %v1960 = vadd.s32 %v1956, 32
    %v1961 = vadd.s32 %v1956, 40
    %vm1962 = vcmp.ge.s32.totalorder %v1956, 32
    %vm1963 = vcmp.ge.s32.totalorder %v1957, 32
    %vm1964 = vcmp.ge.s32.totalorder %v1958, 32
    %vm1965 = vcmp.ge.s32.totalorder %v1959, 32
    %vm1966 = vcmp.ge.s32.totalorder %v1960, 32
    %vm1967 = vcmp.ge.s32.totalorder %v1961, 32
    %v1968 = vsub.f32 0.0, %v1927
    %v1969 = vsub.f32 0.0, %v1932
    %v1970 = vsub.f32 0.0, %v1937
    %v1971 = vsub.f32 0.0, %v1942
    %v1972 = vsub.f32 0.0, %v1947
    %v1973 = vsub.f32 0.0, %v1952
    %v1974 = vmul.f32 %v1968, 1.442695
    %v1975 = vpow.pop %v1974
    %v1976 = vmul.f32 %v1969, 1.442695
    %v1977 = vpow.pop %v1976
    %v1978 = vmul.f32 %v1970, 1.442695
    %v1979 = vpow.pop %v1978
    %v1980 = vmul.f32 %v1971, 1.442695
    %v1981 = vpow.pop %v1980
    %v1982 = vmul.f32 %v1972, 1.442695
    %v1983 = vpow.pop %v1982
    %v1984 = vmul.f32 %v1973, 1.442695
    %v1985 = vpow.pop %v1984
    %v1986 = vadd.f32 %v1975, 1.0
    %v1987 = vadd.f32 %v1977, 1.0
    %v1988 = vadd.f32 %v1979, 1.0
    %v1989 = vadd.f32 %v1981, 1.0
    %v1990 = vadd.f32 %v1983, 1.0
    %v1991 = vadd.f32 %v1985, 1.0
    %v1992 = vrcp.pop %v1986
    %v1993 = vmul.f32 1.0, %v1992
    %v1994 = vrcp.pop %v1987
    %v1995 = vmul.f32 1.0, %v1994
    %v1996 = vrcp.pop %v1988
    %v1997 = vmul.f32 1.0, %v1996
    %v1998 = vrcp.pop %v1989
    %v1999 = vmul.f32 1.0, %v1998
    %v2000 = vrcp.pop %v1990
    %v2001 = vmul.f32 1.0, %v2000
    %v2002 = vrcp.pop %v1991
    %v2003 = vmul.f32 1.0, %v2002
    %v2004 = vsub.f32 1.0, %v1993
    %v2005 = vsub.f32 1.0, %v1995
    %v2006 = vsub.f32 1.0, %v1997
    %v2007 = vsub.f32 1.0, %v1999
    %v2008 = vsub.f32 1.0, %v2001
    %v2009 = vsub.f32 1.0, %v2003
    %v2010 = vsel %vm1962, 1.0, %v1993
    %v2011 = vsel %vm1963, 1.0, %v1995
    %v2012 = vsel %vm1964, 1.0, %v1997
    %v2013 = vsel %vm1965, 1.0, %v1999
    %v2014 = vsel %vm1966, 1.0, %v2001
    %v2015 = vsel %vm1967, 1.0, %v2003
    %v2016 = vsel %vm1962, 1.0, %v2004
    %v2017 = vsel %vm1963, 1.0, %v2005
    %v2018 = vsel %vm1964, 1.0, %v2006
    %v2019 = vsel %vm1965, 1.0, %v2007
    %v2020 = vsel %vm1966, 1.0, %v2008
    %v2021 = vsel %vm1967, 1.0, %v2009
    %v2022 = vsub.f32 0.0, %v1840
    %v2023 = vsub.f32 0.0, %v1841
    %v2024 = vmul.f32 %v2022, 1.442695
    %v2025 = vpow.pop %v2024
    %v2026 = vmul.f32 %v2023, 1.442695
    %v2027 = vpow.pop %v2026
    %v2028 = vadd.f32 %v2025, 1.0
    %v2029 = vadd.f32 %v2027, 1.0
    %v2030 = vrcp.pop %v2028
    %v2031 = vmul.f32 1.0, %v2030
    %v2032 = vrcp.pop %v2029
    %v2033 = vmul.f32 1.0, %v2032
    %v2034 = vsub.f32 1.0, %v2031
    %v2035 = vsub.f32 1.0, %v2033
    %vm2036 = vcmp.gt.f32.partialorder %v32, 0.0
    %vm2037 = vcmp.gt.f32.partialorder %v33, 0.0
    %2040 = vrot.lane.b32.xlu0 %v2031, 126
    %v2041 = vpop.permute.xlu0 %2040
    %2042 = vrot.lane.b32.xlu0 %v2033, 126
    %v2043 = vpop.permute.xlu0 %2042
    %v2046 = vsel %vm2036, 1.0, %v2041
    %v2047 = vsel %vm2037, 1.0, %v2043
    %2050 = vrot.lane.b32.xlu0 %v2034, 126
    %v2051 = vpop.permute.xlu0 %2050
    %2052 = vrot.lane.b32.xlu0 %v2035, 126
    %v2053 = vpop.permute.xlu0 %2052
    %v2056 = vsel %vm2036, 0.0, %v2051
    %v2057 = vsel %vm2037, 0.0, %v2053
    %2059 = vset.pattern.permute.xlu0 0
    %2060 = vperm.xlu0 %2059, %v2056
    %v2061 = vpop.permute.xlu0 %2060
    %2064 = vset.pattern.permute.xlu0 0
    %2065 = vperm.xlu0 %2064, %v2057
    %v2066 = vpop.permute.xlu0 %2065
    %v2068 = vmul.f32 %v2061, %v1744
    %v2069 = vmul.f32 %v2066, %v1745
    %2071 = vset.pattern.permute.xlu0 0
    %2072 = vperm.xlu0 %2071, %v2046
    %v2073 = vpop.permute.xlu0 %2072
    %2076 = vset.pattern.permute.xlu0 0
    %2077 = vperm.xlu0 %2076, %v2047
    %v2078 = vpop.permute.xlu0 %2077
    %v2080 = vmul.f32 %v2073, %v1744
    %v2081 = vmul.f32 %v2078, %v1745
    %2084 = vrot.lane.b32.xlu0 %v2080, 32
    %v2085 = vpop.permute.xlu0 %2084
    %2086 = vrot.lane.b32.xlu0 %v2081, 32
    %v2087 = vpop.permute.xlu0 %2086
    %v2090 = vsel %vm110, %v2068, %v2085
    %v2091 = vsel %vm110, %v2069, %v2087
    %v2092 = vld [vmem:[%s1 + $0x169] sm:$0x1]
    %v2093 = vlaneseq
    %v2094 = vshrl.u32 %v2093, 7
    %v2095 = vsub.s32 0, %v2094
    %v2096 = vrot.slane %v2092, %v2095
    %v2097 = vmul.f32 %v2090, %v2096
    %v2098 = vmul.f32 %v2091, %v2096
    %v2099 = vld [vmem:[%s1 + $0x16a] sm:$0x1]
    %v2100 = vlaneseq
    %v2101 = vshrl.u32 %v2100, 7
    %v2102 = vsub.s32 0, %v2101
    %v2103 = vrot.slane %v2099, %v2102
    %v2104 = vadd.f32 %v2097, %v2103
    %v2105 = vadd.f32 %v2098, %v2103
    %v2106 = vld [vmem:[%s1 + $0x80] sm:$0xff]
    %v2107 = vld [vmem:[%s1 + $0x88] sm:$0xff]
    %v2108 = vld [vmem:[%s1 + $0x90] sm:$0xff]
    %v2109 = vld [vmem:[%s1 + $0x98] sm:$0xff]
    %v2110 = vld [vmem:[%s1 + $0xa0] sm:$0xff]
    %v2111 = vld [vmem:[%s1 + $0xa8] sm:$0xff]
    %v2112 = vld [vmem:[%s1 + $0xb0] sm:$0xff]
    %v2113 = vld [vmem:[%s1 + $0xb8] sm:$0xff]
    %vm2114 = vcmask 523264
    %v2116 = vsel %vm2114, %v2104, 0
    %v2119 = vsel %vm2114, %v2105, 0
    %2121 = vmatprep.subr.mxu0 0.0
    %2122 = vmatpush1.msra.mxu0 %v2106
    %2123 = vmatprep.subr.mxu0 0.0
    %2124 = vmatpush1.msra.mxu0 %v2107
    %2125 = vmatprep.subr.mxu0 0.0
    %2126 = vmatpush1.msra.mxu0 %v2108
    %2127 = vmatprep.subr.mxu0 0.0
    %2128 = vmatpush1.msra.mxu0 %v2109
    %2129 = vmatprep.subr.mxu0 0.0
    %2130 = vmatpush1.msra.mxu0 %v2110
    %2131 = vmatprep.subr.mxu0 0.0
    %2132 = vmatpush1.msra.mxu0 %v2111
    %2133 = vmatprep.subr.mxu0 0.0
    %2134 = vmatpush1.msra.mxu0 %v2112
    %2135 = vmatprep.subr.mxu0 0.0
    %2136 = vmatpush1.msra.mxu0 %v2113
    %2137 = vmatprep.subr.mxu0 0.0
    %2138 = vmatpush1.msra.mxu0 0.0
    %2139 = vmatprep.subr.mxu0 0.0
    %2140 = vmatpush1.msra.mxu0 0.0
    %2141 = vmatprep.subr.mxu0 0.0
    %2142 = vmatpush1.msra.mxu0 0.0
    %2143 = vmatprep.subr.mxu0 0.0
    %2144 = vmatpush1.msra.mxu0 0.0
    %2145 = vmatprep.subr.mxu0 0.0
    %2146 = vmatpush1.msra.mxu0 0.0
    %2147 = vmatprep.subr.mxu0 0.0
    %2148 = vmatpush1.msra.mxu0 0.0
    %2149 = vmatprep.subr.mxu0 0.0
    %2150 = vmatpush1.msra.mxu0 0.0
    %2151 = vmatprep.subr.mxu0 0.0
    %2152 = vmatpush1.msra.mxu0 0.0
    %2153 = vmatprep.subr.mxu0 0.0
    %2154 = vmatpush1.msra.mxu0 0.0
    %2155 = vmatprep.subr.mxu0 0.0
    %2156 = vmatpush1.msra.mxu0 0.0
    %2157 = vmatprep.subr.mxu0 0.0
    %2158 = vmatpush1.msra.mxu0 0.0
    %2159 = vmatprep.subr.mxu0 0.0
    %2160 = vmatpush1.msra.mxu0 0.0
    %2161 = vmatprep.subr.mxu0 0.0
    %2162 = vmatpush1.msra.mxu0 0.0
    %2163 = vmatprep.subr.mxu0 0.0
    %2164 = vmatpush1.msra.mxu0 0.0
    %2165 = vmatprep.subr.mxu0 0.0
    %2166 = vmatpush1.msra.mxu0 0.0
    %2167 = vmatprep.subr.mxu0 0.0
    %2168 = vmatpush1.msra.mxu0 0.0
    %2169 = vmatprep.subr.mxu0 0.0
    %2170 = vmatpush1.msra.mxu0 0.0
    %2171 = vmatprep.subr.mxu0 0.0
    %2172 = vmatpush1.msra.mxu0 0.0
    %2173 = vmatprep.subr.mxu0 0.0
    %2174 = vmatpush1.msra.mxu0 0.0
    %2175 = vmatprep.subr.mxu0 0.0
    %2176 = vmatpush1.msra.mxu0 0.0
    %2177 = vmatprep.subr.mxu0 0.0
    %2178 = vmatpush1.msra.mxu0 0.0
    %2179 = vmatprep.subr.mxu0 0.0
    %2180 = vmatpush1.msra.mxu0 0.0
    %2181 = vmatprep.subr.mxu0 0.0
    %2182 = vmatpush1.msra.mxu0 0.0
    %2183 = vmatprep.subr.mxu0 0.0
    %2184 = vmatpush1.msra.mxu0 0.0
    %2185 = vmatprep.mubr.f32.mxu0 0.0
    %2186 = vmatmul.mubr.f32.gmra.mrb[0].mxu0 %v2116
    %v2187 = vpop.f32.mrb[0].mxu0
    %v2188 = vadd.f32 0.0, %v2187
    %v2189 = vpop.f32.mrb[0].mxu0
    %2190 = vmatprep.mubr.f32.mxu0 0.0
    %2191 = vmatmul.mubr.f32.gmra.mrb[0].mxu0 %v2119
    %v2192 = vpop.f32.mrb[0].mxu0
    %v2193 = vadd.f32 0.0, %v2192
    %v2194 = vpop.f32.mrb[0].mxu0
    %2195 = vdwg.mxu0
    %2202 = vrot.lane.b32.xlu0 %v2010, 1
    %v2203 = vpop.permute.xlu0 %2202
    %2204 = vrot.lane.b32.xlu0 %v2011, 1
    %v2205 = vpop.permute.xlu0 %2204
    %2206 = vrot.lane.b32.xlu0 %v2012, 1
    %v2207 = vpop.permute.xlu0 %2206
    %2208 = vrot.lane.b32.xlu0 %v2013, 1
    %v2209 = vpop.permute.xlu0 %2208
    %2210 = vrot.lane.b32.xlu0 %v2014, 1
    %v2211 = vpop.permute.xlu0 %2210
    %2212 = vrot.lane.b32.xlu0 %v2015, 1
    %v2213 = vpop.permute.xlu0 %2212
    %vm2220 = vcmask 7168
    %v2221 = vsel %vm2220, %v2016, %v2203
    %v2222 = vsel %vm2220, %v2017, %v2205
    %v2223 = vsel %vm2220, %v2018, %v2207
    %v2224 = vsel %vm2220, %v2019, %v2209
    %v2225 = vsel %vm2220, %v2020, %v2211
    %v2226 = vsel %vm2220, %v2021, %v2213
    %v2228 = vsel %vm645, %v26, 0
    %v2231 = vsel %vm645, %v27, 0
    %2233 = vmatprep.subr.mxu0 0.0
    %2234 = vmatpush1.msra.mxu0 %v2221
    %2235 = vmatprep.subr.mxu0 0.0
    %2236 = vmatpush1.msra.mxu0 %v2222
    %2237 = vmatprep.subr.mxu0 0.0
    %2238 = vmatpush1.msra.mxu0 %v2223
    %2239 = vmatprep.subr.mxu0 0.0
    %2240 = vmatpush1.msra.mxu0 %v2224
    %2241 = vmatprep.subr.mxu0 0.0
    %2242 = vmatpush1.msra.mxu0 %v2225
    %2243 = vmatprep.subr.mxu0 0.0
    %2244 = vmatpush1.msra.mxu0 %v2226
    %2245 = vmatprep.subr.mxu0 0.0
    %2246 = vmatpush1.msra.mxu0 0.0
    %2247 = vmatprep.subr.mxu0 0.0
    %2248 = vmatpush1.msra.mxu0 0.0
    %2249 = vmatprep.subr.mxu0 0.0
    %2250 = vmatpush1.msra.mxu0 0.0
    %2251 = vmatprep.subr.mxu0 0.0
    %2252 = vmatpush1.msra.mxu0 0.0
    %2253 = vmatprep.subr.mxu0 0.0
    %2254 = vmatpush1.msra.mxu0 0.0
    %2255 = vmatprep.subr.mxu0 0.0
    %2256 = vmatpush1.msra.mxu0 0.0
    %2257 = vmatprep.subr.mxu0 0.0
    %2258 = vmatpush1.msra.mxu0 0.0
    %2259 = vmatprep.subr.mxu0 0.0
    %2260 = vmatpush1.msra.mxu0 0.0
    %2261 = vmatprep.subr.mxu0 0.0
    %2262 = vmatpush1.msra.mxu0 0.0
    %2263 = vmatprep.subr.mxu0 0.0
    %2264 = vmatpush1.msra.mxu0 0.0
    %2265 = vmatprep.subr.mxu0 0.0
    %2266 = vmatpush1.msra.mxu0 0.0
    %2267 = vmatprep.subr.mxu0 0.0
    %2268 = vmatpush1.msra.mxu0 0.0
    %2269 = vmatprep.subr.mxu0 0.0
    %2270 = vmatpush1.msra.mxu0 0.0
    %2271 = vmatprep.subr.mxu0 0.0
    %2272 = vmatpush1.msra.mxu0 0.0
    %2273 = vmatprep.subr.mxu0 0.0
    %2274 = vmatpush1.msra.mxu0 0.0
    %2275 = vmatprep.subr.mxu0 0.0
    %2276 = vmatpush1.msra.mxu0 0.0
    %2277 = vmatprep.subr.mxu0 0.0
    %2278 = vmatpush1.msra.mxu0 0.0
    %2279 = vmatprep.subr.mxu0 0.0
    %2280 = vmatpush1.msra.mxu0 0.0
    %2281 = vmatprep.subr.mxu0 0.0
    %2282 = vmatpush1.msra.mxu0 0.0
    %2283 = vmatprep.subr.mxu0 0.0
    %2284 = vmatpush1.msra.mxu0 0.0
    %2285 = vmatprep.subr.mxu0 0.0
    %2286 = vmatpush1.msra.mxu0 0.0
    %2287 = vmatprep.subr.mxu0 0.0
    %2288 = vmatpush1.msra.mxu0 0.0
    %2289 = vmatprep.subr.mxu0 0.0
    %2290 = vmatpush1.msra.mxu0 0.0
    %2291 = vmatprep.subr.mxu0 0.0
    %2292 = vmatpush1.msra.mxu0 0.0
    %2293 = vmatprep.subr.mxu0 0.0
    %2294 = vmatpush1.msra.mxu0 0.0
    %2295 = vmatprep.subr.mxu0 0.0
    %2296 = vmatpush1.msra.mxu0 0.0
    %2297 = vmatprep.mubr.f32.mxu0 0.0
    %2298 = vmatmul.mubr.f32.gmra.mrb[0].mxu0 %v2228
    %v2299 = vpop.f32.mrb[0].mxu0
    %v2300 = vadd.f32 0.0, %v2299
    %v2301 = vpop.f32.mrb[0].mxu0
    %2302 = vmatprep.mubr.f32.mxu0 0.0
    %2303 = vmatmul.mubr.f32.gmra.mrb[0].mxu0 %v2231
    %v2304 = vpop.f32.mrb[0].mxu0
    %v2305 = vadd.f32 0.0, %v2304
    %v2306 = vpop.f32.mrb[0].mxu0
    %2307 = vdwg.mxu0
    %vm2308 = vcmp.gt.f32.partialorder %v2300, 0.0
    %vm2309 = vcmp.gt.f32.partialorder %v2305, 0.0
    %v2310 = vrsqrt.pop %v2300
    %v2311 = vrsqrt.pop %v2305
    %v2312 = vsel %vm2308, %v2310, 0.0
    %v2313 = vsel %vm2309, %v2311, 0.0
    %2315 = vset.pattern.permute.xlu0 0
    %2316 = vperm.xlu0 %2315, %v2312
    %v2317 = vpop.permute.xlu0 %2316
    %2320 = vset.pattern.permute.xlu0 0
    %2321 = vperm.xlu0 %2320, %v2313
    %v2322 = vpop.permute.xlu0 %2321
    %2324 = vset.pattern.permute.xlu0 1
    %2325 = vperm.xlu0 %2324, %v2312
    %v2326 = vpop.permute.xlu0 %2325
    %2328 = vset.pattern.permute.xlu0 1
    %2329 = vperm.xlu0 %2328, %v2313
    %v2330 = vpop.permute.xlu0 %2329
    %v2332 = vsel %vm110, %v2317, %v2326
    %v2333 = vsel %vm110, %v2322, %v2330
    %2335 = vset.pattern.permute.xlu0 0
    %2336 = vperm.xlu0 %2335, %v2016
    %v2337 = vpop.permute.xlu0 %2336
    %2340 = vset.pattern.permute.xlu0 0
    %2341 = vperm.xlu0 %2340, %v2017
    %v2342 = vpop.permute.xlu0 %2341
    %2345 = vset.pattern.permute.xlu0 0
    %2346 = vperm.xlu0 %2345, %v2018
    %v2347 = vpop.permute.xlu0 %2346
    %2350 = vset.pattern.permute.xlu0 0
    %2351 = vperm.xlu0 %2350, %v2019
    %v2352 = vpop.permute.xlu0 %2351
    %2355 = vset.pattern.permute.xlu0 0
    %2356 = vperm.xlu0 %2355, %v2020
    %v2357 = vpop.permute.xlu0 %2356
    %2360 = vset.pattern.permute.xlu0 0
    %2361 = vperm.xlu0 %2360, %v2021
    %v2362 = vpop.permute.xlu0 %2361
    %2364 = vset.pattern.permute.xlu0 0
    %2365 = vperm.xlu0 %2364, %v2010
    %v2366 = vpop.permute.xlu0 %2365
    %2368 = vset.pattern.permute.xlu0 0
    %2369 = vperm.xlu0 %2368, %v2011
    %v2370 = vpop.permute.xlu0 %2369
    %2372 = vset.pattern.permute.xlu0 0
    %2373 = vperm.xlu0 %2372, %v2012
    %v2374 = vpop.permute.xlu0 %2373
    %2376 = vset.pattern.permute.xlu0 0
    %2377 = vperm.xlu0 %2376, %v2013
    %v2378 = vpop.permute.xlu0 %2377
    %2380 = vset.pattern.permute.xlu0 0
    %2381 = vperm.xlu0 %2380, %v2014
    %v2382 = vpop.permute.xlu0 %2381
    %2384 = vset.pattern.permute.xlu0 0
    %2385 = vperm.xlu0 %2384, %v2015
    %v2386 = vpop.permute.xlu0 %2385
    %v2388 = vsel %vm110, %v2337, %v2366
    %v2389 = vsel %vm110, %v2342, %v2370
    %v2390 = vsel %vm110, %v2347, %v2374
    %v2391 = vsel %vm110, %v2352, %v2378
    %v2392 = vsel %vm110, %v2357, %v2382
    %v2393 = vsel %vm110, %v2362, %v2386
    %v2394 = vmul.f32 %v2332, %v2188
    %v2395 = vmul.f32 %v2333, %v2193
    %2396 = vmatprep.subr.mxu0 0.0
    %2397 = vmatpush1.msra.mxu0 %v2394
    %2398 = vmatprep.subr.mxu0 0.0
    %2399 = vmatpush1.msra.mxu0 %v2395
    %2400 = vmatprep.subr.mxu0 0.0
    %2401 = vmatpush1.msra.mxu0 0.0
    %2402 = vmatprep.subr.mxu0 0.0
    %2403 = vmatpush1.msra.mxu0 0.0
    %2404 = vmatprep.subr.mxu0 0.0
    %2405 = vmatpush1.msra.mxu0 0.0
    %2406 = vmatprep.subr.mxu0 0.0
    %2407 = vmatpush1.msra.mxu0 0.0
    %2408 = vmatprep.subr.mxu0 0.0
    %2409 = vmatpush1.msra.mxu0 0.0
    %2410 = vmatprep.subr.mxu0 0.0
    %2411 = vmatpush1.msra.mxu0 0.0
    %2412 = vmatprep.subr.mxu0 0.0
    %2413 = vmatpush1.msra.mxu0 0.0
    %2414 = vmatprep.subr.mxu0 0.0
    %2415 = vmatpush1.msra.mxu0 0.0
    %2416 = vmatprep.subr.mxu0 0.0
    %2417 = vmatpush1.msra.mxu0 0.0
    %2418 = vmatprep.subr.mxu0 0.0
    %2419 = vmatpush1.msra.mxu0 0.0
    %2420 = vmatprep.subr.mxu0 0.0
    %2421 = vmatpush1.msra.mxu0 0.0
    %2422 = vmatprep.subr.mxu0 0.0
    %2423 = vmatpush1.msra.mxu0 0.0
    %2424 = vmatprep.subr.mxu0 0.0
    %2425 = vmatpush1.msra.mxu0 0.0
    %2426 = vmatprep.subr.mxu0 0.0
    %2427 = vmatpush1.msra.mxu0 0.0
    %2428 = vmatprep.subr.mxu0 0.0
    %2429 = vmatpush1.msra.mxu0 0.0
    %2430 = vmatprep.subr.mxu0 0.0
    %2431 = vmatpush1.msra.mxu0 0.0
    %2432 = vmatprep.subr.mxu0 0.0
    %2433 = vmatpush1.msra.mxu0 0.0
    %2434 = vmatprep.subr.mxu0 0.0
    %2435 = vmatpush1.msra.mxu0 0.0
    %2436 = vmatprep.subr.mxu0 0.0
    %2437 = vmatpush1.msra.mxu0 0.0
    %2438 = vmatprep.subr.mxu0 0.0
    %2439 = vmatpush1.msra.mxu0 0.0
    %2440 = vmatprep.subr.mxu0 0.0
    %2441 = vmatpush1.msra.mxu0 0.0
    %2442 = vmatprep.subr.mxu0 0.0
    %2443 = vmatpush1.msra.mxu0 0.0
    %2444 = vmatprep.subr.mxu0 0.0
    %2445 = vmatpush1.msra.mxu0 0.0
    %2446 = vmatprep.subr.mxu0 0.0
    %2447 = vmatpush1.msra.mxu0 0.0
    %2448 = vmatprep.subr.mxu0 0.0
    %2449 = vmatpush1.msra.mxu0 0.0
    %2450 = vmatprep.subr.mxu0 0.0
    %2451 = vmatpush1.msra.mxu0 0.0
    %2452 = vmatprep.subr.mxu0 0.0
    %2453 = vmatpush1.msra.mxu0 0.0
    %2454 = vmatprep.subr.mxu0 0.0
    %2455 = vmatpush1.msra.mxu0 0.0
    %2456 = vmatprep.subr.mxu0 0.0
    %2457 = vmatpush1.msra.mxu0 0.0
    %2458 = vmatprep.subr.mxu0 0.0
    %2459 = vmatpush1.msra.mxu0 0.0
    %2460 = vmatprep.mubr.f32.mxu0 0.0
    %2461 = vmatmul.mubr.f32.gmra.mrb[0].mxu0 %v533
    %v2462 = vpop.f32.mrb[0].mxu0
    %v2463 = vadd.f32 0.0, %v2462
    %v2464 = vpop.f32.mrb[0].mxu0
    %2465 = vmatprep.mubr.f32.mxu0 0.0
    %2466 = vmatmul.mubr.f32.gmra.mrb[0].mxu0 %v536
    %v2467 = vpop.f32.mrb[0].mxu0
    %v2468 = vadd.f32 0.0, %v2467
    %v2469 = vpop.f32.mrb[0].mxu0
    %2470 = vmatprep.mubr.f32.mxu0 0.0
    %2471 = vmatmul.mubr.f32.gmra.mrb[0].mxu0 %v539
    %v2472 = vpop.f32.mrb[0].mxu0
    %v2473 = vadd.f32 0.0, %v2472
    %v2474 = vpop.f32.mrb[0].mxu0
    %2475 = vmatprep.mubr.f32.mxu0 0.0
    %2476 = vmatmul.mubr.f32.gmra.mrb[0].mxu0 %v542
    %v2477 = vpop.f32.mrb[0].mxu0
    %v2478 = vadd.f32 0.0, %v2477
    %v2479 = vpop.f32.mrb[0].mxu0
    %2480 = vmatprep.mubr.f32.mxu0 0.0
    %2481 = vmatmul.mubr.f32.gmra.mrb[0].mxu0 %v545
    %v2482 = vpop.f32.mrb[0].mxu0
    %v2483 = vadd.f32 0.0, %v2482
    %v2484 = vpop.f32.mrb[0].mxu0
    %2485 = vmatprep.mubr.f32.mxu0 0.0
    %2486 = vmatmul.mubr.f32.gmra.mrb[0].mxu0 %v548
    %v2487 = vpop.f32.mrb[0].mxu0
    %v2488 = vadd.f32 0.0, %v2487
    %v2489 = vpop.f32.mrb[0].mxu0
    %2490 = vdwg.mxu0
    %v2491 = vmul.f32 %v2388, %v2463
    %v2492 = vmul.f32 %v2389, %v2468
    %v2493 = vmul.f32 %v2390, %v2473
    %v2494 = vmul.f32 %v2391, %v2478
    %v2495 = vmul.f32 %v2392, %v2483
    %v2496 = vmul.f32 %v2393, %v2488
    %2497 = vmatprep.subr.mxu0 0.0
    %2498 = vmatpush1.msra.mxu0 %v2491
    %2499 = vmatprep.subr.mxu0 0.0
    %2500 = vmatpush1.msra.mxu0 %v2492
    %2501 = vmatprep.subr.mxu0 0.0
    %2502 = vmatpush1.msra.mxu0 %v2493
    %2503 = vmatprep.subr.mxu0 0.0
    %2504 = vmatpush1.msra.mxu0 %v2494
    %2505 = vmatprep.subr.mxu0 0.0
    %2506 = vmatpush1.msra.mxu0 %v2495
    %2507 = vmatprep.subr.mxu0 0.0
    %2508 = vmatpush1.msra.mxu0 %v2496
    %2509 = vmatprep.subr.mxu0 0.0
    %2510 = vmatpush1.msra.mxu0 0.0
    %2511 = vmatprep.subr.mxu0 0.0
    %2512 = vmatpush1.msra.mxu0 0.0
    %2513 = vmatprep.subr.mxu0 0.0
    %2514 = vmatpush1.msra.mxu0 0.0
    %2515 = vmatprep.subr.mxu0 0.0
    %2516 = vmatpush1.msra.mxu0 0.0
    %2517 = vmatprep.subr.mxu0 0.0
    %2518 = vmatpush1.msra.mxu0 0.0
    %2519 = vmatprep.subr.mxu0 0.0
    %2520 = vmatpush1.msra.mxu0 0.0
    %2521 = vmatprep.subr.mxu0 0.0
    %2522 = vmatpush1.msra.mxu0 0.0
    %2523 = vmatprep.subr.mxu0 0.0
    %2524 = vmatpush1.msra.mxu0 0.0
    %2525 = vmatprep.subr.mxu0 0.0
    %2526 = vmatpush1.msra.mxu0 0.0
    %2527 = vmatprep.subr.mxu0 0.0
    %2528 = vmatpush1.msra.mxu0 0.0
    %2529 = vmatprep.subr.mxu0 0.0
    %2530 = vmatpush1.msra.mxu0 0.0
    %2531 = vmatprep.subr.mxu0 0.0
    %2532 = vmatpush1.msra.mxu0 0.0
    %2533 = vmatprep.subr.mxu0 0.0
    %2534 = vmatpush1.msra.mxu0 0.0
    %2535 = vmatprep.subr.mxu0 0.0
    %2536 = vmatpush1.msra.mxu0 0.0
    %2537 = vmatprep.subr.mxu0 0.0
    %2538 = vmatpush1.msra.mxu0 0.0
    %2539 = vmatprep.subr.mxu0 0.0
    %2540 = vmatpush1.msra.mxu0 0.0
    %2541 = vmatprep.subr.mxu0 0.0
    %2542 = vmatpush1.msra.mxu0 0.0
    %2543 = vmatprep.subr.mxu0 0.0
    %2544 = vmatpush1.msra.mxu0 0.0
    %2545 = vmatprep.subr.mxu0 0.0
    %2546 = vmatpush1.msra.mxu0 0.0
    %2547 = vmatprep.subr.mxu0 0.0
    %2548 = vmatpush1.msra.mxu0 0.0
    %2549 = vmatprep.subr.mxu0 0.0
    %2550 = vmatpush1.msra.mxu0 0.0
    %2551 = vmatprep.subr.mxu0 0.0
    %2552 = vmatpush1.msra.mxu0 0.0
    %2553 = vmatprep.subr.mxu0 0.0
    %2554 = vmatpush1.msra.mxu0 0.0
    %2555 = vmatprep.subr.mxu0 0.0
    %2556 = vmatpush1.msra.mxu0 0.0
    %2557 = vmatprep.subr.mxu0 0.0
    %2558 = vmatpush1.msra.mxu0 0.0
    %2559 = vmatprep.subr.mxu0 0.0
    %2560 = vmatpush1.msra.mxu0 0.0
    %2561 = vmatprep.mubr.f32.mxu0 0.0
    %2562 = vmatmul.mubr.f32.gmra.mrb[0].mxu0 %v647
    %v2563 = vpop.f32.mrb[0].mxu0
    %v2564 = vadd.f32 0.0, %v2563
    %v2565 = vpop.f32.mrb[0].mxu0
    %2566 = vmatprep.mubr.f32.mxu0 0.0
    %2567 = vmatmul.mubr.f32.gmra.mrb[0].mxu0 %v650
    %v2568 = vpop.f32.mrb[0].mxu0
    %v2569 = vadd.f32 0.0, %v2568
    %v2570 = vpop.f32.mrb[0].mxu0
    %2571 = vdwg.mxu0
    %v2572 = vmul.f32 %v2332, %v2564
    %v2573 = vmul.f32 %v2333, %v2569
    %v2574 = vld [vmem:[%s1 + $0x16b] sm:$0x1]
    %v2575 = vlaneseq
    %v2576 = vshrl.u32 %v2575, 7
    %v2577 = vsub.s32 0, %v2576
    %v2578 = vrot.slane %v2574, %v2577
    %v2579 = vadd.f32 %v2572, %v2578
    %v2580 = vadd.f32 %v2573, %v2578
    %v2581 = vmax.f32 %v2579, 0.0
    %v2582 = vmax.f32 %v2580, 0.0
    %v2584 = vsel %vm36, %v30, 0
    %2586 = vmatprep.subr.mxu0 0.0
    %2587 = vmatpush1.msra.mxu0 %v2581
    %2588 = vmatprep.subr.mxu0 0.0
    %2589 = vmatpush1.msra.mxu0 %v2582
    %2590 = vmatprep.subr.mxu0 0.0
    %2591 = vmatpush1.msra.mxu0 0.0
    %2592 = vmatprep.subr.mxu0 0.0
    %2593 = vmatpush1.msra.mxu0 0.0
    %2594 = vmatprep.subr.mxu0 0.0
    %2595 = vmatpush1.msra.mxu0 0.0
    %2596 = vmatprep.subr.mxu0 0.0
    %2597 = vmatpush1.msra.mxu0 0.0
    %2598 = vmatprep.subr.mxu0 0.0
    %2599 = vmatpush1.msra.mxu0 0.0
    %2600 = vmatprep.subr.mxu0 0.0
    %2601 = vmatpush1.msra.mxu0 0.0
    %2602 = vmatprep.subr.mxu0 0.0
    %2603 = vmatpush1.msra.mxu0 0.0
    %2604 = vmatprep.subr.mxu0 0.0
    %2605 = vmatpush1.msra.mxu0 0.0
    %2606 = vmatprep.subr.mxu0 0.0
    %2607 = vmatpush1.msra.mxu0 0.0
    %2608 = vmatprep.subr.mxu0 0.0
    %2609 = vmatpush1.msra.mxu0 0.0
    %2610 = vmatprep.subr.mxu0 0.0
    %2611 = vmatpush1.msra.mxu0 0.0
    %2612 = vmatprep.subr.mxu0 0.0
    %2613 = vmatpush1.msra.mxu0 0.0
    %2614 = vmatprep.subr.mxu0 0.0
    %2615 = vmatpush1.msra.mxu0 0.0
    %2616 = vmatprep.subr.mxu0 0.0
    %2617 = vmatpush1.msra.mxu0 0.0
    %2618 = vmatprep.subr.mxu0 0.0
    %2619 = vmatpush1.msra.mxu0 0.0
    %2620 = vmatprep.subr.mxu0 0.0
    %2621 = vmatpush1.msra.mxu0 0.0
    %2622 = vmatprep.subr.mxu0 0.0
    %2623 = vmatpush1.msra.mxu0 0.0
    %2624 = vmatprep.subr.mxu0 0.0
    %2625 = vmatpush1.msra.mxu0 0.0
    %2626 = vmatprep.subr.mxu0 0.0
    %2627 = vmatpush1.msra.mxu0 0.0
    %2628 = vmatprep.subr.mxu0 0.0
    %2629 = vmatpush1.msra.mxu0 0.0
    %2630 = vmatprep.subr.mxu0 0.0
    %2631 = vmatpush1.msra.mxu0 0.0
    %2632 = vmatprep.subr.mxu0 0.0
    %2633 = vmatpush1.msra.mxu0 0.0
    %2634 = vmatprep.subr.mxu0 0.0
    %2635 = vmatpush1.msra.mxu0 0.0
    %2636 = vmatprep.subr.mxu0 0.0
    %2637 = vmatpush1.msra.mxu0 0.0
    %2638 = vmatprep.subr.mxu0 0.0
    %2639 = vmatpush1.msra.mxu0 0.0
    %2640 = vmatprep.subr.mxu0 0.0
    %2641 = vmatpush1.msra.mxu0 0.0
    %2642 = vmatprep.subr.mxu0 0.0
    %2643 = vmatpush1.msra.mxu0 0.0
    %2644 = vmatprep.subr.mxu0 0.0
    %2645 = vmatpush1.msra.mxu0 0.0
    %2646 = vmatprep.subr.mxu0 0.0
    %2647 = vmatpush1.msra.mxu0 0.0
    %2648 = vmatprep.subr.mxu0 0.0
    %2649 = vmatpush1.msra.mxu0 0.0
    %2650 = vmatprep.mubr.f32.mxu0 0.0
    %2651 = vmatmul.mubr.f32.gmra.mrb[0].mxu0 %v2584
    %v2652 = vpop.f32.mrb[0].mxu0
    %v2653 = vadd.f32 0.0, %v2652
    %v2654 = vpop.f32.mrb[0].mxu0
    %2655 = vdwg.mxu0
    %vm2656 = vcmask 254976
    %v2657 = vsel %vm2656, %v2653, 0.0
    %2658 = vadd.xlane.f32.xlu0 %v2657
    %v2659 = vpop.xlane.xlu0 %2658
    %v2660 = vrcp.pop 32.0
    %v2661 = vmul.f32 %v2659, %v2660
    %v2662 = vsub.f32 %v2653, %v2661
    %v2663 = vmul.f32 %v2662, %v2662
    %v2664 = vsel %vm2656, %v2663, 0.0
    %2665 = vadd.xlane.f32.xlu0 %v2664
    %v2666 = vpop.xlane.xlu0 %2665
    %v2667 = vmul.f32 %v2666, %v2660
    %v2668 = vadd.f32 %v2667, 1e-05
    %v2669 = vrsqrt.pop %v2668
    %v2670 = vmul.f32 %v2662, %v2669
    %v2671 = vld [vmem:[%s1 + $0x16c] sm:$0x1]
    %v2672 = vlaneseq
    %v2673 = vshrl.u32 %v2672, 7
    %v2674 = vsub.s32 0, %v2673
    %v2675 = vrot.slane %v2671, %v2674
    %v2676 = vmul.f32 %v2670, %v2675
    %v2677 = vld [vmem:[%s1 + $0x16d] sm:$0x1]
    %v2678 = vlaneseq
    %v2679 = vshrl.u32 %v2678, 7
    %v2680 = vsub.s32 0, %v2679
    %v2681 = vrot.slane %v2677, %v2680
    %v2682 = vadd.f32 %v2676, %v2681
    %2684 = vrot.lane.b32.xlu0 %v2653, 96
    %v2685 = vpop.permute.xlu0 %2684
    %v2687 = vsel %vm2656, %v2685, 0.0
    %2688 = vadd.xlane.f32.xlu0 %v2687
    %v2689 = vpop.xlane.xlu0 %2688
    %v2690 = vsel %vm2656, %v107, 0.0
    %2691 = vadd.xlane.f32.xlu0 %v2690
    %v2692 = vpop.xlane.xlu0 %2691
    %v2693 = vadd.f32 %v2689, %v2692
    %v2694 = vmul.f32 %v2693, 0.025
    %v2695 = vsub.f32 %v2653, %v2694
    %v2696 = vsub.f32 %v107, %v2694
    %v2697 = vmul.f32 %v2696, %v124
    %v2698 = vmul.f32 %v2695, %v2695
    %2700 = vrot.lane.b32.xlu0 %v2698, 96
    %v2701 = vpop.permute.xlu0 %2700
    %v2703 = vsel %vm2656, %v2701, 0.0
    %2704 = vadd.xlane.f32.xlu0 %v2703
    %v2705 = vpop.xlane.xlu0 %2704
    %v2706 = vmul.f32 %v2697, %v2697
    %v2707 = vsel %vm2656, %v2706, 0.0
    %2708 = vadd.xlane.f32.xlu0 %v2707
    %v2709 = vpop.xlane.xlu0 %2708
    %v2710 = vadd.f32 %v2705, %v2709
    %v2711 = vmul.f32 %v2710, 0.025
    %v2712 = vadd.f32 %v2711, 1e-05
    %v2713 = vrsqrt.pop %v2712
    %v2714 = vmul.f32 %v2695, %v2713
    %v2715 = vld [vmem:[%s1 + $0x16e] sm:$0x1]
    %v2716 = vlaneseq
    %v2717 = vshrl.u32 %v2716, 7
    %v2718 = vsub.s32 0, %v2717
    %v2719 = vrot.slane %v2715, %v2718
    %2721 = vrot.lane.b32.xlu0 %v2719, 32
    %v2722 = vpop.permute.xlu0 %2721
    %v2724 = vmul.f32 %v2714, %v2722
    %v2725 = vld [vmem:[%s1 + $0x16f] sm:$0x1]
    %v2726 = vlaneseq
    %v2727 = vshrl.u32 %v2726, 7
    %v2728 = vsub.s32 0, %v2727
    %v2729 = vrot.slane %v2725, %v2728
    %2731 = vrot.lane.b32.xlu0 %v2729, 32
    %v2732 = vpop.permute.xlu0 %2731
    %v2734 = vadd.f32 %v2724, %v2732
    %v2735 = vmul.f32 %v2697, %v2713
    %v2736 = vld [vmem:[%s1 + $0x170] sm:$0x1]
    %v2737 = vlaneseq
    %v2738 = vshrl.u32 %v2737, 7
    %v2739 = vsub.s32 0, %v2738
    %v2740 = vrot.slane %v2736, %v2739
    %v2741 = vmul.f32 %v2735, %v2740
    %v2742 = vld [vmem:[%s1 + $0x171] sm:$0x1]
    %v2743 = vlaneseq
    %v2744 = vshrl.u32 %v2743, 7
    %v2745 = vsub.s32 0, %v2744
    %v2746 = vrot.slane %v2742, %v2745
    %v2747 = vadd.f32 %v2741, %v2746
    %2749 = vrot.lane.b32.xlu0 %v2747, 64
    %v2750 = vpop.permute.xlu0 %2749
    %v2752 = vsel %vm110, %v2682, %v2734
    %v2753 = vsel %vm2114, %v2752, %v2750
    %v2754 = vld [vmem:[%s1 + $0xc0] sm:$0xff]
    %v2755 = vld [vmem:[%s1 + $0xc8] sm:$0xff]
    %v2756 = vld [vmem:[%s1 + $0xd0] sm:$0xff]
    %v2757 = vld [vmem:[%s1 + $0xd8] sm:$0xff]
    %v2758 = vld [vmem:[%s1 + $0xe0] sm:$0xff]
    %v2759 = vld [vmem:[%s1 + $0xe8] sm:$0xff]
    %v2760 = vld [vmem:[%s1 + $0xf0] sm:$0xff]
    %v2761 = vld [vmem:[%s1 + $0xf8] sm:$0xff]
    %v2762 = vld [vmem:[%s1 + $0x100] sm:$0xff]
    %v2763 = vld [vmem:[%s1 + $0x108] sm:$0xff]
    %v2764 = vld [vmem:[%s1 + $0x110] sm:$0xff]
    %v2765 = vld [vmem:[%s1 + $0x118] sm:$0xff]
    %v2766 = vld [vmem:[%s1 + $0x172] sm:$0x1]
    %v2767 = vlaneseq
    %v2768 = vshrl.u32 %v2767, 7
    %v2769 = vsub.s32 0, %v2768
    %v2770 = vrot.slane %v2766, %v2769
    %vm2771 = vcmask 785408
    %v2773 = vsel %vm2771, %v2753, 0
    %2775 = vmatprep.subr.mxu0 0.0
    %2776 = vmatpush1.msra.mxu0 %v2754
    %2777 = vmatprep.subr.mxu0 0.0
    %2778 = vmatpush1.msra.mxu0 %v2755
    %2779 = vmatprep.subr.mxu0 0.0
    %2780 = vmatpush1.msra.mxu0 %v2756
    %2781 = vmatprep.subr.mxu0 0.0
    %2782 = vmatpush1.msra.mxu0 %v2757
    %2783 = vmatprep.subr.mxu0 0.0
    %2784 = vmatpush1.msra.mxu0 %v2758
    %2785 = vmatprep.subr.mxu0 0.0
    %2786 = vmatpush1.msra.mxu0 %v2759
    %2787 = vmatprep.subr.mxu0 0.0
    %2788 = vmatpush1.msra.mxu0 %v2760
    %2789 = vmatprep.subr.mxu0 0.0
    %2790 = vmatpush1.msra.mxu0 %v2761
    %2791 = vmatprep.subr.mxu0 0.0
    %2792 = vmatpush1.msra.mxu0 %v2762
    %2793 = vmatprep.subr.mxu0 0.0
    %2794 = vmatpush1.msra.mxu0 %v2763
    %2795 = vmatprep.subr.mxu0 0.0
    %2796 = vmatpush1.msra.mxu0 %v2764
    %2797 = vmatprep.subr.mxu0 0.0
    %2798 = vmatpush1.msra.mxu0 %v2765
    %2799 = vmatprep.subr.mxu0 0.0
    %2800 = vmatpush1.msra.mxu0 0.0
    %2801 = vmatprep.subr.mxu0 0.0
    %2802 = vmatpush1.msra.mxu0 0.0
    %2803 = vmatprep.subr.mxu0 0.0
    %2804 = vmatpush1.msra.mxu0 0.0
    %2805 = vmatprep.subr.mxu0 0.0
    %2806 = vmatpush1.msra.mxu0 0.0
    %2807 = vmatprep.subr.mxu0 0.0
    %2808 = vmatpush1.msra.mxu0 0.0
    %2809 = vmatprep.subr.mxu0 0.0
    %2810 = vmatpush1.msra.mxu0 0.0
    %2811 = vmatprep.subr.mxu0 0.0
    %2812 = vmatpush1.msra.mxu0 0.0
    %2813 = vmatprep.subr.mxu0 0.0
    %2814 = vmatpush1.msra.mxu0 0.0
    %2815 = vmatprep.subr.mxu0 0.0
    %2816 = vmatpush1.msra.mxu0 0.0
    %2817 = vmatprep.subr.mxu0 0.0
    %2818 = vmatpush1.msra.mxu0 0.0
    %2819 = vmatprep.subr.mxu0 0.0
    %2820 = vmatpush1.msra.mxu0 0.0
    %2821 = vmatprep.subr.mxu0 0.0
    %2822 = vmatpush1.msra.mxu0 0.0
    %2823 = vmatprep.subr.mxu0 0.0
    %2824 = vmatpush1.msra.mxu0 0.0
    %2825 = vmatprep.subr.mxu0 0.0
    %2826 = vmatpush1.msra.mxu0 0.0
    %2827 = vmatprep.subr.mxu0 0.0
    %2828 = vmatpush1.msra.mxu0 0.0
    %2829 = vmatprep.subr.mxu0 0.0
    %2830 = vmatpush1.msra.mxu0 0.0
    %2831 = vmatprep.subr.mxu0 0.0
    %2832 = vmatpush1.msra.mxu0 0.0
    %2833 = vmatprep.subr.mxu0 0.0
    %2834 = vmatpush1.msra.mxu0 0.0
    %2835 = vmatprep.subr.mxu0 0.0
    %2836 = vmatpush1.msra.mxu0 0.0
    %2837 = vmatprep.subr.mxu0 0.0
    %2838 = vmatpush1.msra.mxu0 0.0
    %2839 = vmatprep.mubr.f32.mxu0 0.0
    %2840 = vmatmul.mubr.f32.gmra.mrb[0].mxu0 %v2773
    %v2841 = vpop.f32.mrb[0].mxu0
    %v2842 = vadd.f32 %v2770, %v2841
    %v2843 = vpop.f32.mrb[0].mxu0
    %2844 = vdwg.mxu0
    %v2845 = vmax.f32 %v2842, 0.0
    %v2846 = vsel %vm2656, %v2845, 0.0
    %2847 = vadd.xlane.f32.xlu0 %v2846
    %v2848 = vpop.xlane.xlu0 %2847
    %v2849 = vmul.f32 %v2848, %v2660
    %v2850 = vsub.f32 %v2845, %v2849
    %v2851 = vmul.f32 %v2850, %v2850
    %v2852 = vsel %vm2656, %v2851, 0.0
    %2853 = vadd.xlane.f32.xlu0 %v2852
    %v2854 = vpop.xlane.xlu0 %2853
    %v2855 = vmul.f32 %v2854, %v2660
    %v2856 = vadd.f32 %v2855, 1e-05
    %v2857 = vrsqrt.pop %v2856
    %v2858 = vmul.f32 %v2850, %v2857
    %2860 = vrot.lane.b32.xlu0 %v2845, 96
    %v2861 = vpop.permute.xlu0 %2860
    %v2863 = vsel %vm2656, %v2861, 0.0
    %2864 = vadd.xlane.f32.xlu0 %v2863
    %v2865 = vpop.xlane.xlu0 %2864
    %v2866 = vmul.f32 %v2865, %v2660
    %v2867 = vsub.f32 %v2845, %v2866
    %v2868 = vmul.f32 %v2867, %v2867
    %2870 = vrot.lane.b32.xlu0 %v2868, 96
    %v2871 = vpop.permute.xlu0 %2870
    %v2873 = vsel %vm2656, %v2871, 0.0
    %2874 = vadd.xlane.f32.xlu0 %v2873
    %v2875 = vpop.xlane.xlu0 %2874
    %v2876 = vmul.f32 %v2875, %v2660
    %v2877 = vadd.f32 %v2876, 1e-05
    %v2878 = vrsqrt.pop %v2877
    %v2879 = vmul.f32 %v2867, %v2878
    %v2880 = vsel %vm110, %v2858, %v2879
    %v2881 = vld [vmem:[%s1 + $0x173] sm:$0x1]
    %v2882 = vlaneseq
    %v2883 = vshrl.u32 %v2882, 7
    %v2884 = vsub.s32 0, %v2883
    %v2885 = vrot.slane %v2881, %v2884
    %v2886 = vmul.f32 %v2880, %v2885
    %v2887 = vld [vmem:[%s1 + $0x174] sm:$0x1]
    %v2888 = vlaneseq
    %v2889 = vshrl.u32 %v2888, 7
    %v2890 = vsub.s32 0, %v2889
    %v2891 = vrot.slane %v2887, %v2890
    %v2892 = vadd.f32 %v2886, %v2891
    %v2893 = vld [vmem:[%s1 + $0x120] sm:$0xff]
    %v2894 = vld [vmem:[%s1 + $0x128] sm:$0xff]
    %v2895 = vld [vmem:[%s1 + $0x130] sm:$0xff]
    %v2896 = vld [vmem:[%s1 + $0x138] sm:$0xff]
    %v2897 = vld [vmem:[%s1 + $0x140] sm:$0xff]
    %v2898 = vld [vmem:[%s1 + $0x148] sm:$0xff]
    %v2899 = vld [vmem:[%s1 + $0x150] sm:$0xff]
    %v2900 = vld [vmem:[%s1 + $0x158] sm:$0xff]
    %v2901 = vld [vmem:[%s1 + $0x175] sm:$0x1]
    %v2902 = vlaneseq
    %v2903 = vshrl.u32 %v2902, 7
    %v2904 = vsub.s32 0, %v2903
    %v2905 = vrot.slane %v2901, %v2904
    %v2907 = vsel %vm2114, %v2892, 0
    %2909 = vmatprep.subr.mxu0 0.0
    %2910 = vmatpush1.msra.mxu0 %v2893
    %2911 = vmatprep.subr.mxu0 0.0
    %2912 = vmatpush1.msra.mxu0 %v2894
    %2913 = vmatprep.subr.mxu0 0.0
    %2914 = vmatpush1.msra.mxu0 %v2895
    %2915 = vmatprep.subr.mxu0 0.0
    %2916 = vmatpush1.msra.mxu0 %v2896
    %2917 = vmatprep.subr.mxu0 0.0
    %2918 = vmatpush1.msra.mxu0 %v2897
    %2919 = vmatprep.subr.mxu0 0.0
    %2920 = vmatpush1.msra.mxu0 %v2898
    %2921 = vmatprep.subr.mxu0 0.0
    %2922 = vmatpush1.msra.mxu0 %v2899
    %2923 = vmatprep.subr.mxu0 0.0
    %2924 = vmatpush1.msra.mxu0 %v2900
    %2925 = vmatprep.subr.mxu0 0.0
    %2926 = vmatpush1.msra.mxu0 0.0
    %2927 = vmatprep.subr.mxu0 0.0
    %2928 = vmatpush1.msra.mxu0 0.0
    %2929 = vmatprep.subr.mxu0 0.0
    %2930 = vmatpush1.msra.mxu0 0.0
    %2931 = vmatprep.subr.mxu0 0.0
    %2932 = vmatpush1.msra.mxu0 0.0
    %2933 = vmatprep.subr.mxu0 0.0
    %2934 = vmatpush1.msra.mxu0 0.0
    %2935 = vmatprep.subr.mxu0 0.0
    %2936 = vmatpush1.msra.mxu0 0.0
    %2937 = vmatprep.subr.mxu0 0.0
    %2938 = vmatpush1.msra.mxu0 0.0
    %2939 = vmatprep.subr.mxu0 0.0
    %2940 = vmatpush1.msra.mxu0 0.0
    %2941 = vmatprep.subr.mxu0 0.0
    %2942 = vmatpush1.msra.mxu0 0.0
    %2943 = vmatprep.subr.mxu0 0.0
    %2944 = vmatpush1.msra.mxu0 0.0
    %2945 = vmatprep.subr.mxu0 0.0
    %2946 = vmatpush1.msra.mxu0 0.0
    %2947 = vmatprep.subr.mxu0 0.0
    %2948 = vmatpush1.msra.mxu0 0.0
    %2949 = vmatprep.subr.mxu0 0.0
    %2950 = vmatpush1.msra.mxu0 0.0
    %2951 = vmatprep.subr.mxu0 0.0
    %2952 = vmatpush1.msra.mxu0 0.0
    %2953 = vmatprep.subr.mxu0 0.0
    %2954 = vmatpush1.msra.mxu0 0.0
    %2955 = vmatprep.subr.mxu0 0.0
    %2956 = vmatpush1.msra.mxu0 0.0
    %2957 = vmatprep.subr.mxu0 0.0
    %2958 = vmatpush1.msra.mxu0 0.0
    %2959 = vmatprep.subr.mxu0 0.0
    %2960 = vmatpush1.msra.mxu0 0.0
    %2961 = vmatprep.subr.mxu0 0.0
    %2962 = vmatpush1.msra.mxu0 0.0
    %2963 = vmatprep.subr.mxu0 0.0
    %2964 = vmatpush1.msra.mxu0 0.0
    %2965 = vmatprep.subr.mxu0 0.0
    %2966 = vmatpush1.msra.mxu0 0.0
    %2967 = vmatprep.subr.mxu0 0.0
    %2968 = vmatpush1.msra.mxu0 0.0
    %2969 = vmatprep.subr.mxu0 0.0
    %2970 = vmatpush1.msra.mxu0 0.0
    %2971 = vmatprep.subr.mxu0 0.0
    %2972 = vmatpush1.msra.mxu0 0.0
    %2973 = vmatprep.mubr.f32.mxu0 0.0
    %2974 = vmatmul.mubr.f32.gmra.mrb[0].mxu0 %v2907
    %v2975 = vpop.f32.mrb[0].mxu0
    %v2976 = vadd.f32 %v2905, %v2975
    %v2977 = vpop.f32.mrb[0].mxu0
    %2978 = vdwg.mxu0
    %2979 = vrot.lane.b32.xlu0 %v2653, 32
    %v2980 = vpop.permute.xlu0 %2979
    %v2982 = vsel %vm2114, %v2976, %v2980
    %v2983 = vsel %vm2771, %v2982, 0.0
    %2984 = vst [vmem:[#allocation2] sm:$0x3] %v2983
    // Predicated region
    $region10: #{tpu_custom_call.1} parent=1 // pred_check
      _
    $region11: #{tpu_custom_call.1} parent=1 // pred_check_branch
      %2986 = sbr.rel (0) target = $region13
    $region12: #{tpu_custom_call.1} parent=1 // pred_region
      %s2988 = ssub.s32 32, 32
      %2989 = vsyncadd [#allocation3], %s2988
      %s2991 = sshll.u32 [#allocation2], 4
      %s2992 = int_to_ptr.vmem [resolvable:$true] %s2991
      %2994 = dma.vmem_to_hbm [thread:$0]  %s2992, 32, %s2, [#allocation3]
    $region13: #{tpu_custom_call.1} parent=1 // pred_fallthru
      _
    // Predicated region
    $region14: #{tpu_custom_call.1} parent=1 // pred_check
      _
    $region15: #{tpu_custom_call.1} parent=1 // pred_check_branch
      %2996 = sbr.rel (0) target = $region17
    $region16: #{tpu_custom_call.1} parent=1 // pred_region
      %2997 = dma.done [#allocation3], 32
    $region17: #{tpu_custom_call.1} parent=1 // pred_fallthru
      _
    %2998 = vsyncpa [#allocation3], 1

</llo_original>
